<compile_context>
chip_gen: v6e
topology: v6e:2x2x1
jax: 0.10.0
libtpu: 0.0.40
codegen_flags: <defaults>
</compile_context>

<pallas_src>
import numpy as np
import jax
import jax.numpy as jnp
from jax import lax
from jax.experimental import pallas as pl
from jax.experimental.pallas import tpu as pltpu

_BN_EPS = 1e-5
_LANE = 128


def _round_up(v, m):
    return (v + m - 1) // m * m


# --------------------------------------------------------------------------- #
# Parameters (matches the PyTorch module structure / default inits)
# --------------------------------------------------------------------------- #
def init_params(key, latent_dim, feature_maps, image_channels):
    fm = feature_maps
    specs = [
        # (c_in,      c_out,           k, s, p, last_block)
        (latent_dim,  fm * 8,          2, 1, 0, False),
        (fm * 8,      fm * 4,          4, 2, 1, False),
        (fm * 4,      fm * 2,          4, 2, 1, False),
        (fm * 2,      fm,              4, 2, 1, False),
        (fm,          image_channels,  4, 2, 1, True),
    ]
    params = []
    for (cin, cout, k, s, p, last) in specs:
        key, wk = jax.random.split(key)
        # ConvTranspose2d weight layout: (Cin, Cout, K, K); DCGAN-style N(0, 0.02).
        w = 0.02 * jax.random.normal(wk, (cin, cout, k, k), jnp.float32)
        params.append(dict(weight=w,
                           gamma=jnp.ones((cout,), jnp.float32),
                           beta=jnp.zeros((cout,), jnp.float32),
                           kernel_size=k, stride=s, padding=p, last_block=last))
    return params


# --------------------------------------------------------------------------- #
# Host-side prep: ConvTranspose weights -> matmul-form operands
# --------------------------------------------------------------------------- #
def _prepare_operands(params, batch):
    """Activation layout inside the kernel is 2-D (rows, lanes):
         rows  = (n, h)   -> batch * H
         lanes = (w, c)   -> W * C  (c fastest; == 128 for every hidden block)
    """
    operands, cfgs = [], []
    H = W = 1
    cur_lanes = params[0]["weight"].shape[0]          # latent_dim (w=1, c=latent)
    for prm in params:
        w = prm["weight"]                             # (Cin, Cout, K, K)
        cin, cout, K, _ = w.shape
        s, p, last = prm["stride"], prm["padding"], prm["last_block"]
        Hout = (H - 1) * s - 2 * p + K
        Wout = (W - 1) * s - 2 * p + K
        Lout = Wout * cout
        LP = _round_up(Lout, _LANE)                   # lane-padded slab width

        # Horizontal-tap selection: transposed-conv relation ow = iw*s + kw - p.
        sel = np.zeros((W, Wout, K), np.float32)
        for iw in range(W):
            for ow in range(Wout):
                kw = ow - iw * s + p
                if 0 <= kw < K:
                    sel[iw, ow, kw] = 1.0
        m = jnp.einsum("iok,cdhk->hicod", jnp.asarray(sel), w)  # (K, W, Cin, Wout, Cout)
        m = m.reshape(K, W * cin, Lout)
        # Pad output lanes to LP and input rows to the incoming lane count, then pack
        # all K vertical taps side-by-side -> one wide MXU matmul per block.
        m = jnp.pad(m, ((0, 0), (0, cur_lanes - W * cin), (0, LP - Lout)))
        m_big = jnp.transpose(m, (1, 0, 2)).reshape(cur_lanes, K * LP).astype(jnp.bfloat16)

        # S[kh]: (batch*Hout, batch*H) 0/1 row scatter -- vertical taps (oh = ih*s + kh - p).
        S = np.zeros((K, batch * Hout, batch * H), np.float32)
        for kh in range(K):
            for n in range(batch):
                for ih in range(H):
                    oh = ih * s + kh - p
                    if 0 <= oh < Hout:
                        S[kh, n * Hout + oh, n * H + ih] = 1.0

        blk = [jnp.asarray(S), m_big]
        if not last:
            count = float(batch * Hout * Wout)
            # Per-channel averaging projection across the (w, c) lane axis, with the
            # 1/count normalisation folded in (hoisted out of the kernel).
            avg = np.zeros((LP, LP), np.float32)
            avg[:Lout, :Lout] = np.tile(np.eye(cout, dtype=np.float32), (Wout, Wout)) / count
            g = np.zeros((1, LP), np.float32)
            g[0, :Lout] = np.tile(np.asarray(prm["gamma"]), Wout)
            b = np.zeros((1, LP), np.float32)
            b[0, :Lout] = np.tile(np.asarray(prm["beta"]), Wout)
            blk += [jnp.asarray(avg), jnp.asarray(g), jnp.asarray(b)]
        operands += blk
        cfgs.append((K, LP, last))
        H, W = Hout, Wout
        cur_lanes = LP

    cout_final = params[-1]["weight"].shape[1]
    meta = dict(cfgs=tuple(cfgs), H=H, W=W, cout=cout_final,
                out_shape=(batch * H, cfgs[-1][1]))   # lane-dense (padded) output slab
    return operands, meta


# --------------------------------------------------------------------------- #
# Fused Pallas kernel: whole generator in one invocation
# --------------------------------------------------------------------------- #
def _make_fused_kernel(cfgs):
    def kernel(*refs):
        x = refs[0][...]                     # (batch, latent) bf16, rows=(n,h=0)
        out_ref = refs[-1]
        idx = 1
        for (K, LP, last) in cfgs:
            s_ref, m_ref = refs[idx], refs[idx + 1]
            idx += 2
            # One wide MXU matmul folding all K vertical taps' horizontal kernels.
            parts = jnp.dot(x, m_ref[...], preferred_element_type=jnp.float32)
            acc = None
            for kh in range(K):              # K in {2,4}: tiny 0/1 row-scatter matmuls
                part = parts[:, kh * LP:(kh + 1) * LP]      # 128-lane aligned slab
                scat = jnp.dot(s_ref[kh], part, preferred_element_type=jnp.float32)
                acc = scat if acc is None else acc + scat
            if not last:
                avg_ref, g_ref, b_ref = refs[idx], refs[idx + 1], refs[idx + 2]
                idx += 3
                avg = avg_ref[...]
                # BatchNorm2d, training-mode full-batch stats (biased var), eps=1e-5.
                lane_mean = jnp.dot(jnp.sum(acc, axis=0, keepdims=True), avg,
                                    preferred_element_type=jnp.float32)
                cent = acc - lane_mean
                lane_var = jnp.dot(jnp.sum(cent * cent, axis=0, keepdims=True), avg,
                                   preferred_element_type=jnp.float32)
                y = cent * (g_ref[...] * lax.rsqrt(lane_var + _BN_EPS)) + b_ref[...]
                # Mish: y * tanh(softplus(y)) = y * (t^2+2t)/(t^2+2t+2), t=e^y (exact id).
                # One EUP exp + one EUP approx reciprocal; clamp exponent for f32 safety
                # (matches PyTorch softplus threshold behaviour: mish(y>=20) == y).
                t = jnp.exp(jnp.minimum(y, 20.0))
                u = t * (t + 2.0)
                x = (y * u * pl.reciprocal(u + 2.0, approx=True)).astype(jnp.bfloat16)
            else:
                # Exact sigmoid (guarantees output in [0, 1]); padded lanes hold 0.5
                # and are sliced away by the wrapper.  Full-128-lane store (unmasked vst).
                out_ref[...] = (1.0 / (1.0 + jnp.exp(-acc))).astype(out_ref.dtype)
    return kernel


def build_generator(params, batch):
    operands, meta = _prepare_operands(params, batch)
    kernel = _make_fused_kernel(meta["cfgs"])
    n_in = 1 + len(operands)
    call = pl.pallas_call(
        kernel,
        out_shape=jax.ShapeDtypeStruct(meta["out_shape"], jnp.float32),
        in_specs=[pl.BlockSpec(memory_space=pltpu.MemorySpace.VMEM)] * n_in,
        out_specs=pl.BlockSpec(memory_space=pltpu.MemorySpace.VMEM),
    )
    H, W, cout = meta["H"], meta["W"], meta["cout"]

    def forward(noise_nchw):
        n, latent = noise_nchw.shape[0], noise_nchw.shape[1]
        x0 = noise_nchw.reshape(n, latent).astype(jnp.bfloat16)  # rows=(n,h=0), lanes=(w=0,c)
        y2d = call(x0, *operands)                                # (N*Hout, 128) lane-dense
        y = y2d[:, :W * cout].reshape(n, H, W, cout)
        return jnp.transpose(y, (0, 3, 1, 2))                    # NHWC -> NCHW
    return forward


# --------------------------------------------------------------------------- #
# Pure-JAX f32 reference (numerical check only)
# --------------------------------------------------------------------------- #
def reference_forward(noise_nchw, params):
    x = noise_nchw
    for prm in params:
        w = prm["weight"]
        K, s, p = prm["kernel_size"], prm["stride"], prm["padding"]
        kern = jnp.transpose(jnp.flip(w, (2, 3)), (1, 0, 2, 3))   # (Cout, Cin, K, K)
        x = lax.conv_general_dilated(
            x, kern, window_strides=(1, 1),
            padding=[(K - 1 - p, K - 1 - p)] * 2,
            lhs_dilation=(s, s),
            dimension_numbers=("NCHW", "OIHW", "NCHW"),
            precision=lax.Precision.HIGHEST)
        if not prm["last_block"]:
            mean = jnp.mean(x, axis=(0, 2, 3), keepdims=True)
            var = jnp.mean(jnp.square(x - mean), axis=(0, 2, 3), keepdims=True)
            x = (x - mean) * lax.rsqrt(var + _BN_EPS)
            x = x * prm["gamma"].reshape(1, -1, 1, 1) + prm["beta"].reshape(1, -1, 1, 1)
            x = x * jnp.tanh(jax.nn.softplus(x))
        else:
            x = jax.nn.sigmoid(x)
    return x


if __name__ == "__main__":
    key = jax.random.PRNGKey(0)
    pkey, nkey = jax.random.split(key)

    batch, latent_dim, feature_maps, image_channels = 2, 16, 8, 1
    params = init_params(pkey, latent_dim, feature_maps, image_channels)
    noise = jax.random.normal(nkey, (batch, latent_dim, 1, 1), jnp.float32)

    forward = jax.jit(build_generator(params, batch))
    out = jax.block_until_ready(forward(noise))

    assert out.shape == (batch, image_channels, 32, 32), out.shape
    assert out.dtype == jnp.float32
    assert bool(jnp.all(jnp.isfinite(out)))
    assert bool(jnp.all((out >= 0.0) & (out <= 1.0)))            # sigmoid output range

    ref = reference_forward(noise, params)
    max_err = float(jnp.max(jnp.abs(out - ref)))
    assert max_err < 3e-2, f"mismatch vs f32 reference: max abs err = {max_err}"
    print("KERNEL_OK")
</pallas_src>

<mosaic_0001>
module attributes {stable_mosaic.version = 11 : i64} {
  func.func @kernel(%arg0: memref<2x16xbf16, #tpu.memory_space<vmem>>, %arg1: memref<2x4x2xf32, #tpu.memory_space<vmem>>, %arg2: memref<16x256xbf16, #tpu.memory_space<vmem>>, %arg3: memref<128x128xf32, #tpu.memory_space<vmem>>, %arg4: memref<1x128xf32, #tpu.memory_space<vmem>>, %arg5: memref<1x128xf32, #tpu.memory_space<vmem>>, %arg6: memref<4x8x4xf32, #tpu.memory_space<vmem>>, %arg7: memref<128x512xbf16, #tpu.memory_space<vmem>>, %arg8: memref<128x128xf32, #tpu.memory_space<vmem>>, %arg9: memref<1x128xf32, #tpu.memory_space<vmem>>, %arg10: memref<1x128xf32, #tpu.memory_space<vmem>>, %arg11: memref<4x16x8xf32, #tpu.memory_space<vmem>>, %arg12: memref<128x512xbf16, #tpu.memory_space<vmem>>, %arg13: memref<128x128xf32, #tpu.memory_space<vmem>>, %arg14: memref<1x128xf32, #tpu.memory_space<vmem>>, %arg15: memref<1x128xf32, #tpu.memory_space<vmem>>, %arg16: memref<4x32x16xf32, #tpu.memory_space<vmem>>, %arg17: memref<128x512xbf16, #tpu.memory_space<vmem>>, %arg18: memref<128x128xf32, #tpu.memory_space<vmem>>, %arg19: memref<1x128xf32, #tpu.memory_space<vmem>>, %arg20: memref<1x128xf32, #tpu.memory_space<vmem>>, %arg21: memref<4x64x32xf32, #tpu.memory_space<vmem>>, %arg22: memref<128x512xbf16, #tpu.memory_space<vmem>>, %arg23: memref<64x128xf32, #tpu.memory_space<vmem>>) attributes {dimension_semantics = [], scalar_prefetch = 0 : i64, scratch_operands = 0 : i64, tpu.core_type = #tpu.core_type<tc>} {
    %c0 = arith.constant 0 : index
    %c0_0 = arith.constant 0 : index
    %0 = vector.load %arg0[%c0, %c0_0] : memref<2x16xbf16, #tpu.memory_space<vmem>>, vector<2x16xbf16>
    %c0_1 = arith.constant 0 : index
    %c0_2 = arith.constant 0 : index
    %1 = vector.load %arg2[%c0_1, %c0_2] : memref<16x256xbf16, #tpu.memory_space<vmem>>, vector<16x256xbf16>
    %cst = arith.constant dense<0.000000e+00> : vector<2x256xf32>
    %2 = tpu.matmul %0, %1, %cst {dimension_numbers = #tpu.dot_dimension_numbers<[1], [0], [0], [1], [0, 0, 1, 1], [], []>} : vector<2x16xbf16>, vector<16x256xbf16>, vector<2x256xf32> -> vector<2x256xf32>
    %3 = vector.extract_strided_slice %2 {offsets = [0, 0], sizes = [2, 128], strides = [1, 1]} : vector<2x256xf32> to vector<2x128xf32>
    %c0_3 = arith.constant 0 : index
    %c0_4 = arith.constant 0 : index
    %c0_5 = arith.constant 0 : index
    %4 = vector.load %arg1[%c0_3, %c0_4, %c0_5] : memref<2x4x2xf32, #tpu.memory_space<vmem>>, vector<1x4x2xf32>
    %5 = vector.shape_cast %4 : vector<1x4x2xf32> to vector<4x2xf32>
    %cst_6 = arith.constant dense<0.000000e+00> : vector<4x128xf32>
    %6 = tpu.matmul %5, %3, %cst_6 {dimension_numbers = #tpu.dot_dimension_numbers<[1], [0], [0], [1], [0, 0, 1, 1], [], []>} : vector<4x2xf32>, vector<2x128xf32>, vector<4x128xf32> -> vector<4x128xf32>
    %7 = vector.extract_strided_slice %2 {offsets = [0, 128], sizes = [2, 128], strides = [1, 1]} : vector<2x256xf32> to vector<2x128xf32>
    %c1 = arith.constant 1 : index
    %c0_7 = arith.constant 0 : index
    %c0_8 = arith.constant 0 : index
    %8 = vector.load %arg1[%c1, %c0_7, %c0_8] : memref<2x4x2xf32, #tpu.memory_space<vmem>>, vector<1x4x2xf32>
    %9 = vector.shape_cast %8 : vector<1x4x2xf32> to vector<4x2xf32>
    %cst_9 = arith.constant dense<0.000000e+00> : vector<4x128xf32>
    %10 = tpu.matmul %9, %7, %cst_9 {dimension_numbers = #tpu.dot_dimension_numbers<[1], [0], [0], [1], [0, 0, 1, 1], [], []>} : vector<4x2xf32>, vector<2x128xf32>, vector<4x128xf32> -> vector<4x128xf32>
    %11 = arith.addf %6, %10 : vector<4x128xf32>
    %c0_10 = arith.constant 0 : index
    %c0_11 = arith.constant 0 : index
    %12 = vector.load %arg3[%c0_10, %c0_11] : memref<128x128xf32, #tpu.memory_space<vmem>>, vector<128x128xf32>
    %cst_12 = arith.constant dense<0.000000e+00> : vector<128xf32>
    %13 = vector.multi_reduction <add>, %11, %cst_12 [0] : vector<4x128xf32> to vector<128xf32>
    %14 = vector.shape_cast %13 : vector<128xf32> to vector<1x128xf32>
    %cst_13 = arith.constant dense<0.000000e+00> : vector<1x128xf32>
    %15 = tpu.matmul %14, %12, %cst_13 {dimension_numbers = #tpu.dot_dimension_numbers<[1], [0], [0], [1], [0, 0, 1, 1], [], []>} : vector<1x128xf32>, vector<128x128xf32>, vector<1x128xf32> -> vector<1x128xf32>
    %16 = vector.broadcast %15 : vector<1x128xf32> to vector<4x128xf32>
    %17 = arith.subf %11, %16 : vector<4x128xf32>
    %18 = arith.mulf %17, %17 : vector<4x128xf32>
    %cst_14 = arith.constant dense<0.000000e+00> : vector<128xf32>
    %19 = vector.multi_reduction <add>, %18, %cst_14 [0] : vector<4x128xf32> to vector<128xf32>
    %20 = vector.shape_cast %19 : vector<128xf32> to vector<1x128xf32>
    %cst_15 = arith.constant dense<0.000000e+00> : vector<1x128xf32>
    %21 = tpu.matmul %20, %12, %cst_15 {dimension_numbers = #tpu.dot_dimension_numbers<[1], [0], [0], [1], [0, 0, 1, 1], [], []>} : vector<1x128xf32>, vector<128x128xf32>, vector<1x128xf32> -> vector<1x128xf32>
    %c0_16 = arith.constant 0 : index
    %c0_17 = arith.constant 0 : index
    %22 = vector.load %arg4[%c0_16, %c0_17] : memref<1x128xf32, #tpu.memory_space<vmem>>, vector<1x128xf32>
    %cst_18 = arith.constant 9.99999974E-6 : f32
    %23 = vector.broadcast %cst_18 : f32 to vector<1x128xf32>
    %24 = arith.addf %21, %23 : vector<1x128xf32>
    %25 = math.rsqrt %24 : vector<1x128xf32>
    %26 = arith.mulf %22, %25 : vector<1x128xf32>
    %27 = vector.broadcast %26 : vector<1x128xf32> to vector<4x128xf32>
    %28 = arith.mulf %17, %27 : vector<4x128xf32>
    %c0_19 = arith.constant 0 : index
    %c0_20 = arith.constant 0 : index
    %29 = vector.load %arg5[%c0_19, %c0_20] : memref<1x128xf32, #tpu.memory_space<vmem>>, vector<1x128xf32>
    %30 = vector.broadcast %29 : vector<1x128xf32> to vector<4x128xf32>
    %31 = arith.addf %28, %30 : vector<4x128xf32>
    %cst_21 = arith.constant 2.000000e+01 : f32
    %32 = vector.broadcast %cst_21 : f32 to vector<4x128xf32>
    %33 = arith.minimumf %31, %32 : vector<4x128xf32>
    %34 = math.exp %33 : vector<4x128xf32>
    %cst_22 = arith.constant 2.000000e+00 : f32
    %35 = vector.broadcast %cst_22 : f32 to vector<4x128xf32>
    %36 = arith.addf %34, %35 : vector<4x128xf32>
    %37 = arith.mulf %34, %36 : vector<4x128xf32>
    %38 = arith.mulf %31, %37 : vector<4x128xf32>
    %cst_23 = arith.constant 2.000000e+00 : f32
    %39 = vector.broadcast %cst_23 : f32 to vector<4x128xf32>
    %40 = arith.addf %37, %39 : vector<4x128xf32>
    %41 = tpu.reciprocal %40 {approx = true} : vector<4x128xf32> -> vector<4x128xf32>
    %42 = arith.mulf %38, %41 : vector<4x128xf32>
    %43 = arith.truncf %42 : vector<4x128xf32> to vector<4x128xbf16>
    %c0_24 = arith.constant 0 : index
    %c0_25 = arith.constant 0 : index
    %44 = vector.load %arg7[%c0_24, %c0_25] : memref<128x512xbf16, #tpu.memory_space<vmem>>, vector<128x512xbf16>
    %cst_26 = arith.constant dense<0.000000e+00> : vector<4x512xf32>
    %45 = tpu.matmul %43, %44, %cst_26 {dimension_numbers = #tpu.dot_dimension_numbers<[1], [0], [0], [1], [0, 0, 1, 1], [], []>} : vector<4x128xbf16>, vector<128x512xbf16>, vector<4x512xf32> -> vector<4x512xf32>
    %46 = vector.extract_strided_slice %45 {offsets = [0, 0], sizes = [4, 128], strides = [1, 1]} : vector<4x512xf32> to vector<4x128xf32>
    %c0_27 = arith.constant 0 : index
    %c0_28 = arith.constant 0 : index
    %c0_29 = arith.constant 0 : index
    %47 = vector.load %arg6[%c0_27, %c0_28, %c0_29] : memref<4x8x4xf32, #tpu.memory_space<vmem>>, vector<1x8x4xf32>
    %48 = vector.shape_cast %47 : vector<1x8x4xf32> to vector<8x4xf32>
    %cst_30 = arith.constant dense<0.000000e+00> : vector<8x128xf32>
    %49 = tpu.matmul %48, %46, %cst_30 {dimension_numbers = #tpu.dot_dimension_numbers<[1], [0], [0], [1], [0, 0, 1, 1], [], []>} : vector<8x4xf32>, vector<4x128xf32>, vector<8x128xf32> -> vector<8x128xf32>
    %50 = vector.extract_strided_slice %45 {offsets = [0, 128], sizes = [4, 128], strides = [1, 1]} : vector<4x512xf32> to vector<4x128xf32>
    %c1_31 = arith.constant 1 : index
    %c0_32 = arith.constant 0 : index
    %c0_33 = arith.constant 0 : index
    %51 = vector.load %arg6[%c1_31, %c0_32, %c0_33] : memref<4x8x4xf32, #tpu.memory_space<vmem>>, vector<1x8x4xf32>
    %52 = vector.shape_cast %51 : vector<1x8x4xf32> to vector<8x4xf32>
    %cst_34 = arith.constant dense<0.000000e+00> : vector<8x128xf32>
    %53 = tpu.matmul %52, %50, %cst_34 {dimension_numbers = #tpu.dot_dimension_numbers<[1], [0], [0], [1], [0, 0, 1, 1], [], []>} : vector<8x4xf32>, vector<4x128xf32>, vector<8x128xf32> -> vector<8x128xf32>
    %54 = arith.addf %49, %53 : vector<8x128xf32>
    %55 = vector.extract_strided_slice %45 {offsets = [0, 256], sizes = [4, 128], strides = [1, 1]} : vector<4x512xf32> to vector<4x128xf32>
    %c2 = arith.constant 2 : index
    %c0_35 = arith.constant 0 : index
    %c0_36 = arith.constant 0 : index
    %56 = vector.load %arg6[%c2, %c0_35, %c0_36] : memref<4x8x4xf32, #tpu.memory_space<vmem>>, vector<1x8x4xf32>
    %57 = vector.shape_cast %56 : vector<1x8x4xf32> to vector<8x4xf32>
    %cst_37 = arith.constant dense<0.000000e+00> : vector<8x128xf32>
    %58 = tpu.matmul %57, %55, %cst_37 {dimension_numbers = #tpu.dot_dimension_numbers<[1], [0], [0], [1], [0, 0, 1, 1], [], []>} : vector<8x4xf32>, vector<4x128xf32>, vector<8x128xf32> -> vector<8x128xf32>
    %59 = arith.addf %54, %58 : vector<8x128xf32>
    %60 = vector.extract_strided_slice %45 {offsets = [0, 384], sizes = [4, 128], strides = [1, 1]} : vector<4x512xf32> to vector<4x128xf32>
    %c3 = arith.constant 3 : index
    %c0_38 = arith.constant 0 : index
    %c0_39 = arith.constant 0 : index
    %61 = vector.load %arg6[%c3, %c0_38, %c0_39] : memref<4x8x4xf32, #tpu.memory_space<vmem>>, vector<1x8x4xf32>
    %62 = vector.shape_cast %61 : vector<1x8x4xf32> to vector<8x4xf32>
    %cst_40 = arith.constant dense<0.000000e+00> : vector<8x128xf32>
    %63 = tpu.matmul %62, %60, %cst_40 {dimension_numbers = #tpu.dot_dimension_numbers<[1], [0], [0], [1], [0, 0, 1, 1], [], []>} : vector<8x4xf32>, vector<4x128xf32>, vector<8x128xf32> -> vector<8x128xf32>
    %64 = arith.addf %59, %63 : vector<8x128xf32>
    %c0_41 = arith.constant 0 : index
    %c0_42 = arith.constant 0 : index
    %65 = vector.load %arg8[%c0_41, %c0_42] : memref<128x128xf32, #tpu.memory_space<vmem>>, vector<128x128xf32>
    %cst_43 = arith.constant dense<0.000000e+00> : vector<128xf32>
    %66 = vector.multi_reduction <add>, %64, %cst_43 [0] : vector<8x128xf32> to vector<128xf32>
    %67 = vector.shape_cast %66 : vector<128xf32> to vector<1x128xf32>
    %cst_44 = arith.constant dense<0.000000e+00> : vector<1x128xf32>
    %68 = tpu.matmul %67, %65, %cst_44 {dimension_numbers = #tpu.dot_dimension_numbers<[1], [0], [0], [1], [0, 0, 1, 1], [], []>} : vector<1x128xf32>, vector<128x128xf32>, vector<1x128xf32> -> vector<1x128xf32>
    %69 = vector.broadcast %68 : vector<1x128xf32> to vector<8x128xf32>
    %70 = arith.subf %64, %69 : vector<8x128xf32>
    %71 = arith.mulf %70, %70 : vector<8x128xf32>
    %cst_45 = arith.constant dense<0.000000e+00> : vector<128xf32>
    %72 = vector.multi_reduction <add>, %71, %cst_45 [0] : vector<8x128xf32> to vector<128xf32>
    %73 = vector.shape_cast %72 : vector<128xf32> to vector<1x128xf32>
    %cst_46 = arith.constant dense<0.000000e+00> : vector<1x128xf32>
    %74 = tpu.matmul %73, %65, %cst_46 {dimension_numbers = #tpu.dot_dimension_numbers<[1], [0], [0], [1], [0, 0, 1, 1], [], []>} : vector<1x128xf32>, vector<128x128xf32>, vector<1x128xf32> -> vector<1x128xf32>
    %c0_47 = arith.constant 0 : index
    %c0_48 = arith.constant 0 : index
    %75 = vector.load %arg9[%c0_47, %c0_48] : memref<1x128xf32, #tpu.memory_space<vmem>>, vector<1x128xf32>
    %cst_49 = arith.constant 9.99999974E-6 : f32
    %76 = vector.broadcast %cst_49 : f32 to vector<1x128xf32>
    %77 = arith.addf %74, %76 : vector<1x128xf32>
    %78 = math.rsqrt %77 : vector<1x128xf32>
    %79 = arith.mulf %75, %78 : vector<1x128xf32>
    %80 = vector.broadcast %79 : vector<1x128xf32> to vector<8x128xf32>
    %81 = arith.mulf %70, %80 : vector<8x128xf32>
    %c0_50 = arith.constant 0 : index
    %c0_51 = arith.constant 0 : index
    %82 = vector.load %arg10[%c0_50, %c0_51] : memref<1x128xf32, #tpu.memory_space<vmem>>, vector<1x128xf32>
    %83 = vector.broadcast %82 : vector<1x128xf32> to vector<8x128xf32>
    %84 = arith.addf %81, %83 : vector<8x128xf32>
    %cst_52 = arith.constant 2.000000e+01 : f32
    %85 = vector.broadcast %cst_52 : f32 to vector<8x128xf32>
    %86 = arith.minimumf %84, %85 : vector<8x128xf32>
    %87 = math.exp %86 : vector<8x128xf32>
    %cst_53 = arith.constant 2.000000e+00 : f32
    %88 = vector.broadcast %cst_53 : f32 to vector<8x128xf32>
    %89 = arith.addf %87, %88 : vector<8x128xf32>
    %90 = arith.mulf %87, %89 : vector<8x128xf32>
    %91 = arith.mulf %84, %90 : vector<8x128xf32>
    %cst_54 = arith.constant 2.000000e+00 : f32
    %92 = vector.broadcast %cst_54 : f32 to vector<8x128xf32>
    %93 = arith.addf %90, %92 : vector<8x128xf32>
    %94 = tpu.reciprocal %93 {approx = true} : vector<8x128xf32> -> vector<8x128xf32>
    %95 = arith.mulf %91, %94 : vector<8x128xf32>
    %96 = arith.truncf %95 : vector<8x128xf32> to vector<8x128xbf16>
    %c0_55 = arith.constant 0 : index
    %c0_56 = arith.constant 0 : index
    %97 = vector.load %arg12[%c0_55, %c0_56] : memref<128x512xbf16, #tpu.memory_space<vmem>>, vector<128x512xbf16>
    %cst_57 = arith.constant dense<0.000000e+00> : vector<8x512xf32>
    %98 = tpu.matmul %96, %97, %cst_57 {dimension_numbers = #tpu.dot_dimension_numbers<[1], [0], [0], [1], [0, 0, 1, 1], [], []>} : vector<8x128xbf16>, vector<128x512xbf16>, vector<8x512xf32> -> vector<8x512xf32>
    %99 = vector.extract_strided_slice %98 {offsets = [0, 0], sizes = [8, 128], strides = [1, 1]} : vector<8x512xf32> to vector<8x128xf32>
    %c0_58 = arith.constant 0 : index
    %c0_59 = arith.constant 0 : index
    %c0_60 = arith.constant 0 : index
    %100 = vector.load %arg11[%c0_58, %c0_59, %c0_60] : memref<4x16x8xf32, #tpu.memory_space<vmem>>, vector<1x16x8xf32>
    %101 = vector.shape_cast %100 : vector<1x16x8xf32> to vector<16x8xf32>
    %cst_61 = arith.constant dense<0.000000e+00> : vector<16x128xf32>
    %102 = tpu.matmul %101, %99, %cst_61 {dimension_numbers = #tpu.dot_dimension_numbers<[1], [0], [0], [1], [0, 0, 1, 1], [], []>} : vector<16x8xf32>, vector<8x128xf32>, vector<16x128xf32> -> vector<16x128xf32>
    %103 = vector.extract_strided_slice %98 {offsets = [0, 128], sizes = [8, 128], strides = [1, 1]} : vector<8x512xf32> to vector<8x128xf32>
    %c1_62 = arith.constant 1 : index
    %c0_63 = arith.constant 0 : index
    %c0_64 = arith.constant 0 : index
    %104 = vector.load %arg11[%c1_62, %c0_63, %c0_64] : memref<4x16x8xf32, #tpu.memory_space<vmem>>, vector<1x16x8xf32>
    %105 = vector.shape_cast %104 : vector<1x16x8xf32> to vector<16x8xf32>
    %cst_65 = arith.constant dense<0.000000e+00> : vector<16x128xf32>
    %106 = tpu.matmul %105, %103, %cst_65 {dimension_numbers = #tpu.dot_dimension_numbers<[1], [0], [0], [1], [0, 0, 1, 1], [], []>} : vector<16x8xf32>, vector<8x128xf32>, vector<16x128xf32> -> vector<16x128xf32>
    %107 = arith.addf %102, %106 : vector<16x128xf32>
    %108 = vector.extract_strided_slice %98 {offsets = [0, 256], sizes = [8, 128], strides = [1, 1]} : vector<8x512xf32> to vector<8x128xf32>
    %c2_66 = arith.constant 2 : index
    %c0_67 = arith.constant 0 : index
    %c0_68 = arith.constant 0 : index
    %109 = vector.load %arg11[%c2_66, %c0_67, %c0_68] : memref<4x16x8xf32, #tpu.memory_space<vmem>>, vector<1x16x8xf32>
    %110 = vector.shape_cast %109 : vector<1x16x8xf32> to vector<16x8xf32>
    %cst_69 = arith.constant dense<0.000000e+00> : vector<16x128xf32>
    %111 = tpu.matmul %110, %108, %cst_69 {dimension_numbers = #tpu.dot_dimension_numbers<[1], [0], [0], [1], [0, 0, 1, 1], [], []>} : vector<16x8xf32>, vector<8x128xf32>, vector<16x128xf32> -> vector<16x128xf32>
    %112 = arith.addf %107, %111 : vector<16x128xf32>
    %113 = vector.extract_strided_slice %98 {offsets = [0, 384], sizes = [8, 128], strides = [1, 1]} : vector<8x512xf32> to vector<8x128xf32>
    %c3_70 = arith.constant 3 : index
    %c0_71 = arith.constant 0 : index
    %c0_72 = arith.constant 0 : index
    %114 = vector.load %arg11[%c3_70, %c0_71, %c0_72] : memref<4x16x8xf32, #tpu.memory_space<vmem>>, vector<1x16x8xf32>
    %115 = vector.shape_cast %114 : vector<1x16x8xf32> to vector<16x8xf32>
    %cst_73 = arith.constant dense<0.000000e+00> : vector<16x128xf32>
    %116 = tpu.matmul %115, %113, %cst_73 {dimension_numbers = #tpu.dot_dimension_numbers<[1], [0], [0], [1], [0, 0, 1, 1], [], []>} : vector<16x8xf32>, vector<8x128xf32>, vector<16x128xf32> -> vector<16x128xf32>
    %117 = arith.addf %112, %116 : vector<16x128xf32>
    %c0_74 = arith.constant 0 : index
    %c0_75 = arith.constant 0 : index
    %118 = vector.load %arg13[%c0_74, %c0_75] : memref<128x128xf32, #tpu.memory_space<vmem>>, vector<128x128xf32>
    %cst_76 = arith.constant dense<0.000000e+00> : vector<128xf32>
    %119 = vector.multi_reduction <add>, %117, %cst_76 [0] : vector<16x128xf32> to vector<128xf32>
    %120 = vector.shape_cast %119 : vector<128xf32> to vector<1x128xf32>
    %cst_77 = arith.constant dense<0.000000e+00> : vector<1x128xf32>
    %121 = tpu.matmul %120, %118, %cst_77 {dimension_numbers = #tpu.dot_dimension_numbers<[1], [0], [0], [1], [0, 0, 1, 1], [], []>} : vector<1x128xf32>, vector<128x128xf32>, vector<1x128xf32> -> vector<1x128xf32>
    %122 = vector.broadcast %121 : vector<1x128xf32> to vector<16x128xf32>
    %123 = arith.subf %117, %122 : vector<16x128xf32>
    %124 = arith.mulf %123, %123 : vector<16x128xf32>
    %cst_78 = arith.constant dense<0.000000e+00> : vector<128xf32>
    %125 = vector.multi_reduction <add>, %124, %cst_78 [0] : vector<16x128xf32> to vector<128xf32>
    %126 = vector.shape_cast %125 : vector<128xf32> to vector<1x128xf32>
    %cst_79 = arith.constant dense<0.000000e+00> : vector<1x128xf32>
    %127 = tpu.matmul %126, %118, %cst_79 {dimension_numbers = #tpu.dot_dimension_numbers<[1], [0], [0], [1], [0, 0, 1, 1], [], []>} : vector<1x128xf32>, vector<128x128xf32>, vector<1x128xf32> -> vector<1x128xf32>
    %c0_80 = arith.constant 0 : index
    %c0_81 = arith.constant 0 : index
    %128 = vector.load %arg14[%c0_80, %c0_81] : memref<1x128xf32, #tpu.memory_space<vmem>>, vector<1x128xf32>
    %cst_82 = arith.constant 9.99999974E-6 : f32
    %129 = vector.broadcast %cst_82 : f32 to vector<1x128xf32>
    %130 = arith.addf %127, %129 : vector<1x128xf32>
    %131 = math.rsqrt %130 : vector<1x128xf32>
    %132 = arith.mulf %128, %131 : vector<1x128xf32>
    %133 = vector.broadcast %132 : vector<1x128xf32> to vector<16x128xf32>
    %134 = arith.mulf %123, %133 : vector<16x128xf32>
    %c0_83 = arith.constant 0 : index
    %c0_84 = arith.constant 0 : index
    %135 = vector.load %arg15[%c0_83, %c0_84] : memref<1x128xf32, #tpu.memory_space<vmem>>, vector<1x128xf32>
    %136 = vector.broadcast %135 : vector<1x128xf32> to vector<16x128xf32>
    %137 = arith.addf %134, %136 : vector<16x128xf32>
    %cst_85 = arith.constant 2.000000e+01 : f32
    %138 = vector.broadcast %cst_85 : f32 to vector<16x128xf32>
    %139 = arith.minimumf %137, %138 : vector<16x128xf32>
    %140 = math.exp %139 : vector<16x128xf32>
    %cst_86 = arith.constant 2.000000e+00 : f32
    %141 = vector.broadcast %cst_86 : f32 to vector<16x128xf32>
    %142 = arith.addf %140, %141 : vector<16x128xf32>
    %143 = arith.mulf %140, %142 : vector<16x128xf32>
    %144 = arith.mulf %137, %143 : vector<16x128xf32>
    %cst_87 = arith.constant 2.000000e+00 : f32
    %145 = vector.broadcast %cst_87 : f32 to vector<16x128xf32>
    %146 = arith.addf %143, %145 : vector<16x128xf32>
    %147 = tpu.reciprocal %146 {approx = true} : vector<16x128xf32> -> vector<16x128xf32>
    %148 = arith.mulf %144, %147 : vector<16x128xf32>
    %149 = arith.truncf %148 : vector<16x128xf32> to vector<16x128xbf16>
    %c0_88 = arith.constant 0 : index
    %c0_89 = arith.constant 0 : index
    %150 = vector.load %arg17[%c0_88, %c0_89] : memref<128x512xbf16, #tpu.memory_space<vmem>>, vector<128x512xbf16>
    %cst_90 = arith.constant dense<0.000000e+00> : vector<16x512xf32>
    %151 = tpu.matmul %149, %150, %cst_90 {dimension_numbers = #tpu.dot_dimension_numbers<[1], [0], [0], [1], [0, 0, 1, 1], [], []>} : vector<16x128xbf16>, vector<128x512xbf16>, vector<16x512xf32> -> vector<16x512xf32>
    %152 = vector.extract_strided_slice %151 {offsets = [0, 0], sizes = [16, 128], strides = [1, 1]} : vector<16x512xf32> to vector<16x128xf32>
    %c0_91 = arith.constant 0 : index
    %c0_92 = arith.constant 0 : index
    %c0_93 = arith.constant 0 : index
    %153 = vector.load %arg16[%c0_91, %c0_92, %c0_93] : memref<4x32x16xf32, #tpu.memory_space<vmem>>, vector<1x32x16xf32>
    %154 = vector.shape_cast %153 : vector<1x32x16xf32> to vector<32x16xf32>
    %cst_94 = arith.constant dense<0.000000e+00> : vector<32x128xf32>
    %155 = tpu.matmul %154, %152, %cst_94 {dimension_numbers = #tpu.dot_dimension_numbers<[1], [0], [0], [1], [0, 0, 1, 1], [], []>} : vector<32x16xf32>, vector<16x128xf32>, vector<32x128xf32> -> vector<32x128xf32>
    %156 = vector.extract_strided_slice %151 {offsets = [0, 128], sizes = [16, 128], strides = [1, 1]} : vector<16x512xf32> to vector<16x128xf32>
    %c1_95 = arith.constant 1 : index
    %c0_96 = arith.constant 0 : index
    %c0_97 = arith.constant 0 : index
    %157 = vector.load %arg16[%c1_95, %c0_96, %c0_97] : memref<4x32x16xf32, #tpu.memory_space<vmem>>, vector<1x32x16xf32>
    %158 = vector.shape_cast %157 : vector<1x32x16xf32> to vector<32x16xf32>
    %cst_98 = arith.constant dense<0.000000e+00> : vector<32x128xf32>
    %159 = tpu.matmul %158, %156, %cst_98 {dimension_numbers = #tpu.dot_dimension_numbers<[1], [0], [0], [1], [0, 0, 1, 1], [], []>} : vector<32x16xf32>, vector<16x128xf32>, vector<32x128xf32> -> vector<32x128xf32>
    %160 = arith.addf %155, %159 : vector<32x128xf32>
    %161 = vector.extract_strided_slice %151 {offsets = [0, 256], sizes = [16, 128], strides = [1, 1]} : vector<16x512xf32> to vector<16x128xf32>
    %c2_99 = arith.constant 2 : index
    %c0_100 = arith.constant 0 : index
    %c0_101 = arith.constant 0 : index
    %162 = vector.load %arg16[%c2_99, %c0_100, %c0_101] : memref<4x32x16xf32, #tpu.memory_space<vmem>>, vector<1x32x16xf32>
    %163 = vector.shape_cast %162 : vector<1x32x16xf32> to vector<32x16xf32>
    %cst_102 = arith.constant dense<0.000000e+00> : vector<32x128xf32>
    %164 = tpu.matmul %163, %161, %cst_102 {dimension_numbers = #tpu.dot_dimension_numbers<[1], [0], [0], [1], [0, 0, 1, 1], [], []>} : vector<32x16xf32>, vector<16x128xf32>, vector<32x128xf32> -> vector<32x128xf32>
    %165 = arith.addf %160, %164 : vector<32x128xf32>
    %166 = vector.extract_strided_slice %151 {offsets = [0, 384], sizes = [16, 128], strides = [1, 1]} : vector<16x512xf32> to vector<16x128xf32>
    %c3_103 = arith.constant 3 : index
    %c0_104 = arith.constant 0 : index
    %c0_105 = arith.constant 0 : index
    %167 = vector.load %arg16[%c3_103, %c0_104, %c0_105] : memref<4x32x16xf32, #tpu.memory_space<vmem>>, vector<1x32x16xf32>
    %168 = vector.shape_cast %167 : vector<1x32x16xf32> to vector<32x16xf32>
    %cst_106 = arith.constant dense<0.000000e+00> : vector<32x128xf32>
    %169 = tpu.matmul %168, %166, %cst_106 {dimension_numbers = #tpu.dot_dimension_numbers<[1], [0], [0], [1], [0, 0, 1, 1], [], []>} : vector<32x16xf32>, vector<16x128xf32>, vector<32x128xf32> -> vector<32x128xf32>
    %170 = arith.addf %165, %169 : vector<32x128xf32>
    %c0_107 = arith.constant 0 : index
    %c0_108 = arith.constant 0 : index
    %171 = vector.load %arg18[%c0_107, %c0_108] : memref<128x128xf32, #tpu.memory_space<vmem>>, vector<128x128xf32>
    %cst_109 = arith.constant dense<0.000000e+00> : vector<128xf32>
    %172 = vector.multi_reduction <add>, %170, %cst_109 [0] : vector<32x128xf32> to vector<128xf32>
    %173 = vector.shape_cast %172 : vector<128xf32> to vector<1x128xf32>
    %cst_110 = arith.constant dense<0.000000e+00> : vector<1x128xf32>
    %174 = tpu.matmul %173, %171, %cst_110 {dimension_numbers = #tpu.dot_dimension_numbers<[1], [0], [0], [1], [0, 0, 1, 1], [], []>} : vector<1x128xf32>, vector<128x128xf32>, vector<1x128xf32> -> vector<1x128xf32>
    %175 = vector.broadcast %174 : vector<1x128xf32> to vector<32x128xf32>
    %176 = arith.subf %170, %175 : vector<32x128xf32>
    %177 = arith.mulf %176, %176 : vector<32x128xf32>
    %cst_111 = arith.constant dense<0.000000e+00> : vector<128xf32>
    %178 = vector.multi_reduction <add>, %177, %cst_111 [0] : vector<32x128xf32> to vector<128xf32>
    %179 = vector.shape_cast %178 : vector<128xf32> to vector<1x128xf32>
    %cst_112 = arith.constant dense<0.000000e+00> : vector<1x128xf32>
    %180 = tpu.matmul %179, %171, %cst_112 {dimension_numbers = #tpu.dot_dimension_numbers<[1], [0], [0], [1], [0, 0, 1, 1], [], []>} : vector<1x128xf32>, vector<128x128xf32>, vector<1x128xf32> -> vector<1x128xf32>
    %c0_113 = arith.constant 0 : index
    %c0_114 = arith.constant 0 : index
    %181 = vector.load %arg19[%c0_113, %c0_114] : memref<1x128xf32, #tpu.memory_space<vmem>>, vector<1x128xf32>
    %cst_115 = arith.constant 9.99999974E-6 : f32
    %182 = vector.broadcast %cst_115 : f32 to vector<1x128xf32>
    %183 = arith.addf %180, %182 : vector<1x128xf32>
    %184 = math.rsqrt %183 : vector<1x128xf32>
    %185 = arith.mulf %181, %184 : vector<1x128xf32>
    %186 = vector.broadcast %185 : vector<1x128xf32> to vector<32x128xf32>
    %187 = arith.mulf %176, %186 : vector<32x128xf32>
    %c0_116 = arith.constant 0 : index
    %c0_117 = arith.constant 0 : index
    %188 = vector.load %arg20[%c0_116, %c0_117] : memref<1x128xf32, #tpu.memory_space<vmem>>, vector<1x128xf32>
    %189 = vector.broadcast %188 : vector<1x128xf32> to vector<32x128xf32>
    %190 = arith.addf %187, %189 : vector<32x128xf32>
    %cst_118 = arith.constant 2.000000e+01 : f32
    %191 = vector.broadcast %cst_118 : f32 to vector<32x128xf32>
    %192 = arith.minimumf %190, %191 : vector<32x128xf32>
    %193 = math.exp %192 : vector<32x128xf32>
    %cst_119 = arith.constant 2.000000e+00 : f32
    %194 = vector.broadcast %cst_119 : f32 to vector<32x128xf32>
    %195 = arith.addf %193, %194 : vector<32x128xf32>
    %196 = arith.mulf %193, %195 : vector<32x128xf32>
    %197 = arith.mulf %190, %196 : vector<32x128xf32>
    %cst_120 = arith.constant 2.000000e+00 : f32
    %198 = vector.broadcast %cst_120 : f32 to vector<32x128xf32>
    %199 = arith.addf %196, %198 : vector<32x128xf32>
    %200 = tpu.reciprocal %199 {approx = true} : vector<32x128xf32> -> vector<32x128xf32>
    %201 = arith.mulf %197, %200 : vector<32x128xf32>
    %202 = arith.truncf %201 : vector<32x128xf32> to vector<32x128xbf16>
    %c0_121 = arith.constant 0 : index
    %c0_122 = arith.constant 0 : index
    %203 = vector.load %arg22[%c0_121, %c0_122] : memref<128x512xbf16, #tpu.memory_space<vmem>>, vector<128x512xbf16>
    %cst_123 = arith.constant dense<0.000000e+00> : vector<32x512xf32>
    %204 = tpu.matmul %202, %203, %cst_123 {dimension_numbers = #tpu.dot_dimension_numbers<[1], [0], [0], [1], [0, 0, 1, 1], [], []>} : vector<32x128xbf16>, vector<128x512xbf16>, vector<32x512xf32> -> vector<32x512xf32>
    %205 = vector.extract_strided_slice %204 {offsets = [0, 0], sizes = [32, 128], strides = [1, 1]} : vector<32x512xf32> to vector<32x128xf32>
    %c0_124 = arith.constant 0 : index
    %c0_125 = arith.constant 0 : index
    %c0_126 = arith.constant 0 : index
    %206 = vector.load %arg21[%c0_124, %c0_125, %c0_126] : memref<4x64x32xf32, #tpu.memory_space<vmem>>, vector<1x64x32xf32>
    %207 = vector.shape_cast %206 : vector<1x64x32xf32> to vector<64x32xf32>
    %cst_127 = arith.constant dense<0.000000e+00> : vector<64x128xf32>
    %208 = tpu.matmul %207, %205, %cst_127 {dimension_numbers = #tpu.dot_dimension_numbers<[1], [0], [0], [1], [0, 0, 1, 1], [], []>} : vector<64x32xf32>, vector<32x128xf32>, vector<64x128xf32> -> vector<64x128xf32>
    %209 = vector.extract_strided_slice %204 {offsets = [0, 128], sizes = [32, 128], strides = [1, 1]} : vector<32x512xf32> to vector<32x128xf32>
    %c1_128 = arith.constant 1 : index
    %c0_129 = arith.constant 0 : index
    %c0_130 = arith.constant 0 : index
    %210 = vector.load %arg21[%c1_128, %c0_129, %c0_130] : memref<4x64x32xf32, #tpu.memory_space<vmem>>, vector<1x64x32xf32>
    %211 = vector.shape_cast %210 : vector<1x64x32xf32> to vector<64x32xf32>
    %cst_131 = arith.constant dense<0.000000e+00> : vector<64x128xf32>
    %212 = tpu.matmul %211, %209, %cst_131 {dimension_numbers = #tpu.dot_dimension_numbers<[1], [0], [0], [1], [0, 0, 1, 1], [], []>} : vector<64x32xf32>, vector<32x128xf32>, vector<64x128xf32> -> vector<64x128xf32>
    %213 = arith.addf %208, %212 : vector<64x128xf32>
    %214 = vector.extract_strided_slice %204 {offsets = [0, 256], sizes = [32, 128], strides = [1, 1]} : vector<32x512xf32> to vector<32x128xf32>
    %c2_132 = arith.constant 2 : index
    %c0_133 = arith.constant 0 : index
    %c0_134 = arith.constant 0 : index
    %215 = vector.load %arg21[%c2_132, %c0_133, %c0_134] : memref<4x64x32xf32, #tpu.memory_space<vmem>>, vector<1x64x32xf32>
    %216 = vector.shape_cast %215 : vector<1x64x32xf32> to vector<64x32xf32>
    %cst_135 = arith.constant dense<0.000000e+00> : vector<64x128xf32>
    %217 = tpu.matmul %216, %214, %cst_135 {dimension_numbers = #tpu.dot_dimension_numbers<[1], [0], [0], [1], [0, 0, 1, 1], [], []>} : vector<64x32xf32>, vector<32x128xf32>, vector<64x128xf32> -> vector<64x128xf32>
    %218 = arith.addf %213, %217 : vector<64x128xf32>
    %219 = vector.extract_strided_slice %204 {offsets = [0, 384], sizes = [32, 128], strides = [1, 1]} : vector<32x512xf32> to vector<32x128xf32>
    %c3_136 = arith.constant 3 : index
    %c0_137 = arith.constant 0 : index
    %c0_138 = arith.constant 0 : index
    %220 = vector.load %arg21[%c3_136, %c0_137, %c0_138] : memref<4x64x32xf32, #tpu.memory_space<vmem>>, vector<1x64x32xf32>
    %221 = vector.shape_cast %220 : vector<1x64x32xf32> to vector<64x32xf32>
    %cst_139 = arith.constant dense<0.000000e+00> : vector<64x128xf32>
    %222 = tpu.matmul %221, %219, %cst_139 {dimension_numbers = #tpu.dot_dimension_numbers<[1], [0], [0], [1], [0, 0, 1, 1], [], []>} : vector<64x32xf32>, vector<32x128xf32>, vector<64x128xf32> -> vector<64x128xf32>
    %223 = arith.addf %218, %222 : vector<64x128xf32>
    %cst_140 = arith.constant 0.000000e+00 : f32
    %224 = vector.broadcast %cst_140 : f32 to vector<64x128xf32>
    %225 = arith.subf %224, %223 : vector<64x128xf32>
    %226 = math.exp %225 : vector<64x128xf32>
    %cst_141 = arith.constant 1.000000e+00 : f32
    %227 = vector.broadcast %cst_141 : f32 to vector<64x128xf32>
    %228 = arith.addf %227, %226 : vector<64x128xf32>
    %cst_142 = arith.constant 1.000000e+00 : f32
    %229 = vector.broadcast %cst_142 : f32 to vector<64x128xf32>
    %230 = arith.divf %229, %228 : vector<64x128xf32>
    %c0_143 = arith.constant 0 : index
    %c0_144 = arith.constant 0 : index
    %231 = vector.load %arg23[%c0_143, %c0_144] : memref<64x128xf32, #tpu.memory_space<vmem>>, vector<64x128xf32>
    tpu.vector_store %arg23[%c0_143, %c0_144], %230 {strides = array<i32>} : memref<64x128xf32, #tpu.memory_space<vmem>>, vector<64x128xf32>,
    return
  }
}

</mosaic_0001>

<llo_original>
// kernel: forward.1
$region0: #{forward.1}
  #allocation0 [shape = 'u32[]', space=smem, size = 0x4, offset = 0x4, fixed_abs, tag = 'smem constant byte address 0x4 - core index']
  #allocation1 [shape = 'u32[144,128]{1,0:T(1,128)}', space=vmem, size = 0x12000, scoped, tag = 'internal scratch']
  %s0 = inlined_call_operand.vmem [shape: bf16[2,16], index: 0, kind: input, shape index: {}]
  %s1 = inlined_call_operand.hbm [shape: f32[2,4,2], index: 1, kind: input, shape index: {}]
  %s2 = inlined_call_operand.vmem [shape: bf16[16,256], index: 2, kind: input, shape index: {}]
  %s3 = inlined_call_operand.hbm [shape: f32[128,128], index: 3, kind: input, shape index: {}]
  %s4 = inlined_call_operand.vmem [shape: f32[1,128], index: 4, kind: input, shape index: {}, may-alias: {4,9,14,19}]
  %s5 = inlined_call_operand.vmem [shape: f32[1,128], index: 5, kind: input, shape index: {}, may-alias: {5,10,15,20}]
  %s6 = inlined_call_operand.hbm [shape: f32[4,8,4], index: 6, kind: input, shape index: {}]
  %s7 = inlined_call_operand.hbm [shape: bf16[128,512], index: 7, kind: input, shape index: {}]
  %s8 = inlined_call_operand.hbm [shape: f32[128,128], index: 8, kind: input, shape index: {}]
  %s9 = inlined_call_operand.vmem [shape: f32[1,128], index: 9, kind: input, shape index: {}, may-alias: {4,9,14,19}]
  %s10 = inlined_call_operand.vmem [shape: f32[1,128], index: 10, kind: input, shape index: {}, may-alias: {5,10,15,20}]
  %s11 = inlined_call_operand.hbm [shape: f32[4,16,8], index: 11, kind: input, shape index: {}]
  %s12 = inlined_call_operand.hbm [shape: bf16[128,512], index: 12, kind: input, shape index: {}]
  %s13 = inlined_call_operand.hbm [shape: f32[128,128], index: 13, kind: input, shape index: {}]
  %s14 = inlined_call_operand.vmem [shape: f32[1,128], index: 14, kind: input, shape index: {}, may-alias: {4,9,14,19}]
  %s15 = inlined_call_operand.vmem [shape: f32[1,128], index: 15, kind: input, shape index: {}, may-alias: {5,10,15,20}]
  %s16 = inlined_call_operand.hbm [shape: f32[4,32,16], index: 16, kind: input, shape index: {}]
  %s17 = inlined_call_operand.hbm [shape: bf16[128,512], index: 17, kind: input, shape index: {}]
  %s18 = inlined_call_operand.hbm [shape: f32[128,128], index: 18, kind: input, shape index: {}]
  %s19 = inlined_call_operand.vmem [shape: f32[1,128], index: 19, kind: input, shape index: {}, may-alias: {4,9,14,19}]
  %s20 = inlined_call_operand.vmem [shape: f32[1,128], index: 20, kind: input, shape index: {}, may-alias: {5,10,15,20}]
  %s21 = inlined_call_operand.hbm [shape: f32[4,64,32], index: 21, kind: input, shape index: {}]
  %s22 = inlined_call_operand.hbm [shape: bf16[128,512], index: 22, kind: input, shape index: {}]
  %s23 = inlined_call_operand.hbm [shape: f32[64,128], index: 23, kind: output, shape index: {}]
  %s24 = sld [smem:[#allocation0]]
  $region154: #{forward.1} parent=0
    _
  %s26 = ssub.s32 1, %s24
  %s27 = scalar_select 0, %s26, %s24
  $region1: #{forward.1} parent=0
    #allocation2 [shape = 'u8[4096]{0}', space=vmem, size = 0x1000, scoped, tag = 'input window, operand 1, single buffered']
    #allocation3 [shape = 's32[1]{0}', space=sflag, size = 0x4, scoped, tag = 'scoped memory for forward.1']
    #allocation4 [shape = 's32[1]{0}', space=sflag, size = 0x4, scoped, tag = 'scoped memory for forward.1']
    #allocation5 [shape = 'u8[65536]{0}', space=vmem, size = 0x10000, scoped, tag = 'input window, operand 3, single buffered']
    #allocation6 [shape = 's32[1]{0}', space=sflag, size = 0x4, scoped, tag = 'scoped memory for forward.1']
    #allocation7 [shape = 'u8[16384]{0}', space=vmem, size = 0x4000, scoped, tag = 'input window, operand 6, single buffered']
    #allocation8 [shape = 'u8[131072]{0}', space=vmem, size = 0x20000, scoped, tag = 'input window, operand 7, single buffered']
    #allocation9 [shape = 's32[1]{0}', space=sflag, size = 0x4, scoped, tag = 'scoped memory for forward.1']
    #allocation10 [shape = 'u8[65536]{0}', space=vmem, size = 0x10000, scoped, tag = 'input window, operand 8, single buffered']
    #allocation11 [shape = 'u8[32768]{0}', space=vmem, size = 0x8000, scoped, tag = 'input window, operand 11, single buffered']
    #allocation12 [shape = 's32[1]{0}', space=sflag, size = 0x4, scoped, tag = 'scoped memory for forward.1']
    #allocation13 [shape = 'u8[131072]{0}', space=vmem, size = 0x20000, scoped, tag = 'input window, operand 12, single buffered']
    #allocation14 [shape = 'u8[65536]{0}', space=vmem, size = 0x10000, scoped, tag = 'input window, operand 13, single buffered']
    #allocation15 [shape = 's32[1]{0}', space=sflag, size = 0x4, scoped, tag = 'scoped memory for forward.1']
    #allocation16 [shape = 'u8[65536]{0}', space=vmem, size = 0x10000, scoped, tag = 'input window, operand 16, single buffered']
    #allocation17 [shape = 'u8[131072]{0}', space=vmem, size = 0x20000, scoped, tag = 'input window, operand 17, single buffered']
    #allocation18 [shape = 's32[1]{0}', space=sflag, size = 0x4, scoped, tag = 'scoped memory for forward.1']
    #allocation19 [shape = 'u8[65536]{0}', space=vmem, size = 0x10000, scoped, tag = 'input window, operand 18, single buffered']
    #allocation20 [shape = 'u8[131072]{0}', space=vmem, size = 0x20000, scoped, tag = 'input window, operand 21, single buffered']
    #allocation21 [shape = 's32[1]{0}', space=sflag, size = 0x4, scoped, tag = 'scoped memory for forward.1']
    #allocation22 [shape = 'u8[131072]{0}', space=vmem, size = 0x20000, scoped, tag = 'input window, operand 22, single buffered']
    #allocation23 [shape = 'u8[32768]{0}', space=vmem, size = 0x8000, scoped, tag = 'output window, operand 0, single buffered']
    %28 = vsyncpa [#allocation3], 0
    %29 = vsyncpa [#allocation6], 0
    %30 = vsyncpa [#allocation9], 0
    %31 = vsyncpa [#allocation12], 0
    %32 = vsyncpa [#allocation15], 0
    %33 = vsyncpa [#allocation18], 0
    %34 = vsyncpa [#allocation21], 0
    %35 = vsyncpa [#allocation4], 0
    // Predicated region
    $region2: #{forward.1} parent=1 // pred_check
      _
    $region3: #{forward.1} parent=1 // pred_check_branch
      %37 = sbr.rel (0) target = $region5
    $region4: #{forward.1} parent=1 // pred_region
      _
    $region5: #{forward.1} parent=1 // pred_fallthru
      _
    // Predicated region
    $region6: #{forward.1} parent=1 // pred_check
      _
    $region7: #{forward.1} parent=1 // pred_check_branch
      %39 = sbr.rel (0) target = $region9
    $region8: #{forward.1} parent=1 // pred_region
      %s41 = ssub.s32 128, 128
      %42 = vsyncadd [#allocation3], %s41
      %s43 = sshll.u32 [#allocation2], 4
      %s44 = int_to_ptr.vmem [resolvable:$true] %s43
      %49 = dma.hbm_to_vmem [thread:$0]  %s1, 128, %s44, [#allocation3], 64, 64, 4
    $region9: #{forward.1} parent=1 // pred_fallthru
      _
    // Predicated region
    $region10: #{forward.1} parent=1 // pred_check
      _
    $region11: #{forward.1} parent=1 // pred_check_branch
      %51 = sbr.rel (0) target = $region13
    $region12: #{forward.1} parent=1 // pred_region
      _
    $region13: #{forward.1} parent=1 // pred_fallthru
      _
    // Predicated region
    $region14: #{forward.1} parent=1 // pred_check
      _
    $region15: #{forward.1} parent=1 // pred_check_branch
      %53 = sbr.rel (0) target = $region17
    $region16: #{forward.1} parent=1 // pred_region
      %s55 = ssub.s32 2048, 2048
      %56 = vsyncadd [#allocation6], %s55
      %s57 = sshll.u32 [#allocation5], 4
      %s58 = int_to_ptr.vmem [resolvable:$true] %s57
      %63 = dma.hbm_to_vmem [thread:$0]  %s3, 2048, %s58, [#allocation6], 128, 128, 8
    $region17: #{forward.1} parent=1 // pred_fallthru
      _
    // Predicated region
    $region18: #{forward.1} parent=1 // pred_check
      _
    $region19: #{forward.1} parent=1 // pred_check_branch
      %65 = sbr.rel (0) target = $region21
    $region20: #{forward.1} parent=1 // pred_region
      _
    $region21: #{forward.1} parent=1 // pred_fallthru
      _
    // Predicated region
    $region22: #{forward.1} parent=1 // pred_check
      _
    $region23: #{forward.1} parent=1 // pred_check_branch
      %67 = sbr.rel (0) target = $region25
    $region24: #{forward.1} parent=1 // pred_region
      _
    $region25: #{forward.1} parent=1 // pred_fallthru
      _
    // Predicated region
    $region26: #{forward.1} parent=1 // pred_check
      _
    $region27: #{forward.1} parent=1 // pred_check_branch
      %69 = sbr.rel (0) target = $region29
    $region28: #{forward.1} parent=1 // pred_region
      %s71 = ssub.s32 512, 512
      %72 = vsyncadd [#allocation6], %s71
      %s73 = sshll.u32 [#allocation7], 4
      %s74 = int_to_ptr.vmem [resolvable:$true] %s73
      %79 = dma.hbm_to_vmem [thread:$0]  %s6, 512, %s74, [#allocation6], 128, 128, 8
    $region29: #{forward.1} parent=1 // pred_fallthru
      _
    // Predicated region
    $region30: #{forward.1} parent=1 // pred_check
      _
    $region31: #{forward.1} parent=1 // pred_check_branch
      %81 = sbr.rel (0) target = $region33
    $region32: #{forward.1} parent=1 // pred_region
      %s83 = ssub.s32 4096, 4096
      %84 = vsyncadd [#allocation9], %s83
      %s85 = sshll.u32 [#allocation8], 4
      %s86 = int_to_ptr.vmem [resolvable:$true] %s85
      %91 = dma.hbm_to_vmem [thread:$0]  %s7, 4096, %s86, [#allocation9], 256, 256, 16
    $region33: #{forward.1} parent=1 // pred_fallthru
      _
    // Predicated region
    $region34: #{forward.1} parent=1 // pred_check
      _
    $region35: #{forward.1} parent=1 // pred_check_branch
      %93 = sbr.rel (0) target = $region37
    $region36: #{forward.1} parent=1 // pred_region
      %s95 = ssub.s32 2048, 2048
      %96 = vsyncadd [#allocation9], %s95
      %s97 = sshll.u32 [#allocation10], 4
      %s98 = int_to_ptr.vmem [resolvable:$true] %s97
      %103 = dma.hbm_to_vmem [thread:$0]  %s8, 2048, %s98, [#allocation9], 128, 128, 8
    $region37: #{forward.1} parent=1 // pred_fallthru
      _
    // Predicated region
    $region38: #{forward.1} parent=1 // pred_check
      _
    $region39: #{forward.1} parent=1 // pred_check_branch
      %105 = sbr.rel (0) target = $region41
    $region40: #{forward.1} parent=1 // pred_region
      _
    $region41: #{forward.1} parent=1 // pred_fallthru
      _
    // Predicated region
    $region42: #{forward.1} parent=1 // pred_check
      _
    $region43: #{forward.1} parent=1 // pred_check_branch
      %107 = sbr.rel (0) target = $region45
    $region44: #{forward.1} parent=1 // pred_region
      _
    $region45: #{forward.1} parent=1 // pred_fallthru
      _
    // Predicated region
    $region46: #{forward.1} parent=1 // pred_check
      _
    $region47: #{forward.1} parent=1 // pred_check_branch
      %109 = sbr.rel (0) target = $region49
    $region48: #{forward.1} parent=1 // pred_region
      %s111 = ssub.s32 1024, 1024
      %112 = vsyncadd [#allocation12], %s111
      %s113 = sshll.u32 [#allocation11], 4
      %s114 = int_to_ptr.vmem [resolvable:$true] %s113
      %119 = dma.hbm_to_vmem [thread:$0]  %s11, 1024, %s114, [#allocation12], 128, 128, 8
    $region49: #{forward.1} parent=1 // pred_fallthru
      _
    // Predicated region
    $region50: #{forward.1} parent=1 // pred_check
      _
    $region51: #{forward.1} parent=1 // pred_check_branch
      %121 = sbr.rel (0) target = $region53
    $region52: #{forward.1} parent=1 // pred_region
      %s123 = ssub.s32 4096, 4096
      %124 = vsyncadd [#allocation12], %s123
      %s125 = sshll.u32 [#allocation13], 4
      %s126 = int_to_ptr.vmem [resolvable:$true] %s125
      %131 = dma.hbm_to_vmem [thread:$0]  %s12, 4096, %s126, [#allocation12], 256, 256, 16
    $region53: #{forward.1} parent=1 // pred_fallthru
      _
    // Predicated region
    $region54: #{forward.1} parent=1 // pred_check
      _
    $region55: #{forward.1} parent=1 // pred_check_branch
      %133 = sbr.rel (0) target = $region57
    $region56: #{forward.1} parent=1 // pred_region
      %s135 = ssub.s32 2048, 2048
      %136 = vsyncadd [#allocation15], %s135
      %s137 = sshll.u32 [#allocation14], 4
      %s138 = int_to_ptr.vmem [resolvable:$true] %s137
      %143 = dma.hbm_to_vmem [thread:$0]  %s13, 2048, %s138, [#allocation15], 128, 128, 8
    $region57: #{forward.1} parent=1 // pred_fallthru
      _
    // Predicated region
    $region58: #{forward.1} parent=1 // pred_check
      _
    $region59: #{forward.1} parent=1 // pred_check_branch
      %145 = sbr.rel (0) target = $region61
    $region60: #{forward.1} parent=1 // pred_region
      _
    $region61: #{forward.1} parent=1 // pred_fallthru
      _
    // Predicated region
    $region62: #{forward.1} parent=1 // pred_check
      _
    $region63: #{forward.1} parent=1 // pred_check_branch
      %147 = sbr.rel (0) target = $region65
    $region64: #{forward.1} parent=1 // pred_region
      _
    $region65: #{forward.1} parent=1 // pred_fallthru
      _
    // Predicated region
    $region66: #{forward.1} parent=1 // pred_check
      _
    $region67: #{forward.1} parent=1 // pred_check_branch
      %149 = sbr.rel (0) target = $region69
    $region68: #{forward.1} parent=1 // pred_region
      %s151 = ssub.s32 2048, 2048
      %152 = vsyncadd [#allocation15], %s151
      %s153 = sshll.u32 [#allocation16], 4
      %s154 = int_to_ptr.vmem [resolvable:$true] %s153
      %159 = dma.hbm_to_vmem [thread:$0]  %s16, 2048, %s154, [#allocation15], 128, 128, 8
    $region69: #{forward.1} parent=1 // pred_fallthru
      _
    // Predicated region
    $region70: #{forward.1} parent=1 // pred_check
      _
    $region71: #{forward.1} parent=1 // pred_check_branch
      %161 = sbr.rel (0) target = $region73
    $region72: #{forward.1} parent=1 // pred_region
      %s163 = ssub.s32 4096, 4096
      %164 = vsyncadd [#allocation18], %s163
      %s165 = sshll.u32 [#allocation17], 4
      %s166 = int_to_ptr.vmem [resolvable:$true] %s165
      %171 = dma.hbm_to_vmem [thread:$0]  %s17, 4096, %s166, [#allocation18], 256, 256, 16
    $region73: #{forward.1} parent=1 // pred_fallthru
      _
    // Predicated region
    $region74: #{forward.1} parent=1 // pred_check
      _
    $region75: #{forward.1} parent=1 // pred_check_branch
      %173 = sbr.rel (0) target = $region77
    $region76: #{forward.1} parent=1 // pred_region
      %s175 = ssub.s32 2048, 2048
      %176 = vsyncadd [#allocation18], %s175
      %s177 = sshll.u32 [#allocation19], 4
      %s178 = int_to_ptr.vmem [resolvable:$true] %s177
      %183 = dma.hbm_to_vmem [thread:$0]  %s18, 2048, %s178, [#allocation18], 128, 128, 8
    $region77: #{forward.1} parent=1 // pred_fallthru
      _
    // Predicated region
    $region78: #{forward.1} parent=1 // pred_check
      _
    $region79: #{forward.1} parent=1 // pred_check_branch
      %185 = sbr.rel (0) target = $region81
    $region80: #{forward.1} parent=1 // pred_region
      _
    $region81: #{forward.1} parent=1 // pred_fallthru
      _
    // Predicated region
    $region82: #{forward.1} parent=1 // pred_check
      _
    $region83: #{forward.1} parent=1 // pred_check_branch
      %187 = sbr.rel (0) target = $region85
    $region84: #{forward.1} parent=1 // pred_region
      _
    $region85: #{forward.1} parent=1 // pred_fallthru
      _
    // Predicated region
    $region86: #{forward.1} parent=1 // pred_check
      _
    $region87: #{forward.1} parent=1 // pred_check_branch
      %189 = sbr.rel (0) target = $region89
    $region88: #{forward.1} parent=1 // pred_region
      %s191 = ssub.s32 4096, 4096
      %192 = vsyncadd [#allocation21], %s191
      %s193 = sshll.u32 [#allocation20], 4
      %s194 = int_to_ptr.vmem [resolvable:$true] %s193
      %199 = dma.hbm_to_vmem [thread:$0]  %s21, 4096, %s194, [#allocation21], 128, 128, 8
    $region89: #{forward.1} parent=1 // pred_fallthru
      _
    // Predicated region
    $region90: #{forward.1} parent=1 // pred_check
      _
    $region91: #{forward.1} parent=1 // pred_check_branch
      %201 = sbr.rel (0) target = $region93
    $region92: #{forward.1} parent=1 // pred_region
      %s203 = ssub.s32 4096, 4096
      %204 = vsyncadd [#allocation21], %s203
      %s205 = sshll.u32 [#allocation22], 4
      %s206 = int_to_ptr.vmem [resolvable:$true] %s205
      %211 = dma.hbm_to_vmem [thread:$0]  %s22, 4096, %s206, [#allocation21], 256, 256, 16
    $region93: #{forward.1} parent=1 // pred_fallthru
      _
    // Predicated region
    $region94: #{forward.1} parent=1 // pred_check
      _
    $region95: #{forward.1} parent=1 // pred_check_branch
      %213 = sbr.rel (0) target = $region97
    $region96: #{forward.1} parent=1 // pred_region
      %214 = dma.done [#allocation3], 128
    $region97: #{forward.1} parent=1 // pred_fallthru
      _
    // Predicated region
    $region98: #{forward.1} parent=1 // pred_check
      _
    $region99: #{forward.1} parent=1 // pred_check_branch
      %216 = sbr.rel (0) target = $region101
    $region100: #{forward.1} parent=1 // pred_region
      %217 = dma.done [#allocation6], 2048
    $region101: #{forward.1} parent=1 // pred_fallthru
      _
    // Predicated region
    $region102: #{forward.1} parent=1 // pred_check
      _
    $region103: #{forward.1} parent=1 // pred_check_branch
      %219 = sbr.rel (0) target = $region105
    $region104: #{forward.1} parent=1 // pred_region
      %220 = dma.done [#allocation6], 512
    $region105: #{forward.1} parent=1 // pred_fallthru
      _
    // Predicated region
    $region106: #{forward.1} parent=1 // pred_check
      _
    $region107: #{forward.1} parent=1 // pred_check_branch
      %222 = sbr.rel (0) target = $region109
    $region108: #{forward.1} parent=1 // pred_region
      %223 = dma.done [#allocation9], 4096
    $region109: #{forward.1} parent=1 // pred_fallthru
      _
    // Predicated region
    $region110: #{forward.1} parent=1 // pred_check
      _
    $region111: #{forward.1} parent=1 // pred_check_branch
      %225 = sbr.rel (0) target = $region113
    $region112: #{forward.1} parent=1 // pred_region
      %226 = dma.done [#allocation9], 2048
    $region113: #{forward.1} parent=1 // pred_fallthru
      _
    // Predicated region
    $region114: #{forward.1} parent=1 // pred_check
      _
    $region115: #{forward.1} parent=1 // pred_check_branch
      %228 = sbr.rel (0) target = $region117
    $region116: #{forward.1} parent=1 // pred_region
      %229 = dma.done [#allocation12], 1024
    $region117: #{forward.1} parent=1 // pred_fallthru
      _
    // Predicated region
    $region118: #{forward.1} parent=1 // pred_check
      _
    $region119: #{forward.1} parent=1 // pred_check_branch
      %231 = sbr.rel (0) target = $region121
    $region120: #{forward.1} parent=1 // pred_region
      %232 = dma.done [#allocation12], 4096
    $region121: #{forward.1} parent=1 // pred_fallthru
      _
    // Predicated region
    $region122: #{forward.1} parent=1 // pred_check
      _
    $region123: #{forward.1} parent=1 // pred_check_branch
      %234 = sbr.rel (0) target = $region125
    $region124: #{forward.1} parent=1 // pred_region
      %235 = dma.done [#allocation15], 2048
    $region125: #{forward.1} parent=1 // pred_fallthru
      _
    // Predicated region
    $region126: #{forward.1} parent=1 // pred_check
      _
    $region127: #{forward.1} parent=1 // pred_check_branch
      %237 = sbr.rel (0) target = $region129
    $region128: #{forward.1} parent=1 // pred_region
      %238 = dma.done [#allocation15], 2048
    $region129: #{forward.1} parent=1 // pred_fallthru
      _
    // Predicated region
    $region130: #{forward.1} parent=1 // pred_check
      _
    $region131: #{forward.1} parent=1 // pred_check_branch
      %240 = sbr.rel (0) target = $region133
    $region132: #{forward.1} parent=1 // pred_region
      %241 = dma.done [#allocation18], 4096
    $region133: #{forward.1} parent=1 // pred_fallthru
      _
    // Predicated region
    $region134: #{forward.1} parent=1 // pred_check
      _
    $region135: #{forward.1} parent=1 // pred_check_branch
      %243 = sbr.rel (0) target = $region137
    $region136: #{forward.1} parent=1 // pred_region
      %244 = dma.done [#allocation18], 2048
    $region137: #{forward.1} parent=1 // pred_fallthru
      _
    // Predicated region
    $region138: #{forward.1} parent=1 // pred_check
      _
    $region139: #{forward.1} parent=1 // pred_check_branch
      %246 = sbr.rel (0) target = $region141
    $region140: #{forward.1} parent=1 // pred_region
      %247 = dma.done [#allocation21], 4096
    $region141: #{forward.1} parent=1 // pred_fallthru
      _
    // Predicated region
    $region142: #{forward.1} parent=1 // pred_check
      _
    $region143: #{forward.1} parent=1 // pred_check_branch
      %249 = sbr.rel (0) target = $region145
    $region144: #{forward.1} parent=1 // pred_region
      %250 = dma.done [#allocation21], 4096
    $region145: #{forward.1} parent=1 // pred_fallthru
      _
    %v252 = vld [vmem:[%s0] sm:$0x1]
    %v253 = vld [vmem:[%s2] sm:$0xff]
    %v254 = vld [vmem:[%s2 + $0x8] sm:$0xff]
    %v257 = vunpack.c.l.b16 %v253
    %v258 = vunpack.c.h.b16 %v253
    %v259 = vunpack.c.l.b16 %v254
    %v260 = vunpack.c.h.b16 %v254
    %v261 = vpack.c.b16 %v259, %v257
    %v262 = vpack.c.b16 %v260, %v258
    %vm265 = vcmask 130048
    %v267 = vsel %vm265, %v252, 0
    %269 = vmatprep.subr.bf16.mxu0 0
    %270 = vmatpush1.bf16.msra.mxu0 0
    %271 = vmatprep.subr.bf16.mxu0 0
    %272 = vmatpush1.bf16.msra.mxu0 0
    %273 = vmatprep.subr.bf16.mxu0 0
    %274 = vmatpush1.bf16.msra.mxu0 0
    %275 = vmatprep.subr.bf16.mxu0 0
    %276 = vmatpush1.bf16.msra.mxu0 0
    %277 = vmatprep.subr.bf16.mxu0 0
    %278 = vmatpush1.bf16.msra.mxu0 0
    %279 = vmatprep.subr.bf16.mxu0 0
    %280 = vmatpush1.bf16.msra.mxu0 0
    %281 = vmatprep.subr.bf16.mxu0 0
    %282 = vmatpush1.bf16.msra.mxu0 0
    %283 = vmatprep.subr.bf16.mxu0 %v262
    %284 = vmatpush1.bf16.msra.mxu0 %v261
    %285 = vmatprep.subr.bf16.mxu0 0
    %286 = vmatpush2.bf16.msra.mxu0 0
    %287 = vmatprep.subr.bf16.mxu0 0
    %288 = vmatpush2.bf16.msra.mxu0 0
    %289 = vmatprep.subr.bf16.mxu0 0
    %290 = vmatpush2.bf16.msra.mxu0 0
    %291 = vmatprep.subr.bf16.mxu0 0
    %292 = vmatpush2.bf16.msra.mxu0 0
    %293 = vmatprep.subr.bf16.mxu0 0
    %294 = vmatpush2.bf16.msra.mxu0 0
    %295 = vmatprep.subr.bf16.mxu0 0
    %296 = vmatpush2.bf16.msra.mxu0 0
    %297 = vmatprep.subr.bf16.mxu0 0
    %298 = vmatpush2.bf16.msra.mxu0 0
    %299 = vmatprep.subr.bf16.mxu0 0
    %300 = vmatpush2.bf16.msra.mxu0 0
    %301 = vmatprep.mubr.bf16.mxu0 0
    %302 = vmatmul.mubr.bf16.gmra.mxu0 %v267
    %v303 = vpop.f32.mrf.mxu0
    %v304 = vadd.f32 0.0, %v303
    %v305 = vpop.f32.mrf.mxu0
    %v306 = vadd.f32 0.0, %v305
    %v307 = vpop.f32.mrf.mxu0
    %v308 = vpop.f32.mrf.mxu0
    %309 = vdwg.mxu0
    %v310 = vld [vmem:[#allocation2] sm:$0xf]
    %s311 = scalar_lea.vmem [#allocation2], 4
    %v312 = vld [vmem:[%s311] sm:$0xf]
    %vm313 = vcmask 15360
    %v315 = vsel %vm313, %v312, 0
    %vm317 = vcmask 1041408
    %v319 = vsel %vm317, %v306, 0
    %321 = vmatprep.subr.mxu0 0.0
    %322 = vmatpush1.msra.mxu0 0.0
    %323 = vmatprep.subr.mxu0 0.0
    %324 = vmatpush1.msra.mxu0 0.0
    %325 = vmatprep.subr.mxu0 0.0
    %326 = vmatpush1.msra.mxu0 0.0
    %327 = vmatprep.subr.mxu0 0.0
    %328 = vmatpush1.msra.mxu0 0.0
    %329 = vmatprep.subr.mxu0 0.0
    %330 = vmatpush1.msra.mxu0 0.0
    %331 = vmatprep.subr.mxu0 0.0
    %332 = vmatpush1.msra.mxu0 0.0
    %333 = vmatprep.subr.mxu0 0.0
    %334 = vmatpush1.msra.mxu0 0.0
    %335 = vmatprep.subr.mxu0 0.0
    %336 = vmatpush1.msra.mxu0 0.0
    %337 = vmatprep.subr.mxu0 0.0
    %338 = vmatpush1.msra.mxu0 0.0
    %339 = vmatprep.subr.mxu0 0.0
    %340 = vmatpush1.msra.mxu0 0.0
    %341 = vmatprep.subr.mxu0 0.0
    %342 = vmatpush1.msra.mxu0 0.0
    %343 = vmatprep.subr.mxu0 0.0
    %344 = vmatpush1.msra.mxu0 0.0
    %345 = vmatprep.subr.mxu0 0.0
    %346 = vmatpush1.msra.mxu0 0.0
    %347 = vmatprep.subr.mxu0 0.0
    %348 = vmatpush1.msra.mxu0 0.0
    %349 = vmatprep.subr.mxu0 0.0
    %350 = vmatpush1.msra.mxu0 0.0
    %351 = vmatprep.subr.mxu0 0.0
    %352 = vmatpush1.msra.mxu0 %v319
    %353 = vmatprep.subr.mxu0 0.0
    %354 = vmatpush2.msra.mxu0 0.0
    %355 = vmatprep.subr.mxu0 0.0
    %356 = vmatpush2.msra.mxu0 0.0
    %357 = vmatprep.subr.mxu0 0.0
    %358 = vmatpush2.msra.mxu0 0.0
    %359 = vmatprep.subr.mxu0 0.0
    %360 = vmatpush2.msra.mxu0 0.0
    %361 = vmatprep.subr.mxu0 0.0
    %362 = vmatpush2.msra.mxu0 0.0
    %363 = vmatprep.subr.mxu0 0.0
    %364 = vmatpush2.msra.mxu0 0.0
    %365 = vmatprep.subr.mxu0 0.0
    %366 = vmatpush2.msra.mxu0 0.0
    %367 = vmatprep.subr.mxu0 0.0
    %368 = vmatpush2.msra.mxu0 0.0
    %369 = vmatprep.subr.mxu0 0.0
    %370 = vmatpush2.msra.mxu0 0.0
    %371 = vmatprep.subr.mxu0 0.0
    %372 = vmatpush2.msra.mxu0 0.0
    %373 = vmatprep.subr.mxu0 0.0
    %374 = vmatpush2.msra.mxu0 0.0
    %375 = vmatprep.subr.mxu0 0.0
    %376 = vmatpush2.msra.mxu0 0.0
    %377 = vmatprep.subr.mxu0 0.0
    %378 = vmatpush2.msra.mxu0 0.0
    %379 = vmatprep.subr.mxu0 0.0
    %380 = vmatpush2.msra.mxu0 0.0
    %381 = vmatprep.subr.mxu0 0.0
    %382 = vmatpush2.msra.mxu0 0.0
    %383 = vmatprep.subr.mxu0 0.0
    %384 = vmatpush2.msra.mxu0 0.0
    %385 = vmatprep.mubr.f32.mxu0 0.0
    %386 = vmatmul.mubr.f32.gmra.mxu0 %v315
    %v387 = vpop.f32.mrf.mxu0
    %v388 = vadd.f32 0.0, %v387
    %v389 = vpop.f32.mrf.mxu0
    %390 = vdwg.mxu0
    %v392 = vsel %vm313, %v310, 0
    %v395 = vsel %vm317, %v304, 0
    %397 = vmatprep.subr.mxu0 0.0
    %398 = vmatpush1.msra.mxu0 0.0
    %399 = vmatprep.subr.mxu0 0.0
    %400 = vmatpush1.msra.mxu0 0.0
    %401 = vmatprep.subr.mxu0 0.0
    %402 = vmatpush1.msra.mxu0 0.0
    %403 = vmatprep.subr.mxu0 0.0
    %404 = vmatpush1.msra.mxu0 0.0
    %405 = vmatprep.subr.mxu0 0.0
    %406 = vmatpush1.msra.mxu0 0.0
    %407 = vmatprep.subr.mxu0 0.0
    %408 = vmatpush1.msra.mxu0 0.0
    %409 = vmatprep.subr.mxu0 0.0
    %410 = vmatpush1.msra.mxu0 0.0
    %411 = vmatprep.subr.mxu0 0.0
    %412 = vmatpush1.msra.mxu0 0.0
    %413 = vmatprep.subr.mxu0 0.0
    %414 = vmatpush1.msra.mxu0 0.0
    %415 = vmatprep.subr.mxu0 0.0
    %416 = vmatpush1.msra.mxu0 0.0
    %417 = vmatprep.subr.mxu0 0.0
    %418 = vmatpush1.msra.mxu0 0.0
    %419 = vmatprep.subr.mxu0 0.0
    %420 = vmatpush1.msra.mxu0 0.0
    %421 = vmatprep.subr.mxu0 0.0
    %422 = vmatpush1.msra.mxu0 0.0
    %423 = vmatprep.subr.mxu0 0.0
    %424 = vmatpush1.msra.mxu0 0.0
    %425 = vmatprep.subr.mxu0 0.0
    %426 = vmatpush1.msra.mxu0 0.0
    %427 = vmatprep.subr.mxu0 0.0
    %428 = vmatpush1.msra.mxu0 %v395
    %429 = vmatprep.subr.mxu0 0.0
    %430 = vmatpush2.msra.mxu0 0.0
    %431 = vmatprep.subr.mxu0 0.0
    %432 = vmatpush2.msra.mxu0 0.0
    %433 = vmatprep.subr.mxu0 0.0
    %434 = vmatpush2.msra.mxu0 0.0
    %435 = vmatprep.subr.mxu0 0.0
    %436 = vmatpush2.msra.mxu0 0.0
    %437 = vmatprep.subr.mxu0 0.0
    %438 = vmatpush2.msra.mxu0 0.0
    %439 = vmatprep.subr.mxu0 0.0
    %440 = vmatpush2.msra.mxu0 0.0
    %441 = vmatprep.subr.mxu0 0.0
    %442 = vmatpush2.msra.mxu0 0.0
    %443 = vmatprep.subr.mxu0 0.0
    %444 = vmatpush2.msra.mxu0 0.0
    %445 = vmatprep.subr.mxu0 0.0
    %446 = vmatpush2.msra.mxu0 0.0
    %447 = vmatprep.subr.mxu0 0.0
    %448 = vmatpush2.msra.mxu0 0.0
    %449 = vmatprep.subr.mxu0 0.0
    %450 = vmatpush2.msra.mxu0 0.0
    %451 = vmatprep.subr.mxu0 0.0
    %452 = vmatpush2.msra.mxu0 0.0
    %453 = vmatprep.subr.mxu0 0.0
    %454 = vmatpush2.msra.mxu0 0.0
    %455 = vmatprep.subr.mxu0 0.0
    %456 = vmatpush2.msra.mxu0 0.0
    %457 = vmatprep.subr.mxu0 0.0
    %458 = vmatpush2.msra.mxu0 0.0
    %459 = vmatprep.subr.mxu0 0.0
    %460 = vmatpush2.msra.mxu0 0.0
    %461 = vmatprep.mubr.f32.mxu0 0.0
    %462 = vmatmul.mubr.f32.gmra.mxu0 %v392
    %v463 = vpop.f32.mrf.mxu0
    %v464 = vadd.f32 %v388, %v463
    %v465 = vpop.f32.mrf.mxu0
    %466 = vdwg.mxu0
    %v467 = vld [vmem:[#allocation5] sm:$0xff]
    %v468 = vld [vmem:[#allocation5 + $0x8] sm:$0xff]
    %v469 = vld [vmem:[#allocation5 + $0x10] sm:$0xff]
    %v470 = vld [vmem:[#allocation5 + $0x18] sm:$0xff]
    %v471 = vld [vmem:[#allocation5 + $0x20] sm:$0xff]
    %v472 = vld [vmem:[#allocation5 + $0x28] sm:$0xff]
    %v473 = vld [vmem:[#allocation5 + $0x30] sm:$0xff]
    %v474 = vld [vmem:[#allocation5 + $0x38] sm:$0xff]
    %v475 = vld [vmem:[#allocation5 + $0x40] sm:$0xff]
    %v476 = vld [vmem:[#allocation5 + $0x48] sm:$0xff]
    %v477 = vld [vmem:[#allocation5 + $0x50] sm:$0xff]
    %v478 = vld [vmem:[#allocation5 + $0x58] sm:$0xff]
    %v479 = vld [vmem:[#allocation5 + $0x60] sm:$0xff]
    %v480 = vld [vmem:[#allocation5 + $0x68] sm:$0xff]
    %v481 = vld [vmem:[#allocation5 + $0x70] sm:$0xff]
    %v482 = vld [vmem:[#allocation5 + $0x78] sm:$0xff]
    %vm483 = vcmask 1043456
    %v484 = vsel %vm483, %v464, 0.0
    %v485 = vrot.slane %v484, 4
    %v486 = vadd.f32 %v484, %v485
    %v487 = vrot.slane %v486, 2
    %v488 = vadd.f32 %v486, %v487
    %v489 = vrot.slane %v488, 1
    %v490 = vadd.f32 %v488, %v489
    %491 = vmatprep.subr.mxu0 0.0
    %492 = vmatpush1.msra.mxu0 %v482
    %493 = vmatprep.subr.mxu0 0.0
    %494 = vmatpush1.msra.mxu0 %v481
    %495 = vmatprep.subr.mxu0 0.0
    %496 = vmatpush1.msra.mxu0 %v480
    %497 = vmatprep.subr.mxu0 0.0
    %498 = vmatpush1.msra.mxu0 %v479
    %499 = vmatprep.subr.mxu0 0.0
    %500 = vmatpush1.msra.mxu0 %v478
    %501 = vmatprep.subr.mxu0 0.0
    %502 = vmatpush1.msra.mxu0 %v477
    %503 = vmatprep.subr.mxu0 0.0
    %504 = vmatpush1.msra.mxu0 %v476
    %505 = vmatprep.subr.mxu0 0.0
    %506 = vmatpush1.msra.mxu0 %v475
    %507 = vmatprep.subr.mxu0 0.0
    %508 = vmatpush1.msra.mxu0 %v474
    %509 = vmatprep.subr.mxu0 0.0
    %510 = vmatpush1.msra.mxu0 %v473
    %511 = vmatprep.subr.mxu0 0.0
    %512 = vmatpush1.msra.mxu0 %v472
    %513 = vmatprep.subr.mxu0 0.0
    %514 = vmatpush1.msra.mxu0 %v471
    %515 = vmatprep.subr.mxu0 0.0
    %516 = vmatpush1.msra.mxu0 %v470
    %517 = vmatprep.subr.mxu0 0.0
    %518 = vmatpush1.msra.mxu0 %v469
    %519 = vmatprep.subr.mxu0 0.0
    %520 = vmatpush1.msra.mxu0 %v468
    %521 = vmatprep.subr.mxu0 0.0
    %522 = vmatpush1.msra.mxu0 %v467
    %523 = vmatprep.subr.mxu0 0.0
    %524 = vmatpush2.msra.mxu0 0.0
    %525 = vmatprep.subr.mxu0 0.0
    %526 = vmatpush2.msra.mxu0 0.0
    %527 = vmatprep.subr.mxu0 0.0
    %528 = vmatpush2.msra.mxu0 0.0
    %529 = vmatprep.subr.mxu0 0.0
    %530 = vmatpush2.msra.mxu0 0.0
    %531 = vmatprep.subr.mxu0 0.0
    %532 = vmatpush2.msra.mxu0 0.0
    %533 = vmatprep.subr.mxu0 0.0
    %534 = vmatpush2.msra.mxu0 0.0
    %535 = vmatprep.subr.mxu0 0.0
    %536 = vmatpush2.msra.mxu0 0.0
    %537 = vmatprep.subr.mxu0 0.0
    %538 = vmatpush2.msra.mxu0 0.0
    %539 = vmatprep.subr.mxu0 0.0
    %540 = vmatpush2.msra.mxu0 0.0
    %541 = vmatprep.subr.mxu0 0.0
    %542 = vmatpush2.msra.mxu0 0.0
    %543 = vmatprep.subr.mxu0 0.0
    %544 = vmatpush2.msra.mxu0 0.0
    %545 = vmatprep.subr.mxu0 0.0
    %546 = vmatpush2.msra.mxu0 0.0
    %547 = vmatprep.subr.mxu0 0.0
    %548 = vmatpush2.msra.mxu0 0.0
    %549 = vmatprep.subr.mxu0 0.0
    %550 = vmatpush2.msra.mxu0 0.0
    %551 = vmatprep.subr.mxu0 0.0
    %552 = vmatpush2.msra.mxu0 0.0
    %553 = vmatprep.subr.mxu0 0.0
    %554 = vmatpush2.msra.mxu0 0.0
    %555 = vmatprep.mubr.f32.mxu0 0.0
    %556 = vmatmul.mubr.f32.gmra.mxu0 %v490
    %v557 = vpop.f32.mrf.mxu0
    %v558 = vadd.f32 0.0, %v557
    %v559 = vpop.f32.mrf.mxu0
    %560 = vdwg.mxu0
    %v561 = vlaneseq
    %v562 = vshrl.u32 %v561, 7
    %v563 = vsub.s32 0, %v562
    %v564 = vrot.slane %v558, %v563
    %v565 = vsub.f32 %v464, %v564
    %v566 = vmul.f32 %v565, %v565
    %v567 = vsel %vm483, %v566, 0.0
    %v568 = vrot.slane %v567, 4
    %v569 = vadd.f32 %v567, %v568
    %v570 = vrot.slane %v569, 2
    %v571 = vadd.f32 %v569, %v570
    %v572 = vrot.slane %v571, 1
    %v573 = vadd.f32 %v571, %v572
    %v574 = vld [vmem:[%s4] sm:$0x1]
    %575 = vmatprep.subr.mxu0 0.0
    %576 = vmatpush1.msra.mxu0 %v482
    %577 = vmatprep.subr.mxu0 0.0
    %578 = vmatpush1.msra.mxu0 %v481
    %579 = vmatprep.subr.mxu0 0.0
    %580 = vmatpush1.msra.mxu0 %v480
    %581 = vmatprep.subr.mxu0 0.0
    %582 = vmatpush1.msra.mxu0 %v479
    %583 = vmatprep.subr.mxu0 0.0
    %584 = vmatpush1.msra.mxu0 %v478
    %585 = vmatprep.subr.mxu0 0.0
    %586 = vmatpush1.msra.mxu0 %v477
    %587 = vmatprep.subr.mxu0 0.0
    %588 = vmatpush1.msra.mxu0 %v476
    %589 = vmatprep.subr.mxu0 0.0
    %590 = vmatpush1.msra.mxu0 %v475
    %591 = vmatprep.subr.mxu0 0.0
    %592 = vmatpush1.msra.mxu0 %v474
    %593 = vmatprep.subr.mxu0 0.0
    %594 = vmatpush1.msra.mxu0 %v473
    %595 = vmatprep.subr.mxu0 0.0
    %596 = vmatpush1.msra.mxu0 %v472
    %597 = vmatprep.subr.mxu0 0.0
    %598 = vmatpush1.msra.mxu0 %v471
    %599 = vmatprep.subr.mxu0 0.0
    %600 = vmatpush1.msra.mxu0 %v470
    %601 = vmatprep.subr.mxu0 0.0
    %602 = vmatpush1.msra.mxu0 %v469
    %603 = vmatprep.subr.mxu0 0.0
    %604 = vmatpush1.msra.mxu0 %v468
    %605 = vmatprep.subr.mxu0 0.0
    %606 = vmatpush1.msra.mxu0 %v467
    %607 = vmatprep.subr.mxu0 0.0
    %608 = vmatpush2.msra.mxu0 0.0
    %609 = vmatprep.subr.mxu0 0.0
    %610 = vmatpush2.msra.mxu0 0.0
    %611 = vmatprep.subr.mxu0 0.0
    %612 = vmatpush2.msra.mxu0 0.0
    %613 = vmatprep.subr.mxu0 0.0
    %614 = vmatpush2.msra.mxu0 0.0
    %615 = vmatprep.subr.mxu0 0.0
    %616 = vmatpush2.msra.mxu0 0.0
    %617 = vmatprep.subr.mxu0 0.0
    %618 = vmatpush2.msra.mxu0 0.0
    %619 = vmatprep.subr.mxu0 0.0
    %620 = vmatpush2.msra.mxu0 0.0
    %621 = vmatprep.subr.mxu0 0.0
    %622 = vmatpush2.msra.mxu0 0.0
    %623 = vmatprep.subr.mxu0 0.0
    %624 = vmatpush2.msra.mxu0 0.0
    %625 = vmatprep.subr.mxu0 0.0
    %626 = vmatpush2.msra.mxu0 0.0
    %627 = vmatprep.subr.mxu0 0.0
    %628 = vmatpush2.msra.mxu0 0.0
    %629 = vmatprep.subr.mxu0 0.0
    %630 = vmatpush2.msra.mxu0 0.0
    %631 = vmatprep.subr.mxu0 0.0
    %632 = vmatpush2.msra.mxu0 0.0
    %633 = vmatprep.subr.mxu0 0.0
    %634 = vmatpush2.msra.mxu0 0.0
    %635 = vmatprep.subr.mxu0 0.0
    %636 = vmatpush2.msra.mxu0 0.0
    %637 = vmatprep.subr.mxu0 0.0
    %638 = vmatpush2.msra.mxu0 0.0
    %639 = vmatprep.mubr.f32.mxu0 0.0
    %640 = vmatmul.mubr.f32.gmra.mxu0 %v573
    %v641 = vpop.f32.mrf.mxu0
    %v642 = vadd.f32 1e-05, %v641
    %v643 = vpop.f32.mrf.mxu0
    %644 = vdwg.mxu0
    %v645 = vrsqrt.pop %v642
    %v646 = vmul.f32 %v574, %v645
    %v648 = vlaneseq
    %v649 = vshrl.u32 %v648, 7
    %v650 = vsub.s32 0, %v649
    %v651 = vrot.slane %v646, %v650
    %v653 = vmul.f32 %v565, %v651
    %v654 = vld [vmem:[%s5] sm:$0x1]
    %v656 = vlaneseq
    %v657 = vshrl.u32 %v656, 7
    %v658 = vsub.s32 0, %v657
    %v659 = vrot.slane %v654, %v658
    %v661 = vadd.f32 %v653, %v659
    %v662 = vmin.f32 %v661, 20.0
    %v663 = vmul.f32 %v662, 1.442695
    %v664 = vpow.pop %v663
    %v665 = vadd.f32 %v664, 2.0
    %v666 = vmul.f32 %v664, %v665
    %v667 = vmul.f32 %v661, %v666
    %v668 = vadd.f32 %v666, 2.0
    %v669 = vrcp.pop %v668
    %v670 = vmul.f32 %v667, %v669
    %v671 = vpack.c.bf16 %v670, %v670
    %v672 = vld [vmem:[#allocation8] sm:$0xff]
    %v673 = vld [vmem:[#allocation8 + $0x8] sm:$0xff]
    %v674 = vld [vmem:[#allocation8 + $0x10] sm:$0xff]
    %v675 = vld [vmem:[#allocation8 + $0x18] sm:$0xff]
    %v676 = vld [vmem:[#allocation8 + $0x20] sm:$0xff]
    %v677 = vld [vmem:[#allocation8 + $0x28] sm:$0xff]
    %v678 = vld [vmem:[#allocation8 + $0x30] sm:$0xff]
    %v679 = vld [vmem:[#allocation8 + $0x38] sm:$0xff]
    %v680 = vld [vmem:[#allocation8 + $0x40] sm:$0xff]
    %v681 = vld [vmem:[#allocation8 + $0x48] sm:$0xff]
    %v682 = vld [vmem:[#allocation8 + $0x50] sm:$0xff]
    %v683 = vld [vmem:[#allocation8 + $0x58] sm:$0xff]
    %v684 = vld [vmem:[#allocation8 + $0x60] sm:$0xff]
    %v685 = vld [vmem:[#allocation8 + $0x68] sm:$0xff]
    %v686 = vld [vmem:[#allocation8 + $0x70] sm:$0xff]
    %v687 = vld [vmem:[#allocation8 + $0x78] sm:$0xff]
    %v688 = vld [vmem:[#allocation8 + $0x80] sm:$0xff]
    %v689 = vld [vmem:[#allocation8 + $0x88] sm:$0xff]
    %v690 = vld [vmem:[#allocation8 + $0x90] sm:$0xff]
    %v691 = vld [vmem:[#allocation8 + $0x98] sm:$0xff]
    %v692 = vld [vmem:[#allocation8 + $0xa0] sm:$0xff]
    %v693 = vld [vmem:[#allocation8 + $0xa8] sm:$0xff]
    %v694 = vld [vmem:[#allocation8 + $0xb0] sm:$0xff]
    %v695 = vld [vmem:[#allocation8 + $0xb8] sm:$0xff]
    %v696 = vld [vmem:[#allocation8 + $0xc0] sm:$0xff]
    %v697 = vld [vmem:[#allocation8 + $0xc8] sm:$0xff]
    %v698 = vld [vmem:[#allocation8 + $0xd0] sm:$0xff]
    %v699 = vld [vmem:[#allocation8 + $0xd8] sm:$0xff]
    %v700 = vld [vmem:[#allocation8 + $0xe0] sm:$0xff]
    %v701 = vld [vmem:[#allocation8 + $0xe8] sm:$0xff]
    %v702 = vld [vmem:[#allocation8 + $0xf0] sm:$0xff]
    %v703 = vld [vmem:[#allocation8 + $0xf8] sm:$0xff]
    %v736 = vunpack.c.l.b16 %v672
    %v737 = vunpack.c.h.b16 %v672
    %v738 = vunpack.c.l.b16 %v673
    %v739 = vunpack.c.h.b16 %v673
    %v740 = vunpack.c.l.b16 %v674
    %v741 = vunpack.c.h.b16 %v674
    %v742 = vunpack.c.l.b16 %v675
    %v743 = vunpack.c.h.b16 %v675
    %v744 = vunpack.c.l.b16 %v676
    %v745 = vunpack.c.h.b16 %v676
    %v746 = vunpack.c.l.b16 %v677
    %v747 = vunpack.c.h.b16 %v677
    %v748 = vunpack.c.l.b16 %v678
    %v749 = vunpack.c.h.b16 %v678
    %v750 = vunpack.c.l.b16 %v679
    %v751 = vunpack.c.h.b16 %v679
    %v752 = vunpack.c.l.b16 %v680
    %v753 = vunpack.c.h.b16 %v680
    %v754 = vunpack.c.l.b16 %v681
    %v755 = vunpack.c.h.b16 %v681
    %v756 = vunpack.c.l.b16 %v682
    %v757 = vunpack.c.h.b16 %v682
    %v758 = vunpack.c.l.b16 %v683
    %v759 = vunpack.c.h.b16 %v683
    %v760 = vunpack.c.l.b16 %v684
    %v761 = vunpack.c.h.b16 %v684
    %v762 = vunpack.c.l.b16 %v685
    %v763 = vunpack.c.h.b16 %v685
    %v764 = vunpack.c.l.b16 %v686
    %v765 = vunpack.c.h.b16 %v686
    %v766 = vunpack.c.l.b16 %v687
    %v767 = vunpack.c.h.b16 %v687
    %v768 = vunpack.c.l.b16 %v688
    %v769 = vunpack.c.h.b16 %v688
    %v770 = vunpack.c.l.b16 %v689
    %v771 = vunpack.c.h.b16 %v689
    %v772 = vunpack.c.l.b16 %v690
    %v773 = vunpack.c.h.b16 %v690
    %v774 = vunpack.c.l.b16 %v691
    %v775 = vunpack.c.h.b16 %v691
    %v776 = vunpack.c.l.b16 %v692
    %v777 = vunpack.c.h.b16 %v692
    %v778 = vunpack.c.l.b16 %v693
    %v779 = vunpack.c.h.b16 %v693
    %v780 = vunpack.c.l.b16 %v694
    %v781 = vunpack.c.h.b16 %v694
    %v782 = vunpack.c.l.b16 %v695
    %v783 = vunpack.c.h.b16 %v695
    %v784 = vunpack.c.l.b16 %v696
    %v785 = vunpack.c.h.b16 %v696
    %v786 = vunpack.c.l.b16 %v697
    %v787 = vunpack.c.h.b16 %v697
    %v788 = vunpack.c.l.b16 %v698
    %v789 = vunpack.c.h.b16 %v698
    %v790 = vunpack.c.l.b16 %v699
    %v791 = vunpack.c.h.b16 %v699
    %v792 = vunpack.c.l.b16 %v700
    %v793 = vunpack.c.h.b16 %v700
    %v794 = vunpack.c.l.b16 %v701
    %v795 = vunpack.c.h.b16 %v701
    %v796 = vunpack.c.l.b16 %v702
    %v797 = vunpack.c.h.b16 %v702
    %v798 = vunpack.c.l.b16 %v703
    %v799 = vunpack.c.h.b16 %v703
    %v800 = vpack.c.b16 %v740, %v736
    %v801 = vpack.c.b16 %v741, %v737
    %v802 = vpack.c.b16 %v742, %v738
    %v803 = vpack.c.b16 %v743, %v739
    %v804 = vpack.c.b16 %v748, %v744
    %v805 = vpack.c.b16 %v749, %v745
    %v806 = vpack.c.b16 %v750, %v746
    %v807 = vpack.c.b16 %v751, %v747
    %v808 = vpack.c.b16 %v756, %v752
    %v809 = vpack.c.b16 %v757, %v753
    %v810 = vpack.c.b16 %v758, %v754
    %v811 = vpack.c.b16 %v759, %v755
    %v812 = vpack.c.b16 %v764, %v760
    %v813 = vpack.c.b16 %v765, %v761
    %v814 = vpack.c.b16 %v766, %v762
    %v815 = vpack.c.b16 %v767, %v763
    %v816 = vpack.c.b16 %v772, %v768
    %v817 = vpack.c.b16 %v773, %v769
    %v818 = vpack.c.b16 %v774, %v770
    %v819 = vpack.c.b16 %v775, %v771
    %v820 = vpack.c.b16 %v780, %v776
    %v821 = vpack.c.b16 %v781, %v777
    %v822 = vpack.c.b16 %v782, %v778
    %v823 = vpack.c.b16 %v783, %v779
    %v824 = vpack.c.b16 %v788, %v784
    %v825 = vpack.c.b16 %v789, %v785
    %v826 = vpack.c.b16 %v790, %v786
    %v827 = vpack.c.b16 %v791, %v787
    %v828 = vpack.c.b16 %v796, %v792
    %v829 = vpack.c.b16 %v797, %v793
    %v830 = vpack.c.b16 %v798, %v794
    %v831 = vpack.c.b16 %v799, %v795
    %864 = vmatprep.subr.bf16.mxu0 %v829
    %865 = vmatpush1.bf16.msra.mxu0 %v828
    %866 = vmatprep.subr.bf16.mxu0 %v825
    %867 = vmatpush1.bf16.msra.mxu0 %v824
    %868 = vmatprep.subr.bf16.mxu0 %v821
    %869 = vmatpush1.bf16.msra.mxu0 %v820
    %870 = vmatprep.subr.bf16.mxu0 %v817
    %871 = vmatpush1.bf16.msra.mxu0 %v816
    %872 = vmatprep.subr.bf16.mxu0 %v813
    %873 = vmatpush1.bf16.msra.mxu0 %v812
    %874 = vmatprep.subr.bf16.mxu0 %v809
    %875 = vmatpush1.bf16.msra.mxu0 %v808
    %876 = vmatprep.subr.bf16.mxu0 %v805
    %877 = vmatpush1.bf16.msra.mxu0 %v804
    %878 = vmatprep.subr.bf16.mxu0 %v801
    %879 = vmatpush1.bf16.msra.mxu0 %v800
    %880 = vmatprep.subr.bf16.mxu0 0
    %881 = vmatpush2.bf16.msra.mxu0 0
    %882 = vmatprep.subr.bf16.mxu0 0
    %883 = vmatpush2.bf16.msra.mxu0 0
    %884 = vmatprep.subr.bf16.mxu0 0
    %885 = vmatpush2.bf16.msra.mxu0 0
    %886 = vmatprep.subr.bf16.mxu0 0
    %887 = vmatpush2.bf16.msra.mxu0 0
    %888 = vmatprep.subr.bf16.mxu0 0
    %889 = vmatpush2.bf16.msra.mxu0 0
    %890 = vmatprep.subr.bf16.mxu0 0
    %891 = vmatpush2.bf16.msra.mxu0 0
    %892 = vmatprep.subr.bf16.mxu0 0
    %893 = vmatpush2.bf16.msra.mxu0 0
    %894 = vmatprep.subr.bf16.mxu0 0
    %895 = vmatpush2.bf16.msra.mxu0 0
    %896 = vmatprep.mubr.bf16.mxu0 0
    %897 = vmatmul.mubr.bf16.gmra.mxu0 %v671
    %v898 = vpop.f32.mrf.mxu0
    %v899 = vadd.f32 0.0, %v898
    %v900 = vpop.f32.mrf.mxu0
    %v901 = vadd.f32 0.0, %v900
    %v902 = vpop.f32.mrf.mxu0
    %v903 = vpop.f32.mrf.mxu0
    %904 = vdwg.mxu0
    %905 = vmatprep.subr.bf16.mxu0 %v831
    %906 = vmatpush1.bf16.msra.mxu0 %v830
    %907 = vmatprep.subr.bf16.mxu0 %v827
    %908 = vmatpush1.bf16.msra.mxu0 %v826
    %909 = vmatprep.subr.bf16.mxu0 %v823
    %910 = vmatpush1.bf16.msra.mxu0 %v822
    %911 = vmatprep.subr.bf16.mxu0 %v819
    %912 = vmatpush1.bf16.msra.mxu0 %v818
    %913 = vmatprep.subr.bf16.mxu0 %v815
    %914 = vmatpush1.bf16.msra.mxu0 %v814
    %915 = vmatprep.subr.bf16.mxu0 %v811
    %916 = vmatpush1.bf16.msra.mxu0 %v810
    %917 = vmatprep.subr.bf16.mxu0 %v807
    %918 = vmatpush1.bf16.msra.mxu0 %v806
    %919 = vmatprep.subr.bf16.mxu0 %v803
    %920 = vmatpush1.bf16.msra.mxu0 %v802
    %921 = vmatprep.subr.bf16.mxu0 0
    %922 = vmatpush2.bf16.msra.mxu0 0
    %923 = vmatprep.subr.bf16.mxu0 0
    %924 = vmatpush2.bf16.msra.mxu0 0
    %925 = vmatprep.subr.bf16.mxu0 0
    %926 = vmatpush2.bf16.msra.mxu0 0
    %927 = vmatprep.subr.bf16.mxu0 0
    %928 = vmatpush2.bf16.msra.mxu0 0
    %929 = vmatprep.subr.bf16.mxu0 0
    %930 = vmatpush2.bf16.msra.mxu0 0
    %931 = vmatprep.subr.bf16.mxu0 0
    %932 = vmatpush2.bf16.msra.mxu0 0
    %933 = vmatprep.subr.bf16.mxu0 0
    %934 = vmatpush2.bf16.msra.mxu0 0
    %935 = vmatprep.subr.bf16.mxu0 0
    %936 = vmatpush2.bf16.msra.mxu0 0
    %937 = vmatprep.mubr.bf16.mxu0 0
    %938 = vmatmul.mubr.bf16.gmra.mxu0 %v671
    %v939 = vpop.f32.mrf.mxu0
    %v940 = vadd.f32 0.0, %v939
    %v941 = vpop.f32.mrf.mxu0
    %v942 = vadd.f32 0.0, %v941
    %v943 = vpop.f32.mrf.mxu0
    %v944 = vpop.f32.mrf.mxu0
    %945 = vdwg.mxu0
    %v946 = vld [vmem:[#allocation7] sm:$0xff]
    %s947 = scalar_lea.vmem [#allocation7], 8
    %v948 = vld [vmem:[%s947] sm:$0xff]
    %vm949 = vcmask 31744
    %v951 = vsel %vm949, %v948, 0
    %v954 = vsel %vm483, %v901, 0
    %956 = vmatprep.subr.mxu0 0.0
    %957 = vmatpush1.msra.mxu0 0.0
    %958 = vmatprep.subr.mxu0 0.0
    %959 = vmatpush1.msra.mxu0 0.0
    %960 = vmatprep.subr.mxu0 0.0
    %961 = vmatpush1.msra.mxu0 0.0
    %962 = vmatprep.subr.mxu0 0.0
    %963 = vmatpush1.msra.mxu0 0.0
    %964 = vmatprep.subr.mxu0 0.0
    %965 = vmatpush1.msra.mxu0 0.0
    %966 = vmatprep.subr.mxu0 0.0
    %967 = vmatpush1.msra.mxu0 0.0
    %968 = vmatprep.subr.mxu0 0.0
    %969 = vmatpush1.msra.mxu0 0.0
    %970 = vmatprep.subr.mxu0 0.0
    %971 = vmatpush1.msra.mxu0 0.0
    %972 = vmatprep.subr.mxu0 0.0
    %973 = vmatpush1.msra.mxu0 0.0
    %974 = vmatprep.subr.mxu0 0.0
    %975 = vmatpush1.msra.mxu0 0.0
    %976 = vmatprep.subr.mxu0 0.0
    %977 = vmatpush1.msra.mxu0 0.0
    %978 = vmatprep.subr.mxu0 0.0
    %979 = vmatpush1.msra.mxu0 0.0
    %980 = vmatprep.subr.mxu0 0.0
    %981 = vmatpush1.msra.mxu0 0.0
    %982 = vmatprep.subr.mxu0 0.0
    %983 = vmatpush1.msra.mxu0 0.0
    %984 = vmatprep.subr.mxu0 0.0
    %985 = vmatpush1.msra.mxu0 0.0
    %986 = vmatprep.subr.mxu0 0.0
    %987 = vmatpush1.msra.mxu0 %v954
    %988 = vmatprep.subr.mxu0 0.0
    %989 = vmatpush2.msra.mxu0 0.0
    %990 = vmatprep.subr.mxu0 0.0
    %991 = vmatpush2.msra.mxu0 0.0
    %992 = vmatprep.subr.mxu0 0.0
    %993 = vmatpush2.msra.mxu0 0.0
    %994 = vmatprep.subr.mxu0 0.0
    %995 = vmatpush2.msra.mxu0 0.0
    %996 = vmatprep.subr.mxu0 0.0
    %997 = vmatpush2.msra.mxu0 0.0
    %998 = vmatprep.subr.mxu0 0.0
    %999 = vmatpush2.msra.mxu0 0.0
    %1000 = vmatprep.subr.mxu0 0.0
    %1001 = vmatpush2.msra.mxu0 0.0
    %1002 = vmatprep.subr.mxu0 0.0
    %1003 = vmatpush2.msra.mxu0 0.0
    %1004 = vmatprep.subr.mxu0 0.0
    %1005 = vmatpush2.msra.mxu0 0.0
    %1006 = vmatprep.subr.mxu0 0.0
    %1007 = vmatpush2.msra.mxu0 0.0
    %1008 = vmatprep.subr.mxu0 0.0
    %1009 = vmatpush2.msra.mxu0 0.0
    %1010 = vmatprep.subr.mxu0 0.0
    %1011 = vmatpush2.msra.mxu0 0.0
    %1012 = vmatprep.subr.mxu0 0.0
    %1013 = vmatpush2.msra.mxu0 0.0
    %1014 = vmatprep.subr.mxu0 0.0
    %1015 = vmatpush2.msra.mxu0 0.0
    %1016 = vmatprep.subr.mxu0 0.0
    %1017 = vmatpush2.msra.mxu0 0.0
    %1018 = vmatprep.subr.mxu0 0.0
    %1019 = vmatpush2.msra.mxu0 0.0
    %1020 = vmatprep.mubr.f32.mxu0 0.0
    %1021 = vmatmul.mubr.f32.gmra.mxu0 %v951
    %v1022 = vpop.f32.mrf.mxu0
    %v1023 = vadd.f32 0.0, %v1022
    %v1024 = vpop.f32.mrf.mxu0
    %1025 = vdwg.mxu0
    %v1027 = vsel %vm949, %v946, 0
    %v1030 = vsel %vm483, %v899, 0
    %1032 = vmatprep.subr.mxu0 0.0
    %1033 = vmatpush1.msra.mxu0 0.0
    %1034 = vmatprep.subr.mxu0 0.0
    %1035 = vmatpush1.msra.mxu0 0.0
    %1036 = vmatprep.subr.mxu0 0.0
    %1037 = vmatpush1.msra.mxu0 0.0
    %1038 = vmatprep.subr.mxu0 0.0
    %1039 = vmatpush1.msra.mxu0 0.0
    %1040 = vmatprep.subr.mxu0 0.0
    %1041 = vmatpush1.msra.mxu0 0.0
    %1042 = vmatprep.subr.mxu0 0.0
    %1043 = vmatpush1.msra.mxu0 0.0
    %1044 = vmatprep.subr.mxu0 0.0
    %1045 = vmatpush1.msra.mxu0 0.0
    %1046 = vmatprep.subr.mxu0 0.0
    %1047 = vmatpush1.msra.mxu0 0.0
    %1048 = vmatprep.subr.mxu0 0.0
    %1049 = vmatpush1.msra.mxu0 0.0
    %1050 = vmatprep.subr.mxu0 0.0
    %1051 = vmatpush1.msra.mxu0 0.0
    %1052 = vmatprep.subr.mxu0 0.0
    %1053 = vmatpush1.msra.mxu0 0.0
    %1054 = vmatprep.subr.mxu0 0.0
    %1055 = vmatpush1.msra.mxu0 0.0
    %1056 = vmatprep.subr.mxu0 0.0
    %1057 = vmatpush1.msra.mxu0 0.0
    %1058 = vmatprep.subr.mxu0 0.0
    %1059 = vmatpush1.msra.mxu0 0.0
    %1060 = vmatprep.subr.mxu0 0.0
    %1061 = vmatpush1.msra.mxu0 0.0
    %1062 = vmatprep.subr.mxu0 0.0
    %1063 = vmatpush1.msra.mxu0 %v1030
    %1064 = vmatprep.subr.mxu0 0.0
    %1065 = vmatpush2.msra.mxu0 0.0
    %1066 = vmatprep.subr.mxu0 0.0
    %1067 = vmatpush2.msra.mxu0 0.0
    %1068 = vmatprep.subr.mxu0 0.0
    %1069 = vmatpush2.msra.mxu0 0.0
    %1070 = vmatprep.subr.mxu0 0.0
    %1071 = vmatpush2.msra.mxu0 0.0
    %1072 = vmatprep.subr.mxu0 0.0
    %1073 = vmatpush2.msra.mxu0 0.0
    %1074 = vmatprep.subr.mxu0 0.0
    %1075 = vmatpush2.msra.mxu0 0.0
    %1076 = vmatprep.subr.mxu0 0.0
    %1077 = vmatpush2.msra.mxu0 0.0
    %1078 = vmatprep.subr.mxu0 0.0
    %1079 = vmatpush2.msra.mxu0 0.0
    %1080 = vmatprep.subr.mxu0 0.0
    %1081 = vmatpush2.msra.mxu0 0.0
    %1082 = vmatprep.subr.mxu0 0.0
    %1083 = vmatpush2.msra.mxu0 0.0
    %1084 = vmatprep.subr.mxu0 0.0
    %1085 = vmatpush2.msra.mxu0 0.0
    %1086 = vmatprep.subr.mxu0 0.0
    %1087 = vmatpush2.msra.mxu0 0.0
    %1088 = vmatprep.subr.mxu0 0.0
    %1089 = vmatpush2.msra.mxu0 0.0
    %1090 = vmatprep.subr.mxu0 0.0
    %1091 = vmatpush2.msra.mxu0 0.0
    %1092 = vmatprep.subr.mxu0 0.0
    %1093 = vmatpush2.msra.mxu0 0.0
    %1094 = vmatprep.subr.mxu0 0.0
    %1095 = vmatpush2.msra.mxu0 0.0
    %1096 = vmatprep.mubr.f32.mxu0 0.0
    %1097 = vmatmul.mubr.f32.gmra.mxu0 %v1027
    %v1098 = vpop.f32.mrf.mxu0
    %v1099 = vadd.f32 %v1023, %v1098
    %v1100 = vpop.f32.mrf.mxu0
    %1101 = vdwg.mxu0
    %s1102 = scalar_lea.vmem [#allocation7], 16
    %v1103 = vld [vmem:[%s1102] sm:$0xff]
    %v1105 = vsel %vm949, %v1103, 0
    %v1108 = vsel %vm483, %v940, 0
    %1110 = vmatprep.subr.mxu0 0.0
    %1111 = vmatpush1.msra.mxu0 0.0
    %1112 = vmatprep.subr.mxu0 0.0
    %1113 = vmatpush1.msra.mxu0 0.0
    %1114 = vmatprep.subr.mxu0 0.0
    %1115 = vmatpush1.msra.mxu0 0.0
    %1116 = vmatprep.subr.mxu0 0.0
    %1117 = vmatpush1.msra.mxu0 0.0
    %1118 = vmatprep.subr.mxu0 0.0
    %1119 = vmatpush1.msra.mxu0 0.0
    %1120 = vmatprep.subr.mxu0 0.0
    %1121 = vmatpush1.msra.mxu0 0.0
    %1122 = vmatprep.subr.mxu0 0.0
    %1123 = vmatpush1.msra.mxu0 0.0
    %1124 = vmatprep.subr.mxu0 0.0
    %1125 = vmatpush1.msra.mxu0 0.0
    %1126 = vmatprep.subr.mxu0 0.0
    %1127 = vmatpush1.msra.mxu0 0.0
    %1128 = vmatprep.subr.mxu0 0.0
    %1129 = vmatpush1.msra.mxu0 0.0
    %1130 = vmatprep.subr.mxu0 0.0
    %1131 = vmatpush1.msra.mxu0 0.0
    %1132 = vmatprep.subr.mxu0 0.0
    %1133 = vmatpush1.msra.mxu0 0.0
    %1134 = vmatprep.subr.mxu0 0.0
    %1135 = vmatpush1.msra.mxu0 0.0
    %1136 = vmatprep.subr.mxu0 0.0
    %1137 = vmatpush1.msra.mxu0 0.0
    %1138 = vmatprep.subr.mxu0 0.0
    %1139 = vmatpush1.msra.mxu0 0.0
    %1140 = vmatprep.subr.mxu0 0.0
    %1141 = vmatpush1.msra.mxu0 %v1108
    %1142 = vmatprep.subr.mxu0 0.0
    %1143 = vmatpush2.msra.mxu0 0.0
    %1144 = vmatprep.subr.mxu0 0.0
    %1145 = vmatpush2.msra.mxu0 0.0
    %1146 = vmatprep.subr.mxu0 0.0
    %1147 = vmatpush2.msra.mxu0 0.0
    %1148 = vmatprep.subr.mxu0 0.0
    %1149 = vmatpush2.msra.mxu0 0.0
    %1150 = vmatprep.subr.mxu0 0.0
    %1151 = vmatpush2.msra.mxu0 0.0
    %1152 = vmatprep.subr.mxu0 0.0
    %1153 = vmatpush2.msra.mxu0 0.0
    %1154 = vmatprep.subr.mxu0 0.0
    %1155 = vmatpush2.msra.mxu0 0.0
    %1156 = vmatprep.subr.mxu0 0.0
    %1157 = vmatpush2.msra.mxu0 0.0
    %1158 = vmatprep.subr.mxu0 0.0
    %1159 = vmatpush2.msra.mxu0 0.0
    %1160 = vmatprep.subr.mxu0 0.0
    %1161 = vmatpush2.msra.mxu0 0.0
    %1162 = vmatprep.subr.mxu0 0.0
    %1163 = vmatpush2.msra.mxu0 0.0
    %1164 = vmatprep.subr.mxu0 0.0
    %1165 = vmatpush2.msra.mxu0 0.0
    %1166 = vmatprep.subr.mxu0 0.0
    %1167 = vmatpush2.msra.mxu0 0.0
    %1168 = vmatprep.subr.mxu0 0.0
    %1169 = vmatpush2.msra.mxu0 0.0
    %1170 = vmatprep.subr.mxu0 0.0
    %1171 = vmatpush2.msra.mxu0 0.0
    %1172 = vmatprep.subr.mxu0 0.0
    %1173 = vmatpush2.msra.mxu0 0.0
    %1174 = vmatprep.mubr.f32.mxu0 0.0
    %1175 = vmatmul.mubr.f32.gmra.mxu0 %v1105
    %v1176 = vpop.f32.mrf.mxu0
    %v1177 = vadd.f32 0.0, %v1176
    %v1178 = vpop.f32.mrf.mxu0
    %1179 = vdwg.mxu0
    %v1180 = vadd.f32 %v1099, %v1177
    %s1181 = scalar_lea.vmem [#allocation7], 24
    %v1182 = vld [vmem:[%s1181] sm:$0xff]
    %v1184 = vsel %vm949, %v1182, 0
    %v1187 = vsel %vm483, %v942, 0
    %1189 = vmatprep.subr.mxu0 0.0
    %1190 = vmatpush1.msra.mxu0 0.0
    %1191 = vmatprep.subr.mxu0 0.0
    %1192 = vmatpush1.msra.mxu0 0.0
    %1193 = vmatprep.subr.mxu0 0.0
    %1194 = vmatpush1.msra.mxu0 0.0
    %1195 = vmatprep.subr.mxu0 0.0
    %1196 = vmatpush1.msra.mxu0 0.0
    %1197 = vmatprep.subr.mxu0 0.0
    %1198 = vmatpush1.msra.mxu0 0.0
    %1199 = vmatprep.subr.mxu0 0.0
    %1200 = vmatpush1.msra.mxu0 0.0
    %1201 = vmatprep.subr.mxu0 0.0
    %1202 = vmatpush1.msra.mxu0 0.0
    %1203 = vmatprep.subr.mxu0 0.0
    %1204 = vmatpush1.msra.mxu0 0.0
    %1205 = vmatprep.subr.mxu0 0.0
    %1206 = vmatpush1.msra.mxu0 0.0
    %1207 = vmatprep.subr.mxu0 0.0
    %1208 = vmatpush1.msra.mxu0 0.0
    %1209 = vmatprep.subr.mxu0 0.0
    %1210 = vmatpush1.msra.mxu0 0.0
    %1211 = vmatprep.subr.mxu0 0.0
    %1212 = vmatpush1.msra.mxu0 0.0
    %1213 = vmatprep.subr.mxu0 0.0
    %1214 = vmatpush1.msra.mxu0 0.0
    %1215 = vmatprep.subr.mxu0 0.0
    %1216 = vmatpush1.msra.mxu0 0.0
    %1217 = vmatprep.subr.mxu0 0.0
    %1218 = vmatpush1.msra.mxu0 0.0
    %1219 = vmatprep.subr.mxu0 0.0
    %1220 = vmatpush1.msra.mxu0 %v1187
    %1221 = vmatprep.subr.mxu0 0.0
    %1222 = vmatpush2.msra.mxu0 0.0
    %1223 = vmatprep.subr.mxu0 0.0
    %1224 = vmatpush2.msra.mxu0 0.0
    %1225 = vmatprep.subr.mxu0 0.0
    %1226 = vmatpush2.msra.mxu0 0.0
    %1227 = vmatprep.subr.mxu0 0.0
    %1228 = vmatpush2.msra.mxu0 0.0
    %1229 = vmatprep.subr.mxu0 0.0
    %1230 = vmatpush2.msra.mxu0 0.0
    %1231 = vmatprep.subr.mxu0 0.0
    %1232 = vmatpush2.msra.mxu0 0.0
    %1233 = vmatprep.subr.mxu0 0.0
    %1234 = vmatpush2.msra.mxu0 0.0
    %1235 = vmatprep.subr.mxu0 0.0
    %1236 = vmatpush2.msra.mxu0 0.0
    %1237 = vmatprep.subr.mxu0 0.0
    %1238 = vmatpush2.msra.mxu0 0.0
    %1239 = vmatprep.subr.mxu0 0.0
    %1240 = vmatpush2.msra.mxu0 0.0
    %1241 = vmatprep.subr.mxu0 0.0
    %1242 = vmatpush2.msra.mxu0 0.0
    %1243 = vmatprep.subr.mxu0 0.0
    %1244 = vmatpush2.msra.mxu0 0.0
    %1245 = vmatprep.subr.mxu0 0.0
    %1246 = vmatpush2.msra.mxu0 0.0
    %1247 = vmatprep.subr.mxu0 0.0
    %1248 = vmatpush2.msra.mxu0 0.0
    %1249 = vmatprep.subr.mxu0 0.0
    %1250 = vmatpush2.msra.mxu0 0.0
    %1251 = vmatprep.subr.mxu0 0.0
    %1252 = vmatpush2.msra.mxu0 0.0
    %1253 = vmatprep.mubr.f32.mxu0 0.0
    %1254 = vmatmul.mubr.f32.gmra.mxu0 %v1184
    %v1255 = vpop.f32.mrf.mxu0
    %v1256 = vadd.f32 0.0, %v1255
    %v1257 = vpop.f32.mrf.mxu0
    %1258 = vdwg.mxu0
    %v1259 = vadd.f32 %v1180, %v1256
    %v1260 = vld [vmem:[#allocation10] sm:$0xff]
    %v1261 = vld [vmem:[#allocation10 + $0x8] sm:$0xff]
    %v1262 = vld [vmem:[#allocation10 + $0x10] sm:$0xff]
    %v1263 = vld [vmem:[#allocation10 + $0x18] sm:$0xff]
    %v1264 = vld [vmem:[#allocation10 + $0x20] sm:$0xff]
    %v1265 = vld [vmem:[#allocation10 + $0x28] sm:$0xff]
    %v1266 = vld [vmem:[#allocation10 + $0x30] sm:$0xff]
    %v1267 = vld [vmem:[#allocation10 + $0x38] sm:$0xff]
    %v1268 = vld [vmem:[#allocation10 + $0x40] sm:$0xff]
    %v1269 = vld [vmem:[#allocation10 + $0x48] sm:$0xff]
    %v1270 = vld [vmem:[#allocation10 + $0x50] sm:$0xff]
    %v1271 = vld [vmem:[#allocation10 + $0x58] sm:$0xff]
    %v1272 = vld [vmem:[#allocation10 + $0x60] sm:$0xff]
    %v1273 = vld [vmem:[#allocation10 + $0x68] sm:$0xff]
    %v1274 = vld [vmem:[#allocation10 + $0x70] sm:$0xff]
    %v1275 = vld [vmem:[#allocation10 + $0x78] sm:$0xff]
    %v1276 = vrot.slane %v1259, 4
    %v1277 = vadd.f32 %v1259, %v1276
    %v1278 = vrot.slane %v1277, 2
    %v1279 = vadd.f32 %v1277, %v1278
    %v1280 = vrot.slane %v1279, 1
    %v1281 = vadd.f32 %v1279, %v1280
    %1282 = vmatprep.subr.mxu0 0.0
    %1283 = vmatpush1.msra.mxu0 %v1275
    %1284 = vmatprep.subr.mxu0 0.0
    %1285 = vmatpush1.msra.mxu0 %v1274
    %1286 = vmatprep.subr.mxu0 0.0
    %1287 = vmatpush1.msra.mxu0 %v1273
    %1288 = vmatprep.subr.mxu0 0.0
    %1289 = vmatpush1.msra.mxu0 %v1272
    %1290 = vmatprep.subr.mxu0 0.0
    %1291 = vmatpush1.msra.mxu0 %v1271
    %1292 = vmatprep.subr.mxu0 0.0
    %1293 = vmatpush1.msra.mxu0 %v1270
    %1294 = vmatprep.subr.mxu0 0.0
    %1295 = vmatpush1.msra.mxu0 %v1269
    %1296 = vmatprep.subr.mxu0 0.0
    %1297 = vmatpush1.msra.mxu0 %v1268
    %1298 = vmatprep.subr.mxu0 0.0
    %1299 = vmatpush1.msra.mxu0 %v1267
    %1300 = vmatprep.subr.mxu0 0.0
    %1301 = vmatpush1.msra.mxu0 %v1266
    %1302 = vmatprep.subr.mxu0 0.0
    %1303 = vmatpush1.msra.mxu0 %v1265
    %1304 = vmatprep.subr.mxu0 0.0
    %1305 = vmatpush1.msra.mxu0 %v1264
    %1306 = vmatprep.subr.mxu0 0.0
    %1307 = vmatpush1.msra.mxu0 %v1263
    %1308 = vmatprep.subr.mxu0 0.0
    %1309 = vmatpush1.msra.mxu0 %v1262
    %1310 = vmatprep.subr.mxu0 0.0
    %1311 = vmatpush1.msra.mxu0 %v1261
    %1312 = vmatprep.subr.mxu0 0.0
    %1313 = vmatpush1.msra.mxu0 %v1260
    %1314 = vmatprep.subr.mxu0 0.0
    %1315 = vmatpush2.msra.mxu0 0.0
    %1316 = vmatprep.subr.mxu0 0.0
    %1317 = vmatpush2.msra.mxu0 0.0
    %1318 = vmatprep.subr.mxu0 0.0
    %1319 = vmatpush2.msra.mxu0 0.0
    %1320 = vmatprep.subr.mxu0 0.0
    %1321 = vmatpush2.msra.mxu0 0.0
    %1322 = vmatprep.subr.mxu0 0.0
    %1323 = vmatpush2.msra.mxu0 0.0
    %1324 = vmatprep.subr.mxu0 0.0
    %1325 = vmatpush2.msra.mxu0 0.0
    %1326 = vmatprep.subr.mxu0 0.0
    %1327 = vmatpush2.msra.mxu0 0.0
    %1328 = vmatprep.subr.mxu0 0.0
    %1329 = vmatpush2.msra.mxu0 0.0
    %1330 = vmatprep.subr.mxu0 0.0
    %1331 = vmatpush2.msra.mxu0 0.0
    %1332 = vmatprep.subr.mxu0 0.0
    %1333 = vmatpush2.msra.mxu0 0.0
    %1334 = vmatprep.subr.mxu0 0.0
    %1335 = vmatpush2.msra.mxu0 0.0
    %1336 = vmatprep.subr.mxu0 0.0
    %1337 = vmatpush2.msra.mxu0 0.0
    %1338 = vmatprep.subr.mxu0 0.0
    %1339 = vmatpush2.msra.mxu0 0.0
    %1340 = vmatprep.subr.mxu0 0.0
    %1341 = vmatpush2.msra.mxu0 0.0
    %1342 = vmatprep.subr.mxu0 0.0
    %1343 = vmatpush2.msra.mxu0 0.0
    %1344 = vmatprep.subr.mxu0 0.0
    %1345 = vmatpush2.msra.mxu0 0.0
    %1346 = vmatprep.mubr.f32.mxu0 0.0
    %1347 = vmatmul.mubr.f32.gmra.mxu0 %v1281
    %v1348 = vpop.f32.mrf.mxu0
    %v1349 = vadd.f32 0.0, %v1348
    %v1350 = vpop.f32.mrf.mxu0
    %1351 = vdwg.mxu0
    %v1352 = vlaneseq
    %v1353 = vshrl.u32 %v1352, 7
    %v1354 = vsub.s32 0, %v1353
    %v1355 = vrot.slane %v1349, %v1354
    %v1356 = vsub.f32 %v1259, %v1355
    %v1357 = vmul.f32 %v1356, %v1356
    %v1358 = vrot.slane %v1357, 4
    %v1359 = vadd.f32 %v1357, %v1358
    %v1360 = vrot.slane %v1359, 2
    %v1361 = vadd.f32 %v1359, %v1360
    %v1362 = vrot.slane %v1361, 1
    %v1363 = vadd.f32 %v1361, %v1362
    %v1364 = vld [vmem:[%s9] sm:$0x1]
    %1365 = vmatprep.subr.mxu0 0.0
    %1366 = vmatpush1.msra.mxu0 %v1275
    %1367 = vmatprep.subr.mxu0 0.0
    %1368 = vmatpush1.msra.mxu0 %v1274
    %1369 = vmatprep.subr.mxu0 0.0
    %1370 = vmatpush1.msra.mxu0 %v1273
    %1371 = vmatprep.subr.mxu0 0.0
    %1372 = vmatpush1.msra.mxu0 %v1272
    %1373 = vmatprep.subr.mxu0 0.0
    %1374 = vmatpush1.msra.mxu0 %v1271
    %1375 = vmatprep.subr.mxu0 0.0
    %1376 = vmatpush1.msra.mxu0 %v1270
    %1377 = vmatprep.subr.mxu0 0.0
    %1378 = vmatpush1.msra.mxu0 %v1269
    %1379 = vmatprep.subr.mxu0 0.0
    %1380 = vmatpush1.msra.mxu0 %v1268
    %1381 = vmatprep.subr.mxu0 0.0
    %1382 = vmatpush1.msra.mxu0 %v1267
    %1383 = vmatprep.subr.mxu0 0.0
    %1384 = vmatpush1.msra.mxu0 %v1266
    %1385 = vmatprep.subr.mxu0 0.0
    %1386 = vmatpush1.msra.mxu0 %v1265
    %1387 = vmatprep.subr.mxu0 0.0
    %1388 = vmatpush1.msra.mxu0 %v1264
    %1389 = vmatprep.subr.mxu0 0.0
    %1390 = vmatpush1.msra.mxu0 %v1263
    %1391 = vmatprep.subr.mxu0 0.0
    %1392 = vmatpush1.msra.mxu0 %v1262
    %1393 = vmatprep.subr.mxu0 0.0
    %1394 = vmatpush1.msra.mxu0 %v1261
    %1395 = vmatprep.subr.mxu0 0.0
    %1396 = vmatpush1.msra.mxu0 %v1260
    %1397 = vmatprep.subr.mxu0 0.0
    %1398 = vmatpush2.msra.mxu0 0.0
    %1399 = vmatprep.subr.mxu0 0.0
    %1400 = vmatpush2.msra.mxu0 0.0
    %1401 = vmatprep.subr.mxu0 0.0
    %1402 = vmatpush2.msra.mxu0 0.0
    %1403 = vmatprep.subr.mxu0 0.0
    %1404 = vmatpush2.msra.mxu0 0.0
    %1405 = vmatprep.subr.mxu0 0.0
    %1406 = vmatpush2.msra.mxu0 0.0
    %1407 = vmatprep.subr.mxu0 0.0
    %1408 = vmatpush2.msra.mxu0 0.0
    %1409 = vmatprep.subr.mxu0 0.0
    %1410 = vmatpush2.msra.mxu0 0.0
    %1411 = vmatprep.subr.mxu0 0.0
    %1412 = vmatpush2.msra.mxu0 0.0
    %1413 = vmatprep.subr.mxu0 0.0
    %1414 = vmatpush2.msra.mxu0 0.0
    %1415 = vmatprep.subr.mxu0 0.0
    %1416 = vmatpush2.msra.mxu0 0.0
    %1417 = vmatprep.subr.mxu0 0.0
    %1418 = vmatpush2.msra.mxu0 0.0
    %1419 = vmatprep.subr.mxu0 0.0
    %1420 = vmatpush2.msra.mxu0 0.0
    %1421 = vmatprep.subr.mxu0 0.0
    %1422 = vmatpush2.msra.mxu0 0.0
    %1423 = vmatprep.subr.mxu0 0.0
    %1424 = vmatpush2.msra.mxu0 0.0
    %1425 = vmatprep.subr.mxu0 0.0
    %1426 = vmatpush2.msra.mxu0 0.0
    %1427 = vmatprep.subr.mxu0 0.0
    %1428 = vmatpush2.msra.mxu0 0.0
    %1429 = vmatprep.mubr.f32.mxu0 0.0
    %1430 = vmatmul.mubr.f32.gmra.mxu0 %v1363
    %v1431 = vpop.f32.mrf.mxu0
    %v1432 = vadd.f32 1e-05, %v1431
    %v1433 = vpop.f32.mrf.mxu0
    %1434 = vdwg.mxu0
    %v1435 = vrsqrt.pop %v1432
    %v1436 = vmul.f32 %v1364, %v1435
    %v1438 = vlaneseq
    %v1439 = vshrl.u32 %v1438, 7
    %v1440 = vsub.s32 0, %v1439
    %v1441 = vrot.slane %v1436, %v1440
    %v1443 = vmul.f32 %v1356, %v1441
    %v1444 = vld [vmem:[%s10] sm:$0x1]
    %v1446 = vlaneseq
    %v1447 = vshrl.u32 %v1446, 7
    %v1448 = vsub.s32 0, %v1447
    %v1449 = vrot.slane %v1444, %v1448
    %v1451 = vadd.f32 %v1443, %v1449
    %v1452 = vmin.f32 %v1451, 20.0
    %v1453 = vmul.f32 %v1452, 1.442695
    %v1454 = vpow.pop %v1453
    %v1455 = vadd.f32 %v1454, 2.0
    %v1456 = vmul.f32 %v1454, %v1455
    %v1457 = vmul.f32 %v1451, %v1456
    %v1458 = vadd.f32 %v1456, 2.0
    %v1459 = vrcp.pop %v1458
    %v1460 = vmul.f32 %v1457, %v1459
    %v1461 = vpack.c.bf16 %v1460, %v1460
    %v1462 = vld [vmem:[#allocation13] sm:$0xff]
    %v1463 = vld [vmem:[#allocation13 + $0x8] sm:$0xff]
    %v1464 = vld [vmem:[#allocation13 + $0x10] sm:$0xff]
    %v1465 = vld [vmem:[#allocation13 + $0x18] sm:$0xff]
    %v1466 = vld [vmem:[#allocation13 + $0x20] sm:$0xff]
    %v1467 = vld [vmem:[#allocation13 + $0x28] sm:$0xff]
    %v1468 = vld [vmem:[#allocation13 + $0x30] sm:$0xff]
    %v1469 = vld [vmem:[#allocation13 + $0x38] sm:$0xff]
    %v1470 = vld [vmem:[#allocation13 + $0x40] sm:$0xff]
    %v1471 = vld [vmem:[#allocation13 + $0x48] sm:$0xff]
    %v1472 = vld [vmem:[#allocation13 + $0x50] sm:$0xff]
    %v1473 = vld [vmem:[#allocation13 + $0x58] sm:$0xff]
    %v1474 = vld [vmem:[#allocation13 + $0x60] sm:$0xff]
    %v1475 = vld [vmem:[#allocation13 + $0x68] sm:$0xff]
    %v1476 = vld [vmem:[#allocation13 + $0x70] sm:$0xff]
    %v1477 = vld [vmem:[#allocation13 + $0x78] sm:$0xff]
    %v1478 = vld [vmem:[#allocation13 + $0x80] sm:$0xff]
    %v1479 = vld [vmem:[#allocation13 + $0x88] sm:$0xff]
    %v1480 = vld [vmem:[#allocation13 + $0x90] sm:$0xff]
    %v1481 = vld [vmem:[#allocation13 + $0x98] sm:$0xff]
    %v1482 = vld [vmem:[#allocation13 + $0xa0] sm:$0xff]
    %v1483 = vld [vmem:[#allocation13 + $0xa8] sm:$0xff]
    %v1484 = vld [vmem:[#allocation13 + $0xb0] sm:$0xff]
    %v1485 = vld [vmem:[#allocation13 + $0xb8] sm:$0xff]
    %v1486 = vld [vmem:[#allocation13 + $0xc0] sm:$0xff]
    %v1487 = vld [vmem:[#allocation13 + $0xc8] sm:$0xff]
    %v1488 = vld [vmem:[#allocation13 + $0xd0] sm:$0xff]
    %v1489 = vld [vmem:[#allocation13 + $0xd8] sm:$0xff]
    %v1490 = vld [vmem:[#allocation13 + $0xe0] sm:$0xff]
    %v1491 = vld [vmem:[#allocation13 + $0xe8] sm:$0xff]
    %v1492 = vld [vmem:[#allocation13 + $0xf0] sm:$0xff]
    %v1493 = vld [vmem:[#allocation13 + $0xf8] sm:$0xff]
    %v1526 = vunpack.c.l.b16 %v1462
    %v1527 = vunpack.c.h.b16 %v1462
    %v1528 = vunpack.c.l.b16 %v1463
    %v1529 = vunpack.c.h.b16 %v1463
    %v1530 = vunpack.c.l.b16 %v1464
    %v1531 = vunpack.c.h.b16 %v1464
    %v1532 = vunpack.c.l.b16 %v1465
    %v1533 = vunpack.c.h.b16 %v1465
    %v1534 = vunpack.c.l.b16 %v1466
    %v1535 = vunpack.c.h.b16 %v1466
    %v1536 = vunpack.c.l.b16 %v1467
    %v1537 = vunpack.c.h.b16 %v1467
    %v1538 = vunpack.c.l.b16 %v1468
    %v1539 = vunpack.c.h.b16 %v1468
    %v1540 = vunpack.c.l.b16 %v1469
    %v1541 = vunpack.c.h.b16 %v1469
    %v1542 = vunpack.c.l.b16 %v1470
    %v1543 = vunpack.c.h.b16 %v1470
    %v1544 = vunpack.c.l.b16 %v1471
    %v1545 = vunpack.c.h.b16 %v1471
    %v1546 = vunpack.c.l.b16 %v1472
    %v1547 = vunpack.c.h.b16 %v1472
    %v1548 = vunpack.c.l.b16 %v1473
    %v1549 = vunpack.c.h.b16 %v1473
    %v1550 = vunpack.c.l.b16 %v1474
    %v1551 = vunpack.c.h.b16 %v1474
    %v1552 = vunpack.c.l.b16 %v1475
    %v1553 = vunpack.c.h.b16 %v1475
    %v1554 = vunpack.c.l.b16 %v1476
    %v1555 = vunpack.c.h.b16 %v1476
    %v1556 = vunpack.c.l.b16 %v1477
    %v1557 = vunpack.c.h.b16 %v1477
    %v1558 = vunpack.c.l.b16 %v1478
    %v1559 = vunpack.c.h.b16 %v1478
    %v1560 = vunpack.c.l.b16 %v1479
    %v1561 = vunpack.c.h.b16 %v1479
    %v1562 = vunpack.c.l.b16 %v1480
    %v1563 = vunpack.c.h.b16 %v1480
    %v1564 = vunpack.c.l.b16 %v1481
    %v1565 = vunpack.c.h.b16 %v1481
    %v1566 = vunpack.c.l.b16 %v1482
    %v1567 = vunpack.c.h.b16 %v1482
    %v1568 = vunpack.c.l.b16 %v1483
    %v1569 = vunpack.c.h.b16 %v1483
    %v1570 = vunpack.c.l.b16 %v1484
    %v1571 = vunpack.c.h.b16 %v1484
    %v1572 = vunpack.c.l.b16 %v1485
    %v1573 = vunpack.c.h.b16 %v1485
    %v1574 = vunpack.c.l.b16 %v1486
    %v1575 = vunpack.c.h.b16 %v1486
    %v1576 = vunpack.c.l.b16 %v1487
    %v1577 = vunpack.c.h.b16 %v1487
    %v1578 = vunpack.c.l.b16 %v1488
    %v1579 = vunpack.c.h.b16 %v1488
    %v1580 = vunpack.c.l.b16 %v1489
    %v1581 = vunpack.c.h.b16 %v1489
    %v1582 = vunpack.c.l.b16 %v1490
    %v1583 = vunpack.c.h.b16 %v1490
    %v1584 = vunpack.c.l.b16 %v1491
    %v1585 = vunpack.c.h.b16 %v1491
    %v1586 = vunpack.c.l.b16 %v1492
    %v1587 = vunpack.c.h.b16 %v1492
    %v1588 = vunpack.c.l.b16 %v1493
    %v1589 = vunpack.c.h.b16 %v1493
    %v1590 = vpack.c.b16 %v1530, %v1526
    %v1591 = vpack.c.b16 %v1531, %v1527
    %v1592 = vpack.c.b16 %v1532, %v1528
    %v1593 = vpack.c.b16 %v1533, %v1529
    %v1594 = vpack.c.b16 %v1538, %v1534
    %v1595 = vpack.c.b16 %v1539, %v1535
    %v1596 = vpack.c.b16 %v1540, %v1536
    %v1597 = vpack.c.b16 %v1541, %v1537
    %v1598 = vpack.c.b16 %v1546, %v1542
    %v1599 = vpack.c.b16 %v1547, %v1543
    %v1600 = vpack.c.b16 %v1548, %v1544
    %v1601 = vpack.c.b16 %v1549, %v1545
    %v1602 = vpack.c.b16 %v1554, %v1550
    %v1603 = vpack.c.b16 %v1555, %v1551
    %v1604 = vpack.c.b16 %v1556, %v1552
    %v1605 = vpack.c.b16 %v1557, %v1553
    %v1606 = vpack.c.b16 %v1562, %v1558
    %v1607 = vpack.c.b16 %v1563, %v1559
    %v1608 = vpack.c.b16 %v1564, %v1560
    %v1609 = vpack.c.b16 %v1565, %v1561
    %v1610 = vpack.c.b16 %v1570, %v1566
    %v1611 = vpack.c.b16 %v1571, %v1567
    %v1612 = vpack.c.b16 %v1572, %v1568
    %v1613 = vpack.c.b16 %v1573, %v1569
    %v1614 = vpack.c.b16 %v1578, %v1574
    %v1615 = vpack.c.b16 %v1579, %v1575
    %v1616 = vpack.c.b16 %v1580, %v1576
    %v1617 = vpack.c.b16 %v1581, %v1577
    %v1618 = vpack.c.b16 %v1586, %v1582
    %v1619 = vpack.c.b16 %v1587, %v1583
    %v1620 = vpack.c.b16 %v1588, %v1584
    %v1621 = vpack.c.b16 %v1589, %v1585
    %1654 = vmatprep.subr.bf16.mxu0 %v1619
    %1655 = vmatpush1.bf16.msra.mxu0 %v1618
    %1656 = vmatprep.subr.bf16.mxu0 %v1615
    %1657 = vmatpush1.bf16.msra.mxu0 %v1614
    %1658 = vmatprep.subr.bf16.mxu0 %v1611
    %1659 = vmatpush1.bf16.msra.mxu0 %v1610
    %1660 = vmatprep.subr.bf16.mxu0 %v1607
    %1661 = vmatpush1.bf16.msra.mxu0 %v1606
    %1662 = vmatprep.subr.bf16.mxu0 %v1603
    %1663 = vmatpush1.bf16.msra.mxu0 %v1602
    %1664 = vmatprep.subr.bf16.mxu0 %v1599
    %1665 = vmatpush1.bf16.msra.mxu0 %v1598
    %1666 = vmatprep.subr.bf16.mxu0 %v1595
    %1667 = vmatpush1.bf16.msra.mxu0 %v1594
    %1668 = vmatprep.subr.bf16.mxu0 %v1591
    %1669 = vmatpush1.bf16.msra.mxu0 %v1590
    %1670 = vmatprep.subr.bf16.mxu0 0
    %1671 = vmatpush2.bf16.msra.mxu0 0
    %1672 = vmatprep.subr.bf16.mxu0 0
    %1673 = vmatpush2.bf16.msra.mxu0 0
    %1674 = vmatprep.subr.bf16.mxu0 0
    %1675 = vmatpush2.bf16.msra.mxu0 0
    %1676 = vmatprep.subr.bf16.mxu0 0
    %1677 = vmatpush2.bf16.msra.mxu0 0
    %1678 = vmatprep.subr.bf16.mxu0 0
    %1679 = vmatpush2.bf16.msra.mxu0 0
    %1680 = vmatprep.subr.bf16.mxu0 0
    %1681 = vmatpush2.bf16.msra.mxu0 0
    %1682 = vmatprep.subr.bf16.mxu0 0
    %1683 = vmatpush2.bf16.msra.mxu0 0
    %1684 = vmatprep.subr.bf16.mxu0 0
    %1685 = vmatpush2.bf16.msra.mxu0 0
    %1686 = vmatprep.mubr.bf16.mxu0 0
    %1687 = vmatmul.mubr.bf16.gmra.mxu0 %v1461
    %v1688 = vpop.f32.mrf.mxu0
    %v1689 = vadd.f32 0.0, %v1688
    %v1690 = vpop.f32.mrf.mxu0
    %v1691 = vadd.f32 0.0, %v1690
    %v1692 = vpop.f32.mrf.mxu0
    %v1693 = vpop.f32.mrf.mxu0
    %1694 = vdwg.mxu0
    %1695 = vmatprep.subr.bf16.mxu0 %v1621
    %1696 = vmatpush1.bf16.msra.mxu0 %v1620
    %1697 = vmatprep.subr.bf16.mxu0 %v1617
    %1698 = vmatpush1.bf16.msra.mxu0 %v1616
    %1699 = vmatprep.subr.bf16.mxu0 %v1613
    %1700 = vmatpush1.bf16.msra.mxu0 %v1612
    %1701 = vmatprep.subr.bf16.mxu0 %v1609
    %1702 = vmatpush1.bf16.msra.mxu0 %v1608
    %1703 = vmatprep.subr.bf16.mxu0 %v1605
    %1704 = vmatpush1.bf16.msra.mxu0 %v1604
    %1705 = vmatprep.subr.bf16.mxu0 %v1601
    %1706 = vmatpush1.bf16.msra.mxu0 %v1600
    %1707 = vmatprep.subr.bf16.mxu0 %v1597
    %1708 = vmatpush1.bf16.msra.mxu0 %v1596
    %1709 = vmatprep.subr.bf16.mxu0 %v1593
    %1710 = vmatpush1.bf16.msra.mxu0 %v1592
    %1711 = vmatprep.subr.bf16.mxu0 0
    %1712 = vmatpush2.bf16.msra.mxu0 0
    %1713 = vmatprep.subr.bf16.mxu0 0
    %1714 = vmatpush2.bf16.msra.mxu0 0
    %1715 = vmatprep.subr.bf16.mxu0 0
    %1716 = vmatpush2.bf16.msra.mxu0 0
    %1717 = vmatprep.subr.bf16.mxu0 0
    %1718 = vmatpush2.bf16.msra.mxu0 0
    %1719 = vmatprep.subr.bf16.mxu0 0
    %1720 = vmatpush2.bf16.msra.mxu0 0
    %1721 = vmatprep.subr.bf16.mxu0 0
    %1722 = vmatpush2.bf16.msra.mxu0 0
    %1723 = vmatprep.subr.bf16.mxu0 0
    %1724 = vmatpush2.bf16.msra.mxu0 0
    %1725 = vmatprep.subr.bf16.mxu0 0
    %1726 = vmatpush2.bf16.msra.mxu0 0
    %1727 = vmatprep.mubr.bf16.mxu0 0
    %1728 = vmatmul.mubr.bf16.gmra.mxu0 %v1461
    %v1729 = vpop.f32.mrf.mxu0
    %v1730 = vadd.f32 0.0, %v1729
    %v1731 = vpop.f32.mrf.mxu0
    %v1732 = vadd.f32 0.0, %v1731
    %v1733 = vpop.f32.mrf.mxu0
    %v1734 = vpop.f32.mrf.mxu0
    %1735 = vdwg.mxu0
    %v1736 = vld [vmem:[#allocation11] sm:$0xff]
    %v1737 = vld [vmem:[#allocation11 + $0x8] sm:$0xff]
    %s1738 = scalar_lea.vmem [#allocation11], 16
    %v1739 = vld [vmem:[%s1738] sm:$0xff]
    %v1740 = vld [vmem:[%s1738 + $0x8] sm:$0xff]
    %vm1741 = vcmask 64512
    %v1743 = vsel %vm1741, %v1739, 0
    %v1746 = vsel %vm1741, %v1740, 0
    %1748 = vmatprep.subr.mxu0 0.0
    %1749 = vmatpush1.msra.mxu0 0.0
    %1750 = vmatprep.subr.mxu0 0.0
    %1751 = vmatpush1.msra.mxu0 0.0
    %1752 = vmatprep.subr.mxu0 0.0
    %1753 = vmatpush1.msra.mxu0 0.0
    %1754 = vmatprep.subr.mxu0 0.0
    %1755 = vmatpush1.msra.mxu0 0.0
    %1756 = vmatprep.subr.mxu0 0.0
    %1757 = vmatpush1.msra.mxu0 0.0
    %1758 = vmatprep.subr.mxu0 0.0
    %1759 = vmatpush1.msra.mxu0 0.0
    %1760 = vmatprep.subr.mxu0 0.0
    %1761 = vmatpush1.msra.mxu0 0.0
    %1762 = vmatprep.subr.mxu0 0.0
    %1763 = vmatpush1.msra.mxu0 0.0
    %1764 = vmatprep.subr.mxu0 0.0
    %1765 = vmatpush1.msra.mxu0 0.0
    %1766 = vmatprep.subr.mxu0 0.0
    %1767 = vmatpush1.msra.mxu0 0.0
    %1768 = vmatprep.subr.mxu0 0.0
    %1769 = vmatpush1.msra.mxu0 0.0
    %1770 = vmatprep.subr.mxu0 0.0
    %1771 = vmatpush1.msra.mxu0 0.0
    %1772 = vmatprep.subr.mxu0 0.0
    %1773 = vmatpush1.msra.mxu0 0.0
    %1774 = vmatprep.subr.mxu0 0.0
    %1775 = vmatpush1.msra.mxu0 0.0
    %1776 = vmatprep.subr.mxu0 0.0
    %1777 = vmatpush1.msra.mxu0 0.0
    %1778 = vmatprep.subr.mxu0 0.0
    %1779 = vmatpush1.msra.mxu0 %v1691
    %1780 = vmatprep.subr.mxu0 0.0
    %1781 = vmatpush2.msra.mxu0 0.0
    %1782 = vmatprep.subr.mxu0 0.0
    %1783 = vmatpush2.msra.mxu0 0.0
    %1784 = vmatprep.subr.mxu0 0.0
    %1785 = vmatpush2.msra.mxu0 0.0
    %1786 = vmatprep.subr.mxu0 0.0
    %1787 = vmatpush2.msra.mxu0 0.0
    %1788 = vmatprep.subr.mxu0 0.0
    %1789 = vmatpush2.msra.mxu0 0.0
    %1790 = vmatprep.subr.mxu0 0.0
    %1791 = vmatpush2.msra.mxu0 0.0
    %1792 = vmatprep.subr.mxu0 0.0
    %1793 = vmatpush2.msra.mxu0 0.0
    %1794 = vmatprep.subr.mxu0 0.0
    %1795 = vmatpush2.msra.mxu0 0.0
    %1796 = vmatprep.subr.mxu0 0.0
    %1797 = vmatpush2.msra.mxu0 0.0
    %1798 = vmatprep.subr.mxu0 0.0
    %1799 = vmatpush2.msra.mxu0 0.0
    %1800 = vmatprep.subr.mxu0 0.0
    %1801 = vmatpush2.msra.mxu0 0.0
    %1802 = vmatprep.subr.mxu0 0.0
    %1803 = vmatpush2.msra.mxu0 0.0
    %1804 = vmatprep.subr.mxu0 0.0
    %1805 = vmatpush2.msra.mxu0 0.0
    %1806 = vmatprep.subr.mxu0 0.0
    %1807 = vmatpush2.msra.mxu0 0.0
    %1808 = vmatprep.subr.mxu0 0.0
    %1809 = vmatpush2.msra.mxu0 0.0
    %1810 = vmatprep.subr.mxu0 0.0
    %1811 = vmatpush2.msra.mxu0 0.0
    %1812 = vmatprep.mubr.f32.mxu0 0.0
    %1813 = vmatmul.mubr.f32.gmra.mxu0 %v1743
    %v1814 = vpop.f32.mrf.mxu0
    %v1815 = vadd.f32 0.0, %v1814
    %v1816 = vpop.f32.mrf.mxu0
    %1817 = vmatprep.mubr.f32.mxu0 0.0
    %1818 = vmatmul.mubr.f32.gmra.mxu0 %v1746
    %v1819 = vpop.f32.mrf.mxu0
    %v1820 = vadd.f32 0.0, %v1819
    %v1821 = vpop.f32.mrf.mxu0
    %1822 = vdwg.mxu0
    %v1824 = vsel %vm1741, %v1736, 0
    %v1827 = vsel %vm1741, %v1737, 0
    %1829 = vmatprep.subr.mxu0 0.0
    %1830 = vmatpush1.msra.mxu0 0.0
    %1831 = vmatprep.subr.mxu0 0.0
    %1832 = vmatpush1.msra.mxu0 0.0
    %1833 = vmatprep.subr.mxu0 0.0
    %1834 = vmatpush1.msra.mxu0 0.0
    %1835 = vmatprep.subr.mxu0 0.0
    %1836 = vmatpush1.msra.mxu0 0.0
    %1837 = vmatprep.subr.mxu0 0.0
    %1838 = vmatpush1.msra.mxu0 0.0
    %1839 = vmatprep.subr.mxu0 0.0
    %1840 = vmatpush1.msra.mxu0 0.0
    %1841 = vmatprep.subr.mxu0 0.0
    %1842 = vmatpush1.msra.mxu0 0.0
    %1843 = vmatprep.subr.mxu0 0.0
    %1844 = vmatpush1.msra.mxu0 0.0
    %1845 = vmatprep.subr.mxu0 0.0
    %1846 = vmatpush1.msra.mxu0 0.0
    %1847 = vmatprep.subr.mxu0 0.0
    %1848 = vmatpush1.msra.mxu0 0.0
    %1849 = vmatprep.subr.mxu0 0.0
    %1850 = vmatpush1.msra.mxu0 0.0
    %1851 = vmatprep.subr.mxu0 0.0
    %1852 = vmatpush1.msra.mxu0 0.0
    %1853 = vmatprep.subr.mxu0 0.0
    %1854 = vmatpush1.msra.mxu0 0.0
    %1855 = vmatprep.subr.mxu0 0.0
    %1856 = vmatpush1.msra.mxu0 0.0
    %1857 = vmatprep.subr.mxu0 0.0
    %1858 = vmatpush1.msra.mxu0 0.0
    %1859 = vmatprep.subr.mxu0 0.0
    %1860 = vmatpush1.msra.mxu0 %v1689
    %1861 = vmatprep.subr.mxu0 0.0
    %1862 = vmatpush2.msra.mxu0 0.0
    %1863 = vmatprep.subr.mxu0 0.0
    %1864 = vmatpush2.msra.mxu0 0.0
    %1865 = vmatprep.subr.mxu0 0.0
    %1866 = vmatpush2.msra.mxu0 0.0
    %1867 = vmatprep.subr.mxu0 0.0
    %1868 = vmatpush2.msra.mxu0 0.0
    %1869 = vmatprep.subr.mxu0 0.0
    %1870 = vmatpush2.msra.mxu0 0.0
    %1871 = vmatprep.subr.mxu0 0.0
    %1872 = vmatpush2.msra.mxu0 0.0
    %1873 = vmatprep.subr.mxu0 0.0
    %1874 = vmatpush2.msra.mxu0 0.0
    %1875 = vmatprep.subr.mxu0 0.0
    %1876 = vmatpush2.msra.mxu0 0.0
    %1877 = vmatprep.subr.mxu0 0.0
    %1878 = vmatpush2.msra.mxu0 0.0
    %1879 = vmatprep.subr.mxu0 0.0
    %1880 = vmatpush2.msra.mxu0 0.0
    %1881 = vmatprep.subr.mxu0 0.0
    %1882 = vmatpush2.msra.mxu0 0.0
    %1883 = vmatprep.subr.mxu0 0.0
    %1884 = vmatpush2.msra.mxu0 0.0
    %1885 = vmatprep.subr.mxu0 0.0
    %1886 = vmatpush2.msra.mxu0 0.0
    %1887 = vmatprep.subr.mxu0 0.0
    %1888 = vmatpush2.msra.mxu0 0.0
    %1889 = vmatprep.subr.mxu0 0.0
    %1890 = vmatpush2.msra.mxu0 0.0
    %1891 = vmatprep.subr.mxu0 0.0
    %1892 = vmatpush2.msra.mxu0 0.0
    %1893 = vmatprep.mubr.f32.mxu0 0.0
    %1894 = vmatmul.mubr.f32.gmra.mxu0 %v1824
    %v1895 = vpop.f32.mrf.mxu0
    %v1896 = vadd.f32 %v1815, %v1895
    %v1897 = vpop.f32.mrf.mxu0
    %1898 = vmatprep.mubr.f32.mxu0 0.0
    %1899 = vmatmul.mubr.f32.gmra.mxu0 %v1827
    %v1900 = vpop.f32.mrf.mxu0
    %v1901 = vadd.f32 %v1820, %v1900
    %v1902 = vpop.f32.mrf.mxu0
    %1903 = vdwg.mxu0
    %s1904 = scalar_lea.vmem [#allocation11], 32
    %v1905 = vld [vmem:[%s1904] sm:$0xff]
    %v1906 = vld [vmem:[%s1904 + $0x8] sm:$0xff]
    %v1908 = vsel %vm1741, %v1905, 0
    %v1911 = vsel %vm1741, %v1906, 0
    %1913 = vmatprep.subr.mxu0 0.0
    %1914 = vmatpush1.msra.mxu0 0.0
    %1915 = vmatprep.subr.mxu0 0.0
    %1916 = vmatpush1.msra.mxu0 0.0
    %1917 = vmatprep.subr.mxu0 0.0
    %1918 = vmatpush1.msra.mxu0 0.0
    %1919 = vmatprep.subr.mxu0 0.0
    %1920 = vmatpush1.msra.mxu0 0.0
    %1921 = vmatprep.subr.mxu0 0.0
    %1922 = vmatpush1.msra.mxu0 0.0
    %1923 = vmatprep.subr.mxu0 0.0
    %1924 = vmatpush1.msra.mxu0 0.0
    %1925 = vmatprep.subr.mxu0 0.0
    %1926 = vmatpush1.msra.mxu0 0.0
    %1927 = vmatprep.subr.mxu0 0.0
    %1928 = vmatpush1.msra.mxu0 0.0
    %1929 = vmatprep.subr.mxu0 0.0
    %1930 = vmatpush1.msra.mxu0 0.0
    %1931 = vmatprep.subr.mxu0 0.0
    %1932 = vmatpush1.msra.mxu0 0.0
    %1933 = vmatprep.subr.mxu0 0.0
    %1934 = vmatpush1.msra.mxu0 0.0
    %1935 = vmatprep.subr.mxu0 0.0
    %1936 = vmatpush1.msra.mxu0 0.0
    %1937 = vmatprep.subr.mxu0 0.0
    %1938 = vmatpush1.msra.mxu0 0.0
    %1939 = vmatprep.subr.mxu0 0.0
    %1940 = vmatpush1.msra.mxu0 0.0
    %1941 = vmatprep.subr.mxu0 0.0
    %1942 = vmatpush1.msra.mxu0 0.0
    %1943 = vmatprep.subr.mxu0 0.0
    %1944 = vmatpush1.msra.mxu0 %v1730
    %1945 = vmatprep.subr.mxu0 0.0
    %1946 = vmatpush2.msra.mxu0 0.0
    %1947 = vmatprep.subr.mxu0 0.0
    %1948 = vmatpush2.msra.mxu0 0.0
    %1949 = vmatprep.subr.mxu0 0.0
    %1950 = vmatpush2.msra.mxu0 0.0
    %1951 = vmatprep.subr.mxu0 0.0
    %1952 = vmatpush2.msra.mxu0 0.0
    %1953 = vmatprep.subr.mxu0 0.0
    %1954 = vmatpush2.msra.mxu0 0.0
    %1955 = vmatprep.subr.mxu0 0.0
    %1956 = vmatpush2.msra.mxu0 0.0
    %1957 = vmatprep.subr.mxu0 0.0
    %1958 = vmatpush2.msra.mxu0 0.0
    %1959 = vmatprep.subr.mxu0 0.0
    %1960 = vmatpush2.msra.mxu0 0.0
    %1961 = vmatprep.subr.mxu0 0.0
    %1962 = vmatpush2.msra.mxu0 0.0
    %1963 = vmatprep.subr.mxu0 0.0
    %1964 = vmatpush2.msra.mxu0 0.0
    %1965 = vmatprep.subr.mxu0 0.0
    %1966 = vmatpush2.msra.mxu0 0.0
    %1967 = vmatprep.subr.mxu0 0.0
    %1968 = vmatpush2.msra.mxu0 0.0
    %1969 = vmatprep.subr.mxu0 0.0
    %1970 = vmatpush2.msra.mxu0 0.0
    %1971 = vmatprep.subr.mxu0 0.0
    %1972 = vmatpush2.msra.mxu0 0.0
    %1973 = vmatprep.subr.mxu0 0.0
    %1974 = vmatpush2.msra.mxu0 0.0
    %1975 = vmatprep.subr.mxu0 0.0
    %1976 = vmatpush2.msra.mxu0 0.0
    %1977 = vmatprep.mubr.f32.mxu0 0.0
    %1978 = vmatmul.mubr.f32.gmra.mxu0 %v1908
    %v1979 = vpop.f32.mrf.mxu0
    %v1980 = vadd.f32 0.0, %v1979
    %v1981 = vpop.f32.mrf.mxu0
    %1982 = vmatprep.mubr.f32.mxu0 0.0
    %1983 = vmatmul.mubr.f32.gmra.mxu0 %v1911
    %v1984 = vpop.f32.mrf.mxu0
    %v1985 = vadd.f32 0.0, %v1984
    %v1986 = vpop.f32.mrf.mxu0
    %1987 = vdwg.mxu0
    %v1988 = vadd.f32 %v1896, %v1980
    %v1989 = vadd.f32 %v1901, %v1985
    %s1990 = scalar_lea.vmem [#allocation11], 48
    %v1991 = vld [vmem:[%s1990] sm:$0xff]
    %v1992 = vld [vmem:[%s1990 + $0x8] sm:$0xff]
    %v1994 = vsel %vm1741, %v1991, 0
    %v1997 = vsel %vm1741, %v1992, 0
    %1999 = vmatprep.subr.mxu0 0.0
    %2000 = vmatpush1.msra.mxu0 0.0
    %2001 = vmatprep.subr.mxu0 0.0
    %2002 = vmatpush1.msra.mxu0 0.0
    %2003 = vmatprep.subr.mxu0 0.0
    %2004 = vmatpush1.msra.mxu0 0.0
    %2005 = vmatprep.subr.mxu0 0.0
    %2006 = vmatpush1.msra.mxu0 0.0
    %2007 = vmatprep.subr.mxu0 0.0
    %2008 = vmatpush1.msra.mxu0 0.0
    %2009 = vmatprep.subr.mxu0 0.0
    %2010 = vmatpush1.msra.mxu0 0.0
    %2011 = vmatprep.subr.mxu0 0.0
    %2012 = vmatpush1.msra.mxu0 0.0
    %2013 = vmatprep.subr.mxu0 0.0
    %2014 = vmatpush1.msra.mxu0 0.0
    %2015 = vmatprep.subr.mxu0 0.0
    %2016 = vmatpush1.msra.mxu0 0.0
    %2017 = vmatprep.subr.mxu0 0.0
    %2018 = vmatpush1.msra.mxu0 0.0
    %2019 = vmatprep.subr.mxu0 0.0
    %2020 = vmatpush1.msra.mxu0 0.0
    %2021 = vmatprep.subr.mxu0 0.0
    %2022 = vmatpush1.msra.mxu0 0.0
    %2023 = vmatprep.subr.mxu0 0.0
    %2024 = vmatpush1.msra.mxu0 0.0
    %2025 = vmatprep.subr.mxu0 0.0
    %2026 = vmatpush1.msra.mxu0 0.0
    %2027 = vmatprep.subr.mxu0 0.0
    %2028 = vmatpush1.msra.mxu0 0.0
    %2029 = vmatprep.subr.mxu0 0.0
    %2030 = vmatpush1.msra.mxu0 %v1732
    %2031 = vmatprep.subr.mxu0 0.0
    %2032 = vmatpush2.msra.mxu0 0.0
    %2033 = vmatprep.subr.mxu0 0.0
    %2034 = vmatpush2.msra.mxu0 0.0
    %2035 = vmatprep.subr.mxu0 0.0
    %2036 = vmatpush2.msra.mxu0 0.0
    %2037 = vmatprep.subr.mxu0 0.0
    %2038 = vmatpush2.msra.mxu0 0.0
    %2039 = vmatprep.subr.mxu0 0.0
    %2040 = vmatpush2.msra.mxu0 0.0
    %2041 = vmatprep.subr.mxu0 0.0
    %2042 = vmatpush2.msra.mxu0 0.0
    %2043 = vmatprep.subr.mxu0 0.0
    %2044 = vmatpush2.msra.mxu0 0.0
    %2045 = vmatprep.subr.mxu0 0.0
    %2046 = vmatpush2.msra.mxu0 0.0
    %2047 = vmatprep.subr.mxu0 0.0
    %2048 = vmatpush2.msra.mxu0 0.0
    %2049 = vmatprep.subr.mxu0 0.0
    %2050 = vmatpush2.msra.mxu0 0.0
    %2051 = vmatprep.subr.mxu0 0.0
    %2052 = vmatpush2.msra.mxu0 0.0
    %2053 = vmatprep.subr.mxu0 0.0
    %2054 = vmatpush2.msra.mxu0 0.0
    %2055 = vmatprep.subr.mxu0 0.0
    %2056 = vmatpush2.msra.mxu0 0.0
    %2057 = vmatprep.subr.mxu0 0.0
    %2058 = vmatpush2.msra.mxu0 0.0
    %2059 = vmatprep.subr.mxu0 0.0
    %2060 = vmatpush2.msra.mxu0 0.0
    %2061 = vmatprep.subr.mxu0 0.0
    %2062 = vmatpush2.msra.mxu0 0.0
    %2063 = vmatprep.mubr.f32.mxu0 0.0
    %2064 = vmatmul.mubr.f32.gmra.mxu0 %v1994
    %v2065 = vpop.f32.mrf.mxu0
    %v2066 = vadd.f32 0.0, %v2065
    %v2067 = vpop.f32.mrf.mxu0
    %2068 = vmatprep.mubr.f32.mxu0 0.0
    %2069 = vmatmul.mubr.f32.gmra.mxu0 %v1997
    %v2070 = vpop.f32.mrf.mxu0
    %v2071 = vadd.f32 0.0, %v2070
    %v2072 = vpop.f32.mrf.mxu0
    %2073 = vdwg.mxu0
    %v2074 = vadd.f32 %v1988, %v2066
    %v2075 = vadd.f32 %v1989, %v2071
    %v2076 = vld [vmem:[#allocation14] sm:$0xff]
    %v2077 = vld [vmem:[#allocation14 + $0x8] sm:$0xff]
    %v2078 = vld [vmem:[#allocation14 + $0x10] sm:$0xff]
    %v2079 = vld [vmem:[#allocation14 + $0x18] sm:$0xff]
    %v2080 = vld [vmem:[#allocation14 + $0x20] sm:$0xff]
    %v2081 = vld [vmem:[#allocation14 + $0x28] sm:$0xff]
    %v2082 = vld [vmem:[#allocation14 + $0x30] sm:$0xff]
    %v2083 = vld [vmem:[#allocation14 + $0x38] sm:$0xff]
    %v2084 = vld [vmem:[#allocation14 + $0x40] sm:$0xff]
    %v2085 = vld [vmem:[#allocation14 + $0x48] sm:$0xff]
    %v2086 = vld [vmem:[#allocation14 + $0x50] sm:$0xff]
    %v2087 = vld [vmem:[#allocation14 + $0x58] sm:$0xff]
    %v2088 = vld [vmem:[#allocation14 + $0x60] sm:$0xff]
    %v2089 = vld [vmem:[#allocation14 + $0x68] sm:$0xff]
    %v2090 = vld [vmem:[#allocation14 + $0x70] sm:$0xff]
    %v2091 = vld [vmem:[#allocation14 + $0x78] sm:$0xff]
    %v2092 = vadd.f32 %v2074, %v2075
    %v2093 = vrot.slane %v2092, 4
    %v2094 = vadd.f32 %v2092, %v2093
    %v2095 = vrot.slane %v2094, 2
    %v2096 = vadd.f32 %v2094, %v2095
    %v2097 = vrot.slane %v2096, 1
    %v2098 = vadd.f32 %v2096, %v2097
    %2099 = vmatprep.subr.mxu0 0.0
    %2100 = vmatpush1.msra.mxu0 %v2091
    %2101 = vmatprep.subr.mxu0 0.0
    %2102 = vmatpush1.msra.mxu0 %v2090
    %2103 = vmatprep.subr.mxu0 0.0
    %2104 = vmatpush1.msra.mxu0 %v2089
    %2105 = vmatprep.subr.mxu0 0.0
    %2106 = vmatpush1.msra.mxu0 %v2088
    %2107 = vmatprep.subr.mxu0 0.0
    %2108 = vmatpush1.msra.mxu0 %v2087
    %2109 = vmatprep.subr.mxu0 0.0
    %2110 = vmatpush1.msra.mxu0 %v2086
    %2111 = vmatprep.subr.mxu0 0.0
    %2112 = vmatpush1.msra.mxu0 %v2085
    %2113 = vmatprep.subr.mxu0 0.0
    %2114 = vmatpush1.msra.mxu0 %v2084
    %2115 = vmatprep.subr.mxu0 0.0
    %2116 = vmatpush1.msra.mxu0 %v2083
    %2117 = vmatprep.subr.mxu0 0.0
    %2118 = vmatpush1.msra.mxu0 %v2082
    %2119 = vmatprep.subr.mxu0 0.0
    %2120 = vmatpush1.msra.mxu0 %v2081
    %2121 = vmatprep.subr.mxu0 0.0
    %2122 = vmatpush1.msra.mxu0 %v2080
    %2123 = vmatprep.subr.mxu0 0.0
    %2124 = vmatpush1.msra.mxu0 %v2079
    %2125 = vmatprep.subr.mxu0 0.0
    %2126 = vmatpush1.msra.mxu0 %v2078
    %2127 = vmatprep.subr.mxu0 0.0
    %2128 = vmatpush1.msra.mxu0 %v2077
    %2129 = vmatprep.subr.mxu0 0.0
    %2130 = vmatpush1.msra.mxu0 %v2076
    %2131 = vmatprep.subr.mxu0 0.0
    %2132 = vmatpush2.msra.mxu0 0.0
    %2133 = vmatprep.subr.mxu0 0.0
    %2134 = vmatpush2.msra.mxu0 0.0
    %2135 = vmatprep.subr.mxu0 0.0
    %2136 = vmatpush2.msra.mxu0 0.0
    %2137 = vmatprep.subr.mxu0 0.0
    %2138 = vmatpush2.msra.mxu0 0.0
    %2139 = vmatprep.subr.mxu0 0.0
    %2140 = vmatpush2.msra.mxu0 0.0
    %2141 = vmatprep.subr.mxu0 0.0
    %2142 = vmatpush2.msra.mxu0 0.0
    %2143 = vmatprep.subr.mxu0 0.0
    %2144 = vmatpush2.msra.mxu0 0.0
    %2145 = vmatprep.subr.mxu0 0.0
    %2146 = vmatpush2.msra.mxu0 0.0
    %2147 = vmatprep.subr.mxu0 0.0
    %2148 = vmatpush2.msra.mxu0 0.0
    %2149 = vmatprep.subr.mxu0 0.0
    %2150 = vmatpush2.msra.mxu0 0.0
    %2151 = vmatprep.subr.mxu0 0.0
    %2152 = vmatpush2.msra.mxu0 0.0
    %2153 = vmatprep.subr.mxu0 0.0
    %2154 = vmatpush2.msra.mxu0 0.0
    %2155 = vmatprep.subr.mxu0 0.0
    %2156 = vmatpush2.msra.mxu0 0.0
    %2157 = vmatprep.subr.mxu0 0.0
    %2158 = vmatpush2.msra.mxu0 0.0
    %2159 = vmatprep.subr.mxu0 0.0
    %2160 = vmatpush2.msra.mxu0 0.0
    %2161 = vmatprep.subr.mxu0 0.0
    %2162 = vmatpush2.msra.mxu0 0.0
    %2163 = vmatprep.mubr.f32.mxu0 0.0
    %2164 = vmatmul.mubr.f32.gmra.mxu0 %v2098
    %v2165 = vpop.f32.mrf.mxu0
    %v2166 = vadd.f32 0.0, %v2165
    %v2167 = vpop.f32.mrf.mxu0
    %2168 = vdwg.mxu0
    %v2169 = vlaneseq
    %v2170 = vshrl.u32 %v2169, 7
    %v2171 = vsub.s32 0, %v2170
    %v2172 = vrot.slane %v2166, %v2171
    %v2173 = vsub.f32 %v2074, %v2172
    %v2174 = vsub.f32 %v2075, %v2172
    %v2175 = vmul.f32 %v2173, %v2173
    %v2176 = vmul.f32 %v2174, %v2174
    %v2177 = vadd.f32 %v2175, %v2176
    %v2178 = vrot.slane %v2177, 4
    %v2179 = vadd.f32 %v2177, %v2178
    %v2180 = vrot.slane %v2179, 2
    %v2181 = vadd.f32 %v2179, %v2180
    %v2182 = vrot.slane %v2181, 1
    %v2183 = vadd.f32 %v2181, %v2182
    %v2184 = vld [vmem:[%s14] sm:$0x1]
    %2185 = vmatprep.subr.mxu0 0.0
    %2186 = vmatpush1.msra.mxu0 %v2091
    %2187 = vmatprep.subr.mxu0 0.0
    %2188 = vmatpush1.msra.mxu0 %v2090
    %2189 = vmatprep.subr.mxu0 0.0
    %2190 = vmatpush1.msra.mxu0 %v2089
    %2191 = vmatprep.subr.mxu0 0.0
    %2192 = vmatpush1.msra.mxu0 %v2088
    %2193 = vmatprep.subr.mxu0 0.0
    %2194 = vmatpush1.msra.mxu0 %v2087
    %2195 = vmatprep.subr.mxu0 0.0
    %2196 = vmatpush1.msra.mxu0 %v2086
    %2197 = vmatprep.subr.mxu0 0.0
    %2198 = vmatpush1.msra.mxu0 %v2085
    %2199 = vmatprep.subr.mxu0 0.0
    %2200 = vmatpush1.msra.mxu0 %v2084
    %2201 = vmatprep.subr.mxu0 0.0
    %2202 = vmatpush1.msra.mxu0 %v2083
    %2203 = vmatprep.subr.mxu0 0.0
    %2204 = vmatpush1.msra.mxu0 %v2082
    %2205 = vmatprep.subr.mxu0 0.0
    %2206 = vmatpush1.msra.mxu0 %v2081
    %2207 = vmatprep.subr.mxu0 0.0
    %2208 = vmatpush1.msra.mxu0 %v2080
    %2209 = vmatprep.subr.mxu0 0.0
    %2210 = vmatpush1.msra.mxu0 %v2079
    %2211 = vmatprep.subr.mxu0 0.0
    %2212 = vmatpush1.msra.mxu0 %v2078
    %2213 = vmatprep.subr.mxu0 0.0
    %2214 = vmatpush1.msra.mxu0 %v2077
    %2215 = vmatprep.subr.mxu0 0.0
    %2216 = vmatpush1.msra.mxu0 %v2076
    %2217 = vmatprep.subr.mxu0 0.0
    %2218 = vmatpush2.msra.mxu0 0.0
    %2219 = vmatprep.subr.mxu0 0.0
    %2220 = vmatpush2.msra.mxu0 0.0
    %2221 = vmatprep.subr.mxu0 0.0
    %2222 = vmatpush2.msra.mxu0 0.0
    %2223 = vmatprep.subr.mxu0 0.0
    %2224 = vmatpush2.msra.mxu0 0.0
    %2225 = vmatprep.subr.mxu0 0.0
    %2226 = vmatpush2.msra.mxu0 0.0
    %2227 = vmatprep.subr.mxu0 0.0
    %2228 = vmatpush2.msra.mxu0 0.0
    %2229 = vmatprep.subr.mxu0 0.0
    %2230 = vmatpush2.msra.mxu0 0.0
    %2231 = vmatprep.subr.mxu0 0.0
    %2232 = vmatpush2.msra.mxu0 0.0
    %2233 = vmatprep.subr.mxu0 0.0
    %2234 = vmatpush2.msra.mxu0 0.0
    %2235 = vmatprep.subr.mxu0 0.0
    %2236 = vmatpush2.msra.mxu0 0.0
    %2237 = vmatprep.subr.mxu0 0.0
    %2238 = vmatpush2.msra.mxu0 0.0
    %2239 = vmatprep.subr.mxu0 0.0
    %2240 = vmatpush2.msra.mxu0 0.0
    %2241 = vmatprep.subr.mxu0 0.0
    %2242 = vmatpush2.msra.mxu0 0.0
    %2243 = vmatprep.subr.mxu0 0.0
    %2244 = vmatpush2.msra.mxu0 0.0
    %2245 = vmatprep.subr.mxu0 0.0
    %2246 = vmatpush2.msra.mxu0 0.0
    %2247 = vmatprep.subr.mxu0 0.0
    %2248 = vmatpush2.msra.mxu0 0.0
    %2249 = vmatprep.mubr.f32.mxu0 0.0
    %2250 = vmatmul.mubr.f32.gmra.mxu0 %v2183
    %v2251 = vpop.f32.mrf.mxu0
    %v2252 = vadd.f32 1e-05, %v2251
    %v2253 = vpop.f32.mrf.mxu0
    %2254 = vdwg.mxu0
    %v2255 = vrsqrt.pop %v2252
    %v2256 = vmul.f32 %v2184, %v2255
    %v2258 = vlaneseq
    %v2259 = vshrl.u32 %v2258, 7
    %v2260 = vsub.s32 0, %v2259
    %v2261 = vrot.slane %v2256, %v2260
    %v2263 = vmul.f32 %v2173, %v2261
    %v2264 = vmul.f32 %v2174, %v2261
    %v2265 = vld [vmem:[%s15] sm:$0x1]
    %v2267 = vlaneseq
    %v2268 = vshrl.u32 %v2267, 7
    %v2269 = vsub.s32 0, %v2268
    %v2270 = vrot.slane %v2265, %v2269
    %v2272 = vadd.f32 %v2263, %v2270
    %v2273 = vadd.f32 %v2264, %v2270
    %v2274 = vmin.f32 %v2272, 20.0
    %v2275 = vmin.f32 %v2273, 20.0
    %v2276 = vmul.f32 %v2274, 1.442695
    %v2277 = vpow.pop %v2276
    %v2278 = vmul.f32 %v2275, 1.442695
    %v2279 = vpow.pop %v2278
    %v2280 = vadd.f32 %v2277, 2.0
    %v2281 = vadd.f32 %v2279, 2.0
    %v2282 = vmul.f32 %v2277, %v2280
    %v2283 = vmul.f32 %v2279, %v2281
    %v2284 = vmul.f32 %v2272, %v2282
    %v2285 = vmul.f32 %v2273, %v2283
    %v2286 = vadd.f32 %v2282, 2.0
    %v2287 = vadd.f32 %v2283, 2.0
    %v2288 = vrcp.pop %v2286
    %v2289 = vrcp.pop %v2287
    %v2290 = vmul.f32 %v2284, %v2288
    %v2291 = vmul.f32 %v2285, %v2289
    %v2292 = vpack.c.bf16 %v2291, %v2290
    %v2293 = vld [vmem:[#allocation17] sm:$0xff]
    %v2294 = vld [vmem:[#allocation17 + $0x8] sm:$0xff]
    %v2295 = vld [vmem:[#allocation17 + $0x10] sm:$0xff]
    %v2296 = vld [vmem:[#allocation17 + $0x18] sm:$0xff]
    %v2297 = vld [vmem:[#allocation17 + $0x20] sm:$0xff]
    %v2298 = vld [vmem:[#allocation17 + $0x28] sm:$0xff]
    %v2299 = vld [vmem:[#allocation17 + $0x30] sm:$0xff]
    %v2300 = vld [vmem:[#allocation17 + $0x38] sm:$0xff]
    %v2301 = vld [vmem:[#allocation17 + $0x40] sm:$0xff]
    %v2302 = vld [vmem:[#allocation17 + $0x48] sm:$0xff]
    %v2303 = vld [vmem:[#allocation17 + $0x50] sm:$0xff]
    %v2304 = vld [vmem:[#allocation17 + $0x58] sm:$0xff]
    %v2305 = vld [vmem:[#allocation17 + $0x60] sm:$0xff]
    %v2306 = vld [vmem:[#allocation17 + $0x68] sm:$0xff]
    %v2307 = vld [vmem:[#allocation17 + $0x70] sm:$0xff]
    %v2308 = vld [vmem:[#allocation17 + $0x78] sm:$0xff]
    %v2309 = vld [vmem:[#allocation17 + $0x80] sm:$0xff]
    %v2310 = vld [vmem:[#allocation17 + $0x88] sm:$0xff]
    %v2311 = vld [vmem:[#allocation17 + $0x90] sm:$0xff]
    %v2312 = vld [vmem:[#allocation17 + $0x98] sm:$0xff]
    %v2313 = vld [vmem:[#allocation17 + $0xa0] sm:$0xff]
    %v2314 = vld [vmem:[#allocation17 + $0xa8] sm:$0xff]
    %v2315 = vld [vmem:[#allocation17 + $0xb0] sm:$0xff]
    %v2316 = vld [vmem:[#allocation17 + $0xb8] sm:$0xff]
    %v2317 = vld [vmem:[#allocation17 + $0xc0] sm:$0xff]
    %v2318 = vld [vmem:[#allocation17 + $0xc8] sm:$0xff]
    %v2319 = vld [vmem:[#allocation17 + $0xd0] sm:$0xff]
    %v2320 = vld [vmem:[#allocation17 + $0xd8] sm:$0xff]
    %v2321 = vld [vmem:[#allocation17 + $0xe0] sm:$0xff]
    %v2322 = vld [vmem:[#allocation17 + $0xe8] sm:$0xff]
    %v2323 = vld [vmem:[#allocation17 + $0xf0] sm:$0xff]
    %v2324 = vld [vmem:[#allocation17 + $0xf8] sm:$0xff]
    %v2357 = vunpack.c.l.b16 %v2293
    %v2358 = vunpack.c.h.b16 %v2293
    %v2359 = vunpack.c.l.b16 %v2294
    %v2360 = vunpack.c.h.b16 %v2294
    %v2361 = vunpack.c.l.b16 %v2295
    %v2362 = vunpack.c.h.b16 %v2295
    %v2363 = vunpack.c.l.b16 %v2296
    %v2364 = vunpack.c.h.b16 %v2296
    %v2365 = vunpack.c.l.b16 %v2297
    %v2366 = vunpack.c.h.b16 %v2297
    %v2367 = vunpack.c.l.b16 %v2298
    %v2368 = vunpack.c.h.b16 %v2298
    %v2369 = vunpack.c.l.b16 %v2299
    %v2370 = vunpack.c.h.b16 %v2299
    %v2371 = vunpack.c.l.b16 %v2300
    %v2372 = vunpack.c.h.b16 %v2300
    %v2373 = vunpack.c.l.b16 %v2301
    %v2374 = vunpack.c.h.b16 %v2301
    %v2375 = vunpack.c.l.b16 %v2302
    %v2376 = vunpack.c.h.b16 %v2302
    %v2377 = vunpack.c.l.b16 %v2303
    %v2378 = vunpack.c.h.b16 %v2303
    %v2379 = vunpack.c.l.b16 %v2304
    %v2380 = vunpack.c.h.b16 %v2304
    %v2381 = vunpack.c.l.b16 %v2305
    %v2382 = vunpack.c.h.b16 %v2305
    %v2383 = vunpack.c.l.b16 %v2306
    %v2384 = vunpack.c.h.b16 %v2306
    %v2385 = vunpack.c.l.b16 %v2307
    %v2386 = vunpack.c.h.b16 %v2307
    %v2387 = vunpack.c.l.b16 %v2308
    %v2388 = vunpack.c.h.b16 %v2308
    %v2389 = vunpack.c.l.b16 %v2309
    %v2390 = vunpack.c.h.b16 %v2309
    %v2391 = vunpack.c.l.b16 %v2310
    %v2392 = vunpack.c.h.b16 %v2310
    %v2393 = vunpack.c.l.b16 %v2311
    %v2394 = vunpack.c.h.b16 %v2311
    %v2395 = vunpack.c.l.b16 %v2312
    %v2396 = vunpack.c.h.b16 %v2312
    %v2397 = vunpack.c.l.b16 %v2313
    %v2398 = vunpack.c.h.b16 %v2313
    %v2399 = vunpack.c.l.b16 %v2314
    %v2400 = vunpack.c.h.b16 %v2314
    %v2401 = vunpack.c.l.b16 %v2315
    %v2402 = vunpack.c.h.b16 %v2315
    %v2403 = vunpack.c.l.b16 %v2316
    %v2404 = vunpack.c.h.b16 %v2316
    %v2405 = vunpack.c.l.b16 %v2317
    %v2406 = vunpack.c.h.b16 %v2317
    %v2407 = vunpack.c.l.b16 %v2318
    %v2408 = vunpack.c.h.b16 %v2318
    %v2409 = vunpack.c.l.b16 %v2319
    %v2410 = vunpack.c.h.b16 %v2319
    %v2411 = vunpack.c.l.b16 %v2320
    %v2412 = vunpack.c.h.b16 %v2320
    %v2413 = vunpack.c.l.b16 %v2321
    %v2414 = vunpack.c.h.b16 %v2321
    %v2415 = vunpack.c.l.b16 %v2322
    %v2416 = vunpack.c.h.b16 %v2322
    %v2417 = vunpack.c.l.b16 %v2323
    %v2418 = vunpack.c.h.b16 %v2323
    %v2419 = vunpack.c.l.b16 %v2324
    %v2420 = vunpack.c.h.b16 %v2324
    %v2421 = vpack.c.b16 %v2361, %v2357
    %v2422 = vpack.c.b16 %v2362, %v2358
    %v2423 = vpack.c.b16 %v2363, %v2359
    %v2424 = vpack.c.b16 %v2364, %v2360
    %v2425 = vpack.c.b16 %v2369, %v2365
    %v2426 = vpack.c.b16 %v2370, %v2366
    %v2427 = vpack.c.b16 %v2371, %v2367
    %v2428 = vpack.c.b16 %v2372, %v2368
    %v2429 = vpack.c.b16 %v2377, %v2373
    %v2430 = vpack.c.b16 %v2378, %v2374
    %v2431 = vpack.c.b16 %v2379, %v2375
    %v2432 = vpack.c.b16 %v2380, %v2376
    %v2433 = vpack.c.b16 %v2385, %v2381
    %v2434 = vpack.c.b16 %v2386, %v2382
    %v2435 = vpack.c.b16 %v2387, %v2383
    %v2436 = vpack.c.b16 %v2388, %v2384
    %v2437 = vpack.c.b16 %v2393, %v2389
    %v2438 = vpack.c.b16 %v2394, %v2390
    %v2439 = vpack.c.b16 %v2395, %v2391
    %v2440 = vpack.c.b16 %v2396, %v2392
    %v2441 = vpack.c.b16 %v2401, %v2397
    %v2442 = vpack.c.b16 %v2402, %v2398
    %v2443 = vpack.c.b16 %v2403, %v2399
    %v2444 = vpack.c.b16 %v2404, %v2400
    %v2445 = vpack.c.b16 %v2409, %v2405
    %v2446 = vpack.c.b16 %v2410, %v2406
    %v2447 = vpack.c.b16 %v2411, %v2407
    %v2448 = vpack.c.b16 %v2412, %v2408
    %v2449 = vpack.c.b16 %v2417, %v2413
    %v2450 = vpack.c.b16 %v2418, %v2414
    %v2451 = vpack.c.b16 %v2419, %v2415
    %v2452 = vpack.c.b16 %v2420, %v2416
    %2485 = vmatprep.subr.bf16.mxu0 %v2450
    %2486 = vmatpush1.bf16.msra.mxu0 %v2449
    %2487 = vmatprep.subr.bf16.mxu0 %v2446
    %2488 = vmatpush1.bf16.msra.mxu0 %v2445
    %2489 = vmatprep.subr.bf16.mxu0 %v2442
    %2490 = vmatpush1.bf16.msra.mxu0 %v2441
    %2491 = vmatprep.subr.bf16.mxu0 %v2438
    %2492 = vmatpush1.bf16.msra.mxu0 %v2437
    %2493 = vmatprep.subr.bf16.mxu0 %v2434
    %2494 = vmatpush1.bf16.msra.mxu0 %v2433
    %2495 = vmatprep.subr.bf16.mxu0 %v2430
    %2496 = vmatpush1.bf16.msra.mxu0 %v2429
    %2497 = vmatprep.subr.bf16.mxu0 %v2426
    %2498 = vmatpush1.bf16.msra.mxu0 %v2425
    %2499 = vmatprep.subr.bf16.mxu0 %v2422
    %2500 = vmatpush1.bf16.msra.mxu0 %v2421
    %2501 = vmatprep.subr.bf16.mxu0 0
    %2502 = vmatpush2.bf16.msra.mxu0 0
    %2503 = vmatprep.subr.bf16.mxu0 0
    %2504 = vmatpush2.bf16.msra.mxu0 0
    %2505 = vmatprep.subr.bf16.mxu0 0
    %2506 = vmatpush2.bf16.msra.mxu0 0
    %2507 = vmatprep.subr.bf16.mxu0 0
    %2508 = vmatpush2.bf16.msra.mxu0 0
    %2509 = vmatprep.subr.bf16.mxu0 0
    %2510 = vmatpush2.bf16.msra.mxu0 0
    %2511 = vmatprep.subr.bf16.mxu0 0
    %2512 = vmatpush2.bf16.msra.mxu0 0
    %2513 = vmatprep.subr.bf16.mxu0 0
    %2514 = vmatpush2.bf16.msra.mxu0 0
    %2515 = vmatprep.subr.bf16.mxu0 0
    %2516 = vmatpush2.bf16.msra.mxu0 0
    %2517 = vmatprep.mubr.bf16.mxu0 0
    %2518 = vmatmul.mubr.bf16.gmra.mxu0 %v2292
    %v2519 = vpop.f32.mrf.mxu0
    %v2520 = vadd.f32 0.0, %v2519
    %v2521 = vpop.f32.mrf.mxu0
    %v2522 = vadd.f32 0.0, %v2521
    %v2523 = vpop.f32.mrf.mxu0
    %v2524 = vadd.f32 0.0, %v2523
    %v2525 = vpop.f32.mrf.mxu0
    %v2526 = vadd.f32 0.0, %v2525
    %2527 = vdwg.mxu0
    %2528 = vmatprep.subr.bf16.mxu0 %v2452
    %2529 = vmatpush1.bf16.msra.mxu0 %v2451
    %2530 = vmatprep.subr.bf16.mxu0 %v2448
    %2531 = vmatpush1.bf16.msra.mxu0 %v2447
    %2532 = vmatprep.subr.bf16.mxu0 %v2444
    %2533 = vmatpush1.bf16.msra.mxu0 %v2443
    %2534 = vmatprep.subr.bf16.mxu0 %v2440
    %2535 = vmatpush1.bf16.msra.mxu0 %v2439
    %2536 = vmatprep.subr.bf16.mxu0 %v2436
    %2537 = vmatpush1.bf16.msra.mxu0 %v2435
    %2538 = vmatprep.subr.bf16.mxu0 %v2432
    %2539 = vmatpush1.bf16.msra.mxu0 %v2431
    %2540 = vmatprep.subr.bf16.mxu0 %v2428
    %2541 = vmatpush1.bf16.msra.mxu0 %v2427
    %2542 = vmatprep.subr.bf16.mxu0 %v2424
    %2543 = vmatpush1.bf16.msra.mxu0 %v2423
    %2544 = vmatprep.subr.bf16.mxu0 0
    %2545 = vmatpush2.bf16.msra.mxu0 0
    %2546 = vmatprep.subr.bf16.mxu0 0
    %2547 = vmatpush2.bf16.msra.mxu0 0
    %2548 = vmatprep.subr.bf16.mxu0 0
    %2549 = vmatpush2.bf16.msra.mxu0 0
    %2550 = vmatprep.subr.bf16.mxu0 0
    %2551 = vmatpush2.bf16.msra.mxu0 0
    %2552 = vmatprep.subr.bf16.mxu0 0
    %2553 = vmatpush2.bf16.msra.mxu0 0
    %2554 = vmatprep.subr.bf16.mxu0 0
    %2555 = vmatpush2.bf16.msra.mxu0 0
    %2556 = vmatprep.subr.bf16.mxu0 0
    %2557 = vmatpush2.bf16.msra.mxu0 0
    %2558 = vmatprep.subr.bf16.mxu0 0
    %2559 = vmatpush2.bf16.msra.mxu0 0
    %2560 = vmatprep.mubr.bf16.mxu0 0
    %2561 = vmatmul.mubr.bf16.gmra.mxu0 %v2292
    %v2562 = vpop.f32.mrf.mxu0
    %v2563 = vadd.f32 0.0, %v2562
    %v2564 = vpop.f32.mrf.mxu0
    %v2565 = vadd.f32 0.0, %v2564
    %v2566 = vpop.f32.mrf.mxu0
    %v2567 = vadd.f32 0.0, %v2566
    %v2568 = vpop.f32.mrf.mxu0
    %v2569 = vadd.f32 0.0, %v2568
    %2570 = vdwg.mxu0
    %v2571 = vld [vmem:[#allocation16] sm:$0xff]
    %v2572 = vld [vmem:[#allocation16 + $0x8] sm:$0xff]
    %v2573 = vld [vmem:[#allocation16 + $0x10] sm:$0xff]
    %v2574 = vld [vmem:[#allocation16 + $0x18] sm:$0xff]
    %s2575 = scalar_lea.vmem [#allocation16], 32
    %v2576 = vld [vmem:[%s2575] sm:$0xff]
    %v2577 = vld [vmem:[%s2575 + $0x8] sm:$0xff]
    %v2578 = vld [vmem:[%s2575 + $0x10] sm:$0xff]
    %v2579 = vld [vmem:[%s2575 + $0x18] sm:$0xff]
    %v2581 = vsel %vm265, %v2576, 0
    %v2584 = vsel %vm265, %v2577, 0
    %v2587 = vsel %vm265, %v2578, 0
    %v2590 = vsel %vm265, %v2579, 0
    %2592 = vmatprep.subr.mxu0 0.0
    %2593 = vmatpush1.msra.mxu0 0.0
    %2594 = vmatprep.subr.mxu0 0.0
    %2595 = vmatpush1.msra.mxu0 0.0
    %2596 = vmatprep.subr.mxu0 0.0
    %2597 = vmatpush1.msra.mxu0 0.0
    %2598 = vmatprep.subr.mxu0 0.0
    %2599 = vmatpush1.msra.mxu0 0.0
    %2600 = vmatprep.subr.mxu0 0.0
    %2601 = vmatpush1.msra.mxu0 0.0
    %2602 = vmatprep.subr.mxu0 0.0
    %2603 = vmatpush1.msra.mxu0 0.0
    %2604 = vmatprep.subr.mxu0 0.0
    %2605 = vmatpush1.msra.mxu0 0.0
    %2606 = vmatprep.subr.mxu0 0.0
    %2607 = vmatpush1.msra.mxu0 0.0
    %2608 = vmatprep.subr.mxu0 0.0
    %2609 = vmatpush1.msra.mxu0 0.0
    %2610 = vmatprep.subr.mxu0 0.0
    %2611 = vmatpush1.msra.mxu0 0.0
    %2612 = vmatprep.subr.mxu0 0.0
    %2613 = vmatpush1.msra.mxu0 0.0
    %2614 = vmatprep.subr.mxu0 0.0
    %2615 = vmatpush1.msra.mxu0 0.0
    %2616 = vmatprep.subr.mxu0 0.0
    %2617 = vmatpush1.msra.mxu0 0.0
    %2618 = vmatprep.subr.mxu0 0.0
    %2619 = vmatpush1.msra.mxu0 0.0
    %2620 = vmatprep.subr.mxu0 0.0
    %2621 = vmatpush1.msra.mxu0 %v2526
    %2622 = vmatprep.subr.mxu0 0.0
    %2623 = vmatpush1.msra.mxu0 %v2522
    %2624 = vmatprep.subr.mxu0 0.0
    %2625 = vmatpush2.msra.mxu0 0.0
    %2626 = vmatprep.subr.mxu0 0.0
    %2627 = vmatpush2.msra.mxu0 0.0
    %2628 = vmatprep.subr.mxu0 0.0
    %2629 = vmatpush2.msra.mxu0 0.0
    %2630 = vmatprep.subr.mxu0 0.0
    %2631 = vmatpush2.msra.mxu0 0.0
    %2632 = vmatprep.subr.mxu0 0.0
    %2633 = vmatpush2.msra.mxu0 0.0
    %2634 = vmatprep.subr.mxu0 0.0
    %2635 = vmatpush2.msra.mxu0 0.0
    %2636 = vmatprep.subr.mxu0 0.0
    %2637 = vmatpush2.msra.mxu0 0.0
    %2638 = vmatprep.subr.mxu0 0.0
    %2639 = vmatpush2.msra.mxu0 0.0
    %2640 = vmatprep.subr.mxu0 0.0
    %2641 = vmatpush2.msra.mxu0 0.0
    %2642 = vmatprep.subr.mxu0 0.0
    %2643 = vmatpush2.msra.mxu0 0.0
    %2644 = vmatprep.subr.mxu0 0.0
    %2645 = vmatpush2.msra.mxu0 0.0
    %2646 = vmatprep.subr.mxu0 0.0
    %2647 = vmatpush2.msra.mxu0 0.0
    %2648 = vmatprep.subr.mxu0 0.0
    %2649 = vmatpush2.msra.mxu0 0.0
    %2650 = vmatprep.subr.mxu0 0.0
    %2651 = vmatpush2.msra.mxu0 0.0
    %2652 = vmatprep.subr.mxu0 0.0
    %2653 = vmatpush2.msra.mxu0 0.0
    %2654 = vmatprep.subr.mxu0 0.0
    %2655 = vmatpush2.msra.mxu0 0.0
    %2656 = vmatprep.mubr.f32.mxu0 0.0
    %2657 = vmatmul.mubr.f32.gmra.mxu0 %v2581
    %v2658 = vpop.f32.mrf.mxu0
    %v2659 = vadd.f32 0.0, %v2658
    %v2660 = vpop.f32.mrf.mxu0
    %2661 = vmatprep.mubr.f32.mxu0 0.0
    %2662 = vmatmul.mubr.f32.gmra.mxu0 %v2584
    %v2663 = vpop.f32.mrf.mxu0
    %v2664 = vadd.f32 0.0, %v2663
    %v2665 = vpop.f32.mrf.mxu0
    %2666 = vmatprep.mubr.f32.mxu0 0.0
    %2667 = vmatmul.mubr.f32.gmra.mxu0 %v2587
    %v2668 = vpop.f32.mrf.mxu0
    %v2669 = vadd.f32 0.0, %v2668
    %v2670 = vpop.f32.mrf.mxu0
    %2671 = vmatprep.mubr.f32.mxu0 0.0
    %2672 = vmatmul.mubr.f32.gmra.mxu0 %v2590
    %v2673 = vpop.f32.mrf.mxu0
    %v2674 = vadd.f32 0.0, %v2673
    %v2675 = vpop.f32.mrf.mxu0
    %2676 = vdwg.mxu0
    %v2678 = vsel %vm265, %v2571, 0
    %v2681 = vsel %vm265, %v2572, 0
    %v2684 = vsel %vm265, %v2573, 0
    %v2687 = vsel %vm265, %v2574, 0
    %2689 = vmatprep.subr.mxu0 0.0
    %2690 = vmatpush1.msra.mxu0 0.0
    %2691 = vmatprep.subr.mxu0 0.0
    %2692 = vmatpush1.msra.mxu0 0.0
    %2693 = vmatprep.subr.mxu0 0.0
    %2694 = vmatpush1.msra.mxu0 0.0
    %2695 = vmatprep.subr.mxu0 0.0
    %2696 = vmatpush1.msra.mxu0 0.0
    %2697 = vmatprep.subr.mxu0 0.0
    %2698 = vmatpush1.msra.mxu0 0.0
    %2699 = vmatprep.subr.mxu0 0.0
    %2700 = vmatpush1.msra.mxu0 0.0
    %2701 = vmatprep.subr.mxu0 0.0
    %2702 = vmatpush1.msra.mxu0 0.0
    %2703 = vmatprep.subr.mxu0 0.0
    %2704 = vmatpush1.msra.mxu0 0.0
    %2705 = vmatprep.subr.mxu0 0.0
    %2706 = vmatpush1.msra.mxu0 0.0
    %2707 = vmatprep.subr.mxu0 0.0
    %2708 = vmatpush1.msra.mxu0 0.0
    %2709 = vmatprep.subr.mxu0 0.0
    %2710 = vmatpush1.msra.mxu0 0.0
    %2711 = vmatprep.subr.mxu0 0.0
    %2712 = vmatpush1.msra.mxu0 0.0
    %2713 = vmatprep.subr.mxu0 0.0
    %2714 = vmatpush1.msra.mxu0 0.0
    %2715 = vmatprep.subr.mxu0 0.0
    %2716 = vmatpush1.msra.mxu0 0.0
    %2717 = vmatprep.subr.mxu0 0.0
    %2718 = vmatpush1.msra.mxu0 %v2524
    %2719 = vmatprep.subr.mxu0 0.0
    %2720 = vmatpush1.msra.mxu0 %v2520
    %2721 = vmatprep.subr.mxu0 0.0
    %2722 = vmatpush2.msra.mxu0 0.0
    %2723 = vmatprep.subr.mxu0 0.0
    %2724 = vmatpush2.msra.mxu0 0.0
    %2725 = vmatprep.subr.mxu0 0.0
    %2726 = vmatpush2.msra.mxu0 0.0
    %2727 = vmatprep.subr.mxu0 0.0
    %2728 = vmatpush2.msra.mxu0 0.0
    %2729 = vmatprep.subr.mxu0 0.0
    %2730 = vmatpush2.msra.mxu0 0.0
    %2731 = vmatprep.subr.mxu0 0.0
    %2732 = vmatpush2.msra.mxu0 0.0
    %2733 = vmatprep.subr.mxu0 0.0
    %2734 = vmatpush2.msra.mxu0 0.0
    %2735 = vmatprep.subr.mxu0 0.0
    %2736 = vmatpush2.msra.mxu0 0.0
    %2737 = vmatprep.subr.mxu0 0.0
    %2738 = vmatpush2.msra.mxu0 0.0
    %2739 = vmatprep.subr.mxu0 0.0
    %2740 = vmatpush2.msra.mxu0 0.0
    %2741 = vmatprep.subr.mxu0 0.0
    %2742 = vmatpush2.msra.mxu0 0.0
    %2743 = vmatprep.subr.mxu0 0.0
    %2744 = vmatpush2.msra.mxu0 0.0
    %2745 = vmatprep.subr.mxu0 0.0
    %2746 = vmatpush2.msra.mxu0 0.0
    %2747 = vmatprep.subr.mxu0 0.0
    %2748 = vmatpush2.msra.mxu0 0.0
    %2749 = vmatprep.subr.mxu0 0.0
    %2750 = vmatpush2.msra.mxu0 0.0
    %2751 = vmatprep.subr.mxu0 0.0
    %2752 = vmatpush2.msra.mxu0 0.0
    %2753 = vmatprep.mubr.f32.mxu0 0.0
    %2754 = vmatmul.mubr.f32.gmra.mxu0 %v2678
    %v2755 = vpop.f32.mrf.mxu0
    %v2756 = vadd.f32 %v2659, %v2755
    %v2757 = vpop.f32.mrf.mxu0
    %2758 = vmatprep.mubr.f32.mxu0 0.0
    %2759 = vmatmul.mubr.f32.gmra.mxu0 %v2681
    %v2760 = vpop.f32.mrf.mxu0
    %v2761 = vadd.f32 %v2664, %v2760
    %v2762 = vpop.f32.mrf.mxu0
    %2763 = vmatprep.mubr.f32.mxu0 0.0
    %2764 = vmatmul.mubr.f32.gmra.mxu0 %v2684
    %v2765 = vpop.f32.mrf.mxu0
    %v2766 = vadd.f32 %v2669, %v2765
    %v2767 = vpop.f32.mrf.mxu0
    %2768 = vmatprep.mubr.f32.mxu0 0.0
    %2769 = vmatmul.mubr.f32.gmra.mxu0 %v2687
    %v2770 = vpop.f32.mrf.mxu0
    %v2771 = vadd.f32 %v2674, %v2770
    %v2772 = vpop.f32.mrf.mxu0
    %2773 = vdwg.mxu0
    %s2774 = scalar_lea.vmem [#allocation16], 64
    %v2775 = vld [vmem:[%s2774] sm:$0xff]
    %v2776 = vld [vmem:[%s2774 + $0x8] sm:$0xff]
    %v2777 = vld [vmem:[%s2774 + $0x10] sm:$0xff]
    %v2778 = vld [vmem:[%s2774 + $0x18] sm:$0xff]
    %v2780 = vsel %vm265, %v2775, 0
    %v2783 = vsel %vm265, %v2776, 0
    %v2786 = vsel %vm265, %v2777, 0
    %v2789 = vsel %vm265, %v2778, 0
    %2791 = vmatprep.subr.mxu0 0.0
    %2792 = vmatpush1.msra.mxu0 0.0
    %2793 = vmatprep.subr.mxu0 0.0
    %2794 = vmatpush1.msra.mxu0 0.0
    %2795 = vmatprep.subr.mxu0 0.0
    %2796 = vmatpush1.msra.mxu0 0.0
    %2797 = vmatprep.subr.mxu0 0.0
    %2798 = vmatpush1.msra.mxu0 0.0
    %2799 = vmatprep.subr.mxu0 0.0
    %2800 = vmatpush1.msra.mxu0 0.0
    %2801 = vmatprep.subr.mxu0 0.0
    %2802 = vmatpush1.msra.mxu0 0.0
    %2803 = vmatprep.subr.mxu0 0.0
    %2804 = vmatpush1.msra.mxu0 0.0
    %2805 = vmatprep.subr.mxu0 0.0
    %2806 = vmatpush1.msra.mxu0 0.0
    %2807 = vmatprep.subr.mxu0 0.0
    %2808 = vmatpush1.msra.mxu0 0.0
    %2809 = vmatprep.subr.mxu0 0.0
    %2810 = vmatpush1.msra.mxu0 0.0
    %2811 = vmatprep.subr.mxu0 0.0
    %2812 = vmatpush1.msra.mxu0 0.0
    %2813 = vmatprep.subr.mxu0 0.0
    %2814 = vmatpush1.msra.mxu0 0.0
    %2815 = vmatprep.subr.mxu0 0.0
    %2816 = vmatpush1.msra.mxu0 0.0
    %2817 = vmatprep.subr.mxu0 0.0
    %2818 = vmatpush1.msra.mxu0 0.0
    %2819 = vmatprep.subr.mxu0 0.0
    %2820 = vmatpush1.msra.mxu0 %v2567
    %2821 = vmatprep.subr.mxu0 0.0
    %2822 = vmatpush1.msra.mxu0 %v2563
    %2823 = vmatprep.subr.mxu0 0.0
    %2824 = vmatpush2.msra.mxu0 0.0
    %2825 = vmatprep.subr.mxu0 0.0
    %2826 = vmatpush2.msra.mxu0 0.0
    %2827 = vmatprep.subr.mxu0 0.0
    %2828 = vmatpush2.msra.mxu0 0.0
    %2829 = vmatprep.subr.mxu0 0.0
    %2830 = vmatpush2.msra.mxu0 0.0
    %2831 = vmatprep.subr.mxu0 0.0
    %2832 = vmatpush2.msra.mxu0 0.0
    %2833 = vmatprep.subr.mxu0 0.0
    %2834 = vmatpush2.msra.mxu0 0.0
    %2835 = vmatprep.subr.mxu0 0.0
    %2836 = vmatpush2.msra.mxu0 0.0
    %2837 = vmatprep.subr.mxu0 0.0
    %2838 = vmatpush2.msra.mxu0 0.0
    %2839 = vmatprep.subr.mxu0 0.0
    %2840 = vmatpush2.msra.mxu0 0.0
    %2841 = vmatprep.subr.mxu0 0.0
    %2842 = vmatpush2.msra.mxu0 0.0
    %2843 = vmatprep.subr.mxu0 0.0
    %2844 = vmatpush2.msra.mxu0 0.0
    %2845 = vmatprep.subr.mxu0 0.0
    %2846 = vmatpush2.msra.mxu0 0.0
    %2847 = vmatprep.subr.mxu0 0.0
    %2848 = vmatpush2.msra.mxu0 0.0
    %2849 = vmatprep.subr.mxu0 0.0
    %2850 = vmatpush2.msra.mxu0 0.0
    %2851 = vmatprep.subr.mxu0 0.0
    %2852 = vmatpush2.msra.mxu0 0.0
    %2853 = vmatprep.subr.mxu0 0.0
    %2854 = vmatpush2.msra.mxu0 0.0
    %2855 = vmatprep.mubr.f32.mxu0 0.0
    %2856 = vmatmul.mubr.f32.gmra.mxu0 %v2780
    %v2857 = vpop.f32.mrf.mxu0
    %v2858 = vadd.f32 0.0, %v2857
    %v2859 = vpop.f32.mrf.mxu0
    %2860 = vmatprep.mubr.f32.mxu0 0.0
    %2861 = vmatmul.mubr.f32.gmra.mxu0 %v2783
    %v2862 = vpop.f32.mrf.mxu0
    %v2863 = vadd.f32 0.0, %v2862
    %v2864 = vpop.f32.mrf.mxu0
    %2865 = vmatprep.mubr.f32.mxu0 0.0
    %2866 = vmatmul.mubr.f32.gmra.mxu0 %v2786
    %v2867 = vpop.f32.mrf.mxu0
    %v2868 = vadd.f32 0.0, %v2867
    %v2869 = vpop.f32.mrf.mxu0
    %2870 = vmatprep.mubr.f32.mxu0 0.0
    %2871 = vmatmul.mubr.f32.gmra.mxu0 %v2789
    %v2872 = vpop.f32.mrf.mxu0
    %v2873 = vadd.f32 0.0, %v2872
    %v2874 = vpop.f32.mrf.mxu0
    %2875 = vdwg.mxu0
    %v2876 = vadd.f32 %v2756, %v2858
    %v2877 = vadd.f32 %v2761, %v2863
    %v2878 = vadd.f32 %v2766, %v2868
    %v2879 = vadd.f32 %v2771, %v2873
    %s2880 = scalar_lea.vmem [#allocation16], 96
    %v2881 = vld [vmem:[%s2880] sm:$0xff]
    %v2882 = vld [vmem:[%s2880 + $0x8] sm:$0xff]
    %v2883 = vld [vmem:[%s2880 + $0x10] sm:$0xff]
    %v2884 = vld [vmem:[%s2880 + $0x18] sm:$0xff]
    %v2886 = vsel %vm265, %v2881, 0
    %v2889 = vsel %vm265, %v2882, 0
    %v2892 = vsel %vm265, %v2883, 0
    %v2895 = vsel %vm265, %v2884, 0
    %2897 = vmatprep.subr.mxu0 0.0
    %2898 = vmatpush1.msra.mxu0 0.0
    %2899 = vmatprep.subr.mxu0 0.0
    %2900 = vmatpush1.msra.mxu0 0.0
    %2901 = vmatprep.subr.mxu0 0.0
    %2902 = vmatpush1.msra.mxu0 0.0
    %2903 = vmatprep.subr.mxu0 0.0
    %2904 = vmatpush1.msra.mxu0 0.0
    %2905 = vmatprep.subr.mxu0 0.0
    %2906 = vmatpush1.msra.mxu0 0.0
    %2907 = vmatprep.subr.mxu0 0.0
    %2908 = vmatpush1.msra.mxu0 0.0
    %2909 = vmatprep.subr.mxu0 0.0
    %2910 = vmatpush1.msra.mxu0 0.0
    %2911 = vmatprep.subr.mxu0 0.0
    %2912 = vmatpush1.msra.mxu0 0.0
    %2913 = vmatprep.subr.mxu0 0.0
    %2914 = vmatpush1.msra.mxu0 0.0
    %2915 = vmatprep.subr.mxu0 0.0
    %2916 = vmatpush1.msra.mxu0 0.0
    %2917 = vmatprep.subr.mxu0 0.0
    %2918 = vmatpush1.msra.mxu0 0.0
    %2919 = vmatprep.subr.mxu0 0.0
    %2920 = vmatpush1.msra.mxu0 0.0
    %2921 = vmatprep.subr.mxu0 0.0
    %2922 = vmatpush1.msra.mxu0 0.0
    %2923 = vmatprep.subr.mxu0 0.0
    %2924 = vmatpush1.msra.mxu0 0.0
    %2925 = vmatprep.subr.mxu0 0.0
    %2926 = vmatpush1.msra.mxu0 %v2569
    %2927 = vmatprep.subr.mxu0 0.0
    %2928 = vmatpush1.msra.mxu0 %v2565
    %2929 = vmatprep.subr.mxu0 0.0
    %2930 = vmatpush2.msra.mxu0 0.0
    %2931 = vmatprep.subr.mxu0 0.0
    %2932 = vmatpush2.msra.mxu0 0.0
    %2933 = vmatprep.subr.mxu0 0.0
    %2934 = vmatpush2.msra.mxu0 0.0
    %2935 = vmatprep.subr.mxu0 0.0
    %2936 = vmatpush2.msra.mxu0 0.0
    %2937 = vmatprep.subr.mxu0 0.0
    %2938 = vmatpush2.msra.mxu0 0.0
    %2939 = vmatprep.subr.mxu0 0.0
    %2940 = vmatpush2.msra.mxu0 0.0
    %2941 = vmatprep.subr.mxu0 0.0
    %2942 = vmatpush2.msra.mxu0 0.0
    %2943 = vmatprep.subr.mxu0 0.0
    %2944 = vmatpush2.msra.mxu0 0.0
    %2945 = vmatprep.subr.mxu0 0.0
    %2946 = vmatpush2.msra.mxu0 0.0
    %2947 = vmatprep.subr.mxu0 0.0
    %2948 = vmatpush2.msra.mxu0 0.0
    %2949 = vmatprep.subr.mxu0 0.0
    %2950 = vmatpush2.msra.mxu0 0.0
    %2951 = vmatprep.subr.mxu0 0.0
    %2952 = vmatpush2.msra.mxu0 0.0
    %2953 = vmatprep.subr.mxu0 0.0
    %2954 = vmatpush2.msra.mxu0 0.0
    %2955 = vmatprep.subr.mxu0 0.0
    %2956 = vmatpush2.msra.mxu0 0.0
    %2957 = vmatprep.subr.mxu0 0.0
    %2958 = vmatpush2.msra.mxu0 0.0
    %2959 = vmatprep.subr.mxu0 0.0
    %2960 = vmatpush2.msra.mxu0 0.0
    %2961 = vmatprep.mubr.f32.mxu0 0.0
    %2962 = vmatmul.mubr.f32.gmra.mxu0 %v2886
    %v2963 = vpop.f32.mrf.mxu0
    %v2964 = vadd.f32 0.0, %v2963
    %v2965 = vpop.f32.mrf.mxu0
    %2966 = vmatprep.mubr.f32.mxu0 0.0
    %2967 = vmatmul.mubr.f32.gmra.mxu0 %v2889
    %v2968 = vpop.f32.mrf.mxu0
    %v2969 = vadd.f32 0.0, %v2968
    %v2970 = vpop.f32.mrf.mxu0
    %2971 = vmatprep.mubr.f32.mxu0 0.0
    %2972 = vmatmul.mubr.f32.gmra.mxu0 %v2892
    %v2973 = vpop.f32.mrf.mxu0
    %v2974 = vadd.f32 0.0, %v2973
    %v2975 = vpop.f32.mrf.mxu0
    %2976 = vmatprep.mubr.f32.mxu0 0.0
    %2977 = vmatmul.mubr.f32.gmra.mxu0 %v2895
    %v2978 = vpop.f32.mrf.mxu0
    %v2979 = vadd.f32 0.0, %v2978
    %v2980 = vpop.f32.mrf.mxu0
    %2981 = vdwg.mxu0
    %v2982 = vadd.f32 %v2876, %v2964
    %v2983 = vadd.f32 %v2877, %v2969
    %v2984 = vadd.f32 %v2878, %v2974
    %v2985 = vadd.f32 %v2879, %v2979
    %v2986 = vld [vmem:[#allocation19] sm:$0xff]
    %v2987 = vld [vmem:[#allocation19 + $0x8] sm:$0xff]
    %v2988 = vld [vmem:[#allocation19 + $0x10] sm:$0xff]
    %v2989 = vld [vmem:[#allocation19 + $0x18] sm:$0xff]
    %v2990 = vld [vmem:[#allocation19 + $0x20] sm:$0xff]
    %v2991 = vld [vmem:[#allocation19 + $0x28] sm:$0xff]
    %v2992 = vld [vmem:[#allocation19 + $0x30] sm:$0xff]
    %v2993 = vld [vmem:[#allocation19 + $0x38] sm:$0xff]
    %v2994 = vld [vmem:[#allocation19 + $0x40] sm:$0xff]
    %v2995 = vld [vmem:[#allocation19 + $0x48] sm:$0xff]
    %v2996 = vld [vmem:[#allocation19 + $0x50] sm:$0xff]
    %v2997 = vld [vmem:[#allocation19 + $0x58] sm:$0xff]
    %v2998 = vld [vmem:[#allocation19 + $0x60] sm:$0xff]
    %v2999 = vld [vmem:[#allocation19 + $0x68] sm:$0xff]
    %v3000 = vld [vmem:[#allocation19 + $0x70] sm:$0xff]
    %v3001 = vld [vmem:[#allocation19 + $0x78] sm:$0xff]
    %v3002 = vadd.f32 %v2982, %v2983
    %v3003 = vadd.f32 %v3002, %v2984
    %v3004 = vadd.f32 %v3003, %v2985
    %v3005 = vrot.slane %v3004, 4
    %v3006 = vadd.f32 %v3004, %v3005
    %v3007 = vrot.slane %v3006, 2
    %v3008 = vadd.f32 %v3006, %v3007
    %v3009 = vrot.slane %v3008, 1
    %v3010 = vadd.f32 %v3008, %v3009
    %3011 = vmatprep.subr.mxu0 0.0
    %3012 = vmatpush1.msra.mxu0 %v3001
    %3013 = vmatprep.subr.mxu0 0.0
    %3014 = vmatpush1.msra.mxu0 %v3000
    %3015 = vmatprep.subr.mxu0 0.0
    %3016 = vmatpush1.msra.mxu0 %v2999
    %3017 = vmatprep.subr.mxu0 0.0
    %3018 = vmatpush1.msra.mxu0 %v2998
    %3019 = vmatprep.subr.mxu0 0.0
    %3020 = vmatpush1.msra.mxu0 %v2997
    %3021 = vmatprep.subr.mxu0 0.0
    %3022 = vmatpush1.msra.mxu0 %v2996
    %3023 = vmatprep.subr.mxu0 0.0
    %3024 = vmatpush1.msra.mxu0 %v2995
    %3025 = vmatprep.subr.mxu0 0.0
    %3026 = vmatpush1.msra.mxu0 %v2994
    %3027 = vmatprep.subr.mxu0 0.0
    %3028 = vmatpush1.msra.mxu0 %v2993
    %3029 = vmatprep.subr.mxu0 0.0
    %3030 = vmatpush1.msra.mxu0 %v2992
    %3031 = vmatprep.subr.mxu0 0.0
    %3032 = vmatpush1.msra.mxu0 %v2991
    %3033 = vmatprep.subr.mxu0 0.0
    %3034 = vmatpush1.msra.mxu0 %v2990
    %3035 = vmatprep.subr.mxu0 0.0
    %3036 = vmatpush1.msra.mxu0 %v2989
    %3037 = vmatprep.subr.mxu0 0.0
    %3038 = vmatpush1.msra.mxu0 %v2988
    %3039 = vmatprep.subr.mxu0 0.0
    %3040 = vmatpush1.msra.mxu0 %v2987
    %3041 = vmatprep.subr.mxu0 0.0
    %3042 = vmatpush1.msra.mxu0 %v2986
    %3043 = vmatprep.subr.mxu0 0.0
    %3044 = vmatpush2.msra.mxu0 0.0
    %3045 = vmatprep.subr.mxu0 0.0
    %3046 = vmatpush2.msra.mxu0 0.0
    %3047 = vmatprep.subr.mxu0 0.0
    %3048 = vmatpush2.msra.mxu0 0.0
    %3049 = vmatprep.subr.mxu0 0.0
    %3050 = vmatpush2.msra.mxu0 0.0
    %3051 = vmatprep.subr.mxu0 0.0
    %3052 = vmatpush2.msra.mxu0 0.0
    %3053 = vmatprep.subr.mxu0 0.0
    %3054 = vmatpush2.msra.mxu0 0.0
    %3055 = vmatprep.subr.mxu0 0.0
    %3056 = vmatpush2.msra.mxu0 0.0
    %3057 = vmatprep.subr.mxu0 0.0
    %3058 = vmatpush2.msra.mxu0 0.0
    %3059 = vmatprep.subr.mxu0 0.0
    %3060 = vmatpush2.msra.mxu0 0.0
    %3061 = vmatprep.subr.mxu0 0.0
    %3062 = vmatpush2.msra.mxu0 0.0
    %3063 = vmatprep.subr.mxu0 0.0
    %3064 = vmatpush2.msra.mxu0 0.0
    %3065 = vmatprep.subr.mxu0 0.0
    %3066 = vmatpush2.msra.mxu0 0.0
    %3067 = vmatprep.subr.mxu0 0.0
    %3068 = vmatpush2.msra.mxu0 0.0
    %3069 = vmatprep.subr.mxu0 0.0
    %3070 = vmatpush2.msra.mxu0 0.0
    %3071 = vmatprep.subr.mxu0 0.0
    %3072 = vmatpush2.msra.mxu0 0.0
    %3073 = vmatprep.subr.mxu0 0.0
    %3074 = vmatpush2.msra.mxu0 0.0
    %3075 = vmatprep.mubr.f32.mxu0 0.0
    %3076 = vmatmul.mubr.f32.gmra.mxu0 %v3010
    %v3077 = vpop.f32.mrf.mxu0
    %v3078 = vadd.f32 0.0, %v3077
    %v3079 = vpop.f32.mrf.mxu0
    %3080 = vdwg.mxu0
    %v3081 = vlaneseq
    %v3082 = vshrl.u32 %v3081, 7
    %v3083 = vsub.s32 0, %v3082
    %v3084 = vrot.slane %v3078, %v3083
    %v3085 = vsub.f32 %v2982, %v3084
    %v3086 = vsub.f32 %v2983, %v3084
    %v3087 = vsub.f32 %v2984, %v3084
    %v3088 = vsub.f32 %v2985, %v3084
    %v3089 = vmul.f32 %v3085, %v3085
    %v3090 = vmul.f32 %v3086, %v3086
    %v3091 = vmul.f32 %v3087, %v3087
    %v3092 = vmul.f32 %v3088, %v3088
    %v3093 = vadd.f32 %v3089, %v3090
    %v3094 = vadd.f32 %v3093, %v3091
    %v3095 = vadd.f32 %v3094, %v3092
    %v3096 = vrot.slane %v3095, 4
    %v3097 = vadd.f32 %v3095, %v3096
    %v3098 = vrot.slane %v3097, 2
    %v3099 = vadd.f32 %v3097, %v3098
    %v3100 = vrot.slane %v3099, 1
    %v3101 = vadd.f32 %v3099, %v3100
    %v3102 = vld [vmem:[%s19] sm:$0x1]
    %3103 = vmatprep.subr.mxu0 0.0
    %3104 = vmatpush1.msra.mxu0 %v3001
    %3105 = vmatprep.subr.mxu0 0.0
    %3106 = vmatpush1.msra.mxu0 %v3000
    %3107 = vmatprep.subr.mxu0 0.0
    %3108 = vmatpush1.msra.mxu0 %v2999
    %3109 = vmatprep.subr.mxu0 0.0
    %3110 = vmatpush1.msra.mxu0 %v2998
    %3111 = vmatprep.subr.mxu0 0.0
    %3112 = vmatpush1.msra.mxu0 %v2997
    %3113 = vmatprep.subr.mxu0 0.0
    %3114 = vmatpush1.msra.mxu0 %v2996
    %3115 = vmatprep.subr.mxu0 0.0
    %3116 = vmatpush1.msra.mxu0 %v2995
    %3117 = vmatprep.subr.mxu0 0.0
    %3118 = vmatpush1.msra.mxu0 %v2994
    %3119 = vmatprep.subr.mxu0 0.0
    %3120 = vmatpush1.msra.mxu0 %v2993
    %3121 = vmatprep.subr.mxu0 0.0
    %3122 = vmatpush1.msra.mxu0 %v2992
    %3123 = vmatprep.subr.mxu0 0.0
    %3124 = vmatpush1.msra.mxu0 %v2991
    %3125 = vmatprep.subr.mxu0 0.0
    %3126 = vmatpush1.msra.mxu0 %v2990
    %3127 = vmatprep.subr.mxu0 0.0
    %3128 = vmatpush1.msra.mxu0 %v2989
    %3129 = vmatprep.subr.mxu0 0.0
    %3130 = vmatpush1.msra.mxu0 %v2988
    %3131 = vmatprep.subr.mxu0 0.0
    %3132 = vmatpush1.msra.mxu0 %v2987
    %3133 = vmatprep.subr.mxu0 0.0
    %3134 = vmatpush1.msra.mxu0 %v2986
    %3135 = vmatprep.subr.mxu0 0.0
    %3136 = vmatpush2.msra.mxu0 0.0
    %3137 = vmatprep.subr.mxu0 0.0
    %3138 = vmatpush2.msra.mxu0 0.0
    %3139 = vmatprep.subr.mxu0 0.0
    %3140 = vmatpush2.msra.mxu0 0.0
    %3141 = vmatprep.subr.mxu0 0.0
    %3142 = vmatpush2.msra.mxu0 0.0
    %3143 = vmatprep.subr.mxu0 0.0
    %3144 = vmatpush2.msra.mxu0 0.0
    %3145 = vmatprep.subr.mxu0 0.0
    %3146 = vmatpush2.msra.mxu0 0.0
    %3147 = vmatprep.subr.mxu0 0.0
    %3148 = vmatpush2.msra.mxu0 0.0
    %3149 = vmatprep.subr.mxu0 0.0
    %3150 = vmatpush2.msra.mxu0 0.0
    %3151 = vmatprep.subr.mxu0 0.0
    %3152 = vmatpush2.msra.mxu0 0.0
    %3153 = vmatprep.subr.mxu0 0.0
    %3154 = vmatpush2.msra.mxu0 0.0
    %3155 = vmatprep.subr.mxu0 0.0
    %3156 = vmatpush2.msra.mxu0 0.0
    %3157 = vmatprep.subr.mxu0 0.0
    %3158 = vmatpush2.msra.mxu0 0.0
    %3159 = vmatprep.subr.mxu0 0.0
    %3160 = vmatpush2.msra.mxu0 0.0
    %3161 = vmatprep.subr.mxu0 0.0
    %3162 = vmatpush2.msra.mxu0 0.0
    %3163 = vmatprep.subr.mxu0 0.0
    %3164 = vmatpush2.msra.mxu0 0.0
    %3165 = vmatprep.subr.mxu0 0.0
    %3166 = vmatpush2.msra.mxu0 0.0
    %3167 = vmatprep.mubr.f32.mxu0 0.0
    %3168 = vmatmul.mubr.f32.gmra.mxu0 %v3101
    %v3169 = vpop.f32.mrf.mxu0
    %v3170 = vadd.f32 1e-05, %v3169
    %v3171 = vpop.f32.mrf.mxu0
    %3172 = vdwg.mxu0
    %v3173 = vrsqrt.pop %v3170
    %v3174 = vmul.f32 %v3102, %v3173
    %v3176 = vlaneseq
    %v3177 = vshrl.u32 %v3176, 7
    %v3178 = vsub.s32 0, %v3177
    %v3179 = vrot.slane %v3174, %v3178
    %v3181 = vmul.f32 %v3085, %v3179
    %v3182 = vmul.f32 %v3086, %v3179
    %v3183 = vmul.f32 %v3087, %v3179
    %v3184 = vmul.f32 %v3088, %v3179
    %v3185 = vld [vmem:[%s20] sm:$0x1]
    %v3187 = vlaneseq
    %v3188 = vshrl.u32 %v3187, 7
    %v3189 = vsub.s32 0, %v3188
    %v3190 = vrot.slane %v3185, %v3189
    %v3192 = vadd.f32 %v3181, %v3190
    %v3193 = vadd.f32 %v3182, %v3190
    %v3194 = vadd.f32 %v3183, %v3190
    %v3195 = vadd.f32 %v3184, %v3190
    %v3196 = vmin.f32 %v3192, 20.0
    %v3197 = vmin.f32 %v3193, 20.0
    %v3198 = vmin.f32 %v3194, 20.0
    %v3199 = vmin.f32 %v3195, 20.0
    %v3200 = vmul.f32 %v3196, 1.442695
    %v3201 = vpow.pop %v3200
    %v3202 = vmul.f32 %v3197, 1.442695
    %v3203 = vpow.pop %v3202
    %v3204 = vmul.f32 %v3198, 1.442695
    %v3205 = vpow.pop %v3204
    %v3206 = vmul.f32 %v3199, 1.442695
    %v3207 = vpow.pop %v3206
    %v3208 = vadd.f32 %v3201, 2.0
    %v3209 = vadd.f32 %v3203, 2.0
    %v3210 = vadd.f32 %v3205, 2.0
    %v3211 = vadd.f32 %v3207, 2.0
    %v3212 = vmul.f32 %v3201, %v3208
    %v3213 = vmul.f32 %v3203, %v3209
    %v3214 = vmul.f32 %v3205, %v3210
    %v3215 = vmul.f32 %v3207, %v3211
    %v3216 = vmul.f32 %v3192, %v3212
    %v3217 = vmul.f32 %v3193, %v3213
    %v3218 = vmul.f32 %v3194, %v3214
    %v3219 = vmul.f32 %v3195, %v3215
    %v3220 = vadd.f32 %v3212, 2.0
    %v3221 = vadd.f32 %v3213, 2.0
    %v3222 = vadd.f32 %v3214, 2.0
    %v3223 = vadd.f32 %v3215, 2.0
    %v3224 = vrcp.pop %v3220
    %v3225 = vrcp.pop %v3221
    %v3226 = vrcp.pop %v3222
    %v3227 = vrcp.pop %v3223
    %v3228 = vmul.f32 %v3216, %v3224
    %v3229 = vmul.f32 %v3217, %v3225
    %v3230 = vmul.f32 %v3218, %v3226
    %v3231 = vmul.f32 %v3219, %v3227
    %v3232 = vpack.c.bf16 %v3229, %v3228
    %v3233 = vpack.c.bf16 %v3231, %v3230
    %v3234 = vld [vmem:[#allocation22] sm:$0xff]
    %v3235 = vld [vmem:[#allocation22 + $0x8] sm:$0xff]
    %v3236 = vld [vmem:[#allocation22 + $0x10] sm:$0xff]
    %v3237 = vld [vmem:[#allocation22 + $0x18] sm:$0xff]
    %v3238 = vld [vmem:[#allocation22 + $0x20] sm:$0xff]
    %v3239 = vld [vmem:[#allocation22 + $0x28] sm:$0xff]
    %v3240 = vld [vmem:[#allocation22 + $0x30] sm:$0xff]
    %v3241 = vld [vmem:[#allocation22 + $0x38] sm:$0xff]
    %v3242 = vld [vmem:[#allocation22 + $0x40] sm:$0xff]
    %v3243 = vld [vmem:[#allocation22 + $0x48] sm:$0xff]
    %v3244 = vld [vmem:[#allocation22 + $0x50] sm:$0xff]
    %v3245 = vld [vmem:[#allocation22 + $0x58] sm:$0xff]
    %v3246 = vld [vmem:[#allocation22 + $0x60] sm:$0xff]
    %v3247 = vld [vmem:[#allocation22 + $0x68] sm:$0xff]
    %v3248 = vld [vmem:[#allocation22 + $0x70] sm:$0xff]
    %v3249 = vld [vmem:[#allocation22 + $0x78] sm:$0xff]
    %v3250 = vld [vmem:[#allocation22 + $0x80] sm:$0xff]
    %v3251 = vld [vmem:[#allocation22 + $0x88] sm:$0xff]
    %v3252 = vld [vmem:[#allocation22 + $0x90] sm:$0xff]
    %v3253 = vld [vmem:[#allocation22 + $0x98] sm:$0xff]
    %v3254 = vld [vmem:[#allocation22 + $0xa0] sm:$0xff]
    %v3255 = vld [vmem:[#allocation22 + $0xa8] sm:$0xff]
    %v3256 = vld [vmem:[#allocation22 + $0xb0] sm:$0xff]
    %v3257 = vld [vmem:[#allocation22 + $0xb8] sm:$0xff]
    %v3258 = vld [vmem:[#allocation22 + $0xc0] sm:$0xff]
    %v3259 = vld [vmem:[#allocation22 + $0xc8] sm:$0xff]
    %v3260 = vld [vmem:[#allocation22 + $0xd0] sm:$0xff]
    %v3261 = vld [vmem:[#allocation22 + $0xd8] sm:$0xff]
    %v3262 = vld [vmem:[#allocation22 + $0xe0] sm:$0xff]
    %v3263 = vld [vmem:[#allocation22 + $0xe8] sm:$0xff]
    %v3264 = vld [vmem:[#allocation22 + $0xf0] sm:$0xff]
    %v3265 = vld [vmem:[#allocation22 + $0xf8] sm:$0xff]
    %v3298 = vunpack.c.l.b16 %v3234
    %v3299 = vunpack.c.h.b16 %v3234
    %v3300 = vunpack.c.l.b16 %v3235
    %v3301 = vunpack.c.h.b16 %v3235
    %v3302 = vunpack.c.l.b16 %v3236
    %v3303 = vunpack.c.h.b16 %v3236
    %v3304 = vunpack.c.l.b16 %v3237
    %v3305 = vunpack.c.h.b16 %v3237
    %v3306 = vunpack.c.l.b16 %v3238
    %v3307 = vunpack.c.h.b16 %v3238
    %v3308 = vunpack.c.l.b16 %v3239
    %v3309 = vunpack.c.h.b16 %v3239
    %v3310 = vunpack.c.l.b16 %v3240
    %v3311 = vunpack.c.h.b16 %v3240
    %v3312 = vunpack.c.l.b16 %v3241
    %v3313 = vunpack.c.h.b16 %v3241
    %v3314 = vunpack.c.l.b16 %v3242
    %v3315 = vunpack.c.h.b16 %v3242
    %v3316 = vunpack.c.l.b16 %v3243
    %v3317 = vunpack.c.h.b16 %v3243
    %v3318 = vunpack.c.l.b16 %v3244
    %v3319 = vunpack.c.h.b16 %v3244
    %v3320 = vunpack.c.l.b16 %v3245
    %v3321 = vunpack.c.h.b16 %v3245
    %v3322 = vunpack.c.l.b16 %v3246
    %v3323 = vunpack.c.h.b16 %v3246
    %v3324 = vunpack.c.l.b16 %v3247
    %v3325 = vunpack.c.h.b16 %v3247
    %v3326 = vunpack.c.l.b16 %v3248
    %v3327 = vunpack.c.h.b16 %v3248
    %v3328 = vunpack.c.l.b16 %v3249
    %v3329 = vunpack.c.h.b16 %v3249
    %v3330 = vunpack.c.l.b16 %v3250
    %v3331 = vunpack.c.h.b16 %v3250
    %v3332 = vunpack.c.l.b16 %v3251
    %v3333 = vunpack.c.h.b16 %v3251
    %v3334 = vunpack.c.l.b16 %v3252
    %v3335 = vunpack.c.h.b16 %v3252
    %v3336 = vunpack.c.l.b16 %v3253
    %v3337 = vunpack.c.h.b16 %v3253
    %v3338 = vunpack.c.l.b16 %v3254
    %v3339 = vunpack.c.h.b16 %v3254
    %v3340 = vunpack.c.l.b16 %v3255
    %v3341 = vunpack.c.h.b16 %v3255
    %v3342 = vunpack.c.l.b16 %v3256
    %v3343 = vunpack.c.h.b16 %v3256
    %v3344 = vunpack.c.l.b16 %v3257
    %v3345 = vunpack.c.h.b16 %v3257
    %v3346 = vunpack.c.l.b16 %v3258
    %v3347 = vunpack.c.h.b16 %v3258
    %v3348 = vunpack.c.l.b16 %v3259
    %v3349 = vunpack.c.h.b16 %v3259
    %v3350 = vunpack.c.l.b16 %v3260
    %v3351 = vunpack.c.h.b16 %v3260
    %v3352 = vunpack.c.l.b16 %v3261
    %v3353 = vunpack.c.h.b16 %v3261
    %v3354 = vunpack.c.l.b16 %v3262
    %v3355 = vunpack.c.h.b16 %v3262
    %v3356 = vunpack.c.l.b16 %v3263
    %v3357 = vunpack.c.h.b16 %v3263
    %v3358 = vunpack.c.l.b16 %v3264
    %v3359 = vunpack.c.h.b16 %v3264
    %v3360 = vunpack.c.l.b16 %v3265
    %v3361 = vunpack.c.h.b16 %v3265
    %v3362 = vpack.c.b16 %v3302, %v3298
    %v3363 = vpack.c.b16 %v3303, %v3299
    %v3364 = vpack.c.b16 %v3304, %v3300
    %v3365 = vpack.c.b16 %v3305, %v3301
    %v3366 = vpack.c.b16 %v3310, %v3306
    %v3367 = vpack.c.b16 %v3311, %v3307
    %v3368 = vpack.c.b16 %v3312, %v3308
    %v3369 = vpack.c.b16 %v3313, %v3309
    %v3370 = vpack.c.b16 %v3318, %v3314
    %v3371 = vpack.c.b16 %v3319, %v3315
    %v3372 = vpack.c.b16 %v3320, %v3316
    %v3373 = vpack.c.b16 %v3321, %v3317
    %v3374 = vpack.c.b16 %v3326, %v3322
    %v3375 = vpack.c.b16 %v3327, %v3323
    %v3376 = vpack.c.b16 %v3328, %v3324
    %v3377 = vpack.c.b16 %v3329, %v3325
    %v3378 = vpack.c.b16 %v3334, %v3330
    %v3379 = vpack.c.b16 %v3335, %v3331
    %v3380 = vpack.c.b16 %v3336, %v3332
    %v3381 = vpack.c.b16 %v3337, %v3333
    %v3382 = vpack.c.b16 %v3342, %v3338
    %v3383 = vpack.c.b16 %v3343, %v3339
    %v3384 = vpack.c.b16 %v3344, %v3340
    %v3385 = vpack.c.b16 %v3345, %v3341
    %v3386 = vpack.c.b16 %v3350, %v3346
    %v3387 = vpack.c.b16 %v3351, %v3347
    %v3388 = vpack.c.b16 %v3352, %v3348
    %v3389 = vpack.c.b16 %v3353, %v3349
    %v3390 = vpack.c.b16 %v3358, %v3354
    %v3391 = vpack.c.b16 %v3359, %v3355
    %v3392 = vpack.c.b16 %v3360, %v3356
    %v3393 = vpack.c.b16 %v3361, %v3357
    %3426 = vmatprep.subr.bf16.mxu0 %v3391
    %3427 = vmatpush1.bf16.msra.mxu0 %v3390
    %3428 = vmatprep.subr.bf16.mxu0 %v3387
    %3429 = vmatpush1.bf16.msra.mxu0 %v3386
    %3430 = vmatprep.subr.bf16.mxu0 %v3383
    %3431 = vmatpush1.bf16.msra.mxu0 %v3382
    %3432 = vmatprep.subr.bf16.mxu0 %v3379
    %3433 = vmatpush1.bf16.msra.mxu0 %v3378
    %3434 = vmatprep.subr.bf16.mxu0 %v3375
    %3435 = vmatpush1.bf16.msra.mxu0 %v3374
    %3436 = vmatprep.subr.bf16.mxu0 %v3371
    %3437 = vmatpush1.bf16.msra.mxu0 %v3370
    %3438 = vmatprep.subr.bf16.mxu0 %v3367
    %3439 = vmatpush1.bf16.msra.mxu0 %v3366
    %3440 = vmatprep.subr.bf16.mxu0 %v3363
    %3441 = vmatpush1.bf16.msra.mxu0 %v3362
    %3442 = vmatprep.subr.bf16.mxu0 0
    %3443 = vmatpush2.bf16.msra.mxu0 0
    %3444 = vmatprep.subr.bf16.mxu0 0
    %3445 = vmatpush2.bf16.msra.mxu0 0
    %3446 = vmatprep.subr.bf16.mxu0 0
    %3447 = vmatpush2.bf16.msra.mxu0 0
    %3448 = vmatprep.subr.bf16.mxu0 0
    %3449 = vmatpush2.bf16.msra.mxu0 0
    %3450 = vmatprep.subr.bf16.mxu0 0
    %3451 = vmatpush2.bf16.msra.mxu0 0
    %3452 = vmatprep.subr.bf16.mxu0 0
    %3453 = vmatpush2.bf16.msra.mxu0 0
    %3454 = vmatprep.subr.bf16.mxu0 0
    %3455 = vmatpush2.bf16.msra.mxu0 0
    %3456 = vmatprep.subr.bf16.mxu0 0
    %3457 = vmatpush2.bf16.msra.mxu0 0
    %3458 = vmatprep.mubr.bf16.mxu0 0
    %3459 = vmatmul.mubr.bf16.gmra.mxu0 %v3232
    %v3460 = vpop.f32.mrf.mxu0
    %v3461 = vadd.f32 0.0, %v3460
    %v3462 = vpop.f32.mrf.mxu0
    %v3463 = vadd.f32 0.0, %v3462
    %v3464 = vpop.f32.mrf.mxu0
    %v3465 = vadd.f32 0.0, %v3464
    %v3466 = vpop.f32.mrf.mxu0
    %v3467 = vadd.f32 0.0, %v3466
    %3468 = vmatprep.mubr.bf16.mxu0 0
    %3469 = vmatmul.mubr.bf16.gmra.mxu0 %v3233
    %v3470 = vpop.f32.mrf.mxu0
    %v3471 = vadd.f32 0.0, %v3470
    %v3472 = vpop.f32.mrf.mxu0
    %v3473 = vadd.f32 0.0, %v3472
    %v3474 = vpop.f32.mrf.mxu0
    %v3475 = vadd.f32 0.0, %v3474
    %v3476 = vpop.f32.mrf.mxu0
    %v3477 = vadd.f32 0.0, %v3476
    %3478 = vdwg.mxu0
    %3479 = vmatprep.subr.bf16.mxu0 %v3393
    %3480 = vmatpush1.bf16.msra.mxu0 %v3392
    %3481 = vmatprep.subr.bf16.mxu0 %v3389
    %3482 = vmatpush1.bf16.msra.mxu0 %v3388
    %3483 = vmatprep.subr.bf16.mxu0 %v3385
    %3484 = vmatpush1.bf16.msra.mxu0 %v3384
    %3485 = vmatprep.subr.bf16.mxu0 %v3381
    %3486 = vmatpush1.bf16.msra.mxu0 %v3380
    %3487 = vmatprep.subr.bf16.mxu0 %v3377
    %3488 = vmatpush1.bf16.msra.mxu0 %v3376
    %3489 = vmatprep.subr.bf16.mxu0 %v3373
    %3490 = vmatpush1.bf16.msra.mxu0 %v3372
    %3491 = vmatprep.subr.bf16.mxu0 %v3369
    %3492 = vmatpush1.bf16.msra.mxu0 %v3368
    %3493 = vmatprep.subr.bf16.mxu0 %v3365
    %3494 = vmatpush1.bf16.msra.mxu0 %v3364
    %3495 = vmatprep.subr.bf16.mxu0 0
    %3496 = vmatpush2.bf16.msra.mxu0 0
    %3497 = vmatprep.subr.bf16.mxu0 0
    %3498 = vmatpush2.bf16.msra.mxu0 0
    %3499 = vmatprep.subr.bf16.mxu0 0
    %3500 = vmatpush2.bf16.msra.mxu0 0
    %3501 = vmatprep.subr.bf16.mxu0 0
    %3502 = vmatpush2.bf16.msra.mxu0 0
    %3503 = vmatprep.subr.bf16.mxu0 0
    %3504 = vmatpush2.bf16.msra.mxu0 0
    %3505 = vmatprep.subr.bf16.mxu0 0
    %3506 = vmatpush2.bf16.msra.mxu0 0
    %3507 = vmatprep.subr.bf16.mxu0 0
    %3508 = vmatpush2.bf16.msra.mxu0 0
    %3509 = vmatprep.subr.bf16.mxu0 0
    %3510 = vmatpush2.bf16.msra.mxu0 0
    %3511 = vmatprep.mubr.bf16.mxu0 0
    %3512 = vmatmul.mubr.bf16.gmra.mxu0 %v3232
    %v3513 = vpop.f32.mrf.mxu0
    %v3514 = vadd.f32 0.0, %v3513
    %v3515 = vpop.f32.mrf.mxu0
    %v3516 = vadd.f32 0.0, %v3515
    %v3517 = vpop.f32.mrf.mxu0
    %v3518 = vadd.f32 0.0, %v3517
    %v3519 = vpop.f32.mrf.mxu0
    %v3520 = vadd.f32 0.0, %v3519
    %3521 = vmatprep.mubr.bf16.mxu0 0
    %3522 = vmatmul.mubr.bf16.gmra.mxu0 %v3233
    %v3523 = vpop.f32.mrf.mxu0
    %v3524 = vadd.f32 0.0, %v3523
    %v3525 = vpop.f32.mrf.mxu0
    %v3526 = vadd.f32 0.0, %v3525
    %v3527 = vpop.f32.mrf.mxu0
    %v3528 = vadd.f32 0.0, %v3527
    %v3529 = vpop.f32.mrf.mxu0
    %v3530 = vadd.f32 0.0, %v3529
    %3531 = vdwg.mxu0
    %v3532 = vld [vmem:[#allocation20] sm:$0xff]
    %v3533 = vld [vmem:[#allocation20 + $0x8] sm:$0xff]
    %v3534 = vld [vmem:[#allocation20 + $0x10] sm:$0xff]
    %v3535 = vld [vmem:[#allocation20 + $0x18] sm:$0xff]
    %v3536 = vld [vmem:[#allocation20 + $0x20] sm:$0xff]
    %v3537 = vld [vmem:[#allocation20 + $0x28] sm:$0xff]
    %v3538 = vld [vmem:[#allocation20 + $0x30] sm:$0xff]
    %v3539 = vld [vmem:[#allocation20 + $0x38] sm:$0xff]
    %s3540 = scalar_lea.vmem [#allocation20], 64
    %v3541 = vld [vmem:[%s3540] sm:$0xff]
    %v3542 = vld [vmem:[%s3540 + $0x8] sm:$0xff]
    %v3543 = vld [vmem:[%s3540 + $0x10] sm:$0xff]
    %v3544 = vld [vmem:[%s3540 + $0x18] sm:$0xff]
    %v3545 = vld [vmem:[%s3540 + $0x20] sm:$0xff]
    %v3546 = vld [vmem:[%s3540 + $0x28] sm:$0xff]
    %v3547 = vld [vmem:[%s3540 + $0x30] sm:$0xff]
    %v3548 = vld [vmem:[%s3540 + $0x38] sm:$0xff]
    %vm3549 = vcmask 261120
    %v3551 = vsel %vm3549, %v3541, 0
    %v3554 = vsel %vm3549, %v3542, 0
    %v3557 = vsel %vm3549, %v3543, 0
    %v3560 = vsel %vm3549, %v3544, 0
    %v3563 = vsel %vm3549, %v3545, 0
    %v3566 = vsel %vm3549, %v3546, 0
    %v3569 = vsel %vm3549, %v3547, 0
    %v3572 = vsel %vm3549, %v3548, 0
    %3574 = vmatprep.subr.mxu0 0.0
    %3575 = vmatpush1.msra.mxu0 0.0
    %3576 = vmatprep.subr.mxu0 0.0
    %3577 = vmatpush1.msra.mxu0 0.0
    %3578 = vmatprep.subr.mxu0 0.0
    %3579 = vmatpush1.msra.mxu0 0.0
    %3580 = vmatprep.subr.mxu0 0.0
    %3581 = vmatpush1.msra.mxu0 0.0
    %3582 = vmatprep.subr.mxu0 0.0
    %3583 = vmatpush1.msra.mxu0 0.0
    %3584 = vmatprep.subr.mxu0 0.0
    %3585 = vmatpush1.msra.mxu0 0.0
    %3586 = vmatprep.subr.mxu0 0.0
    %3587 = vmatpush1.msra.mxu0 0.0
    %3588 = vmatprep.subr.mxu0 0.0
    %3589 = vmatpush1.msra.mxu0 0.0
    %3590 = vmatprep.subr.mxu0 0.0
    %3591 = vmatpush1.msra.mxu0 0.0
    %3592 = vmatprep.subr.mxu0 0.0
    %3593 = vmatpush1.msra.mxu0 0.0
    %3594 = vmatprep.subr.mxu0 0.0
    %3595 = vmatpush1.msra.mxu0 0.0
    %3596 = vmatprep.subr.mxu0 0.0
    %3597 = vmatpush1.msra.mxu0 0.0
    %3598 = vmatprep.subr.mxu0 0.0
    %3599 = vmatpush1.msra.mxu0 %v3477
    %3600 = vmatprep.subr.mxu0 0.0
    %3601 = vmatpush1.msra.mxu0 %v3473
    %3602 = vmatprep.subr.mxu0 0.0
    %3603 = vmatpush1.msra.mxu0 %v3467
    %3604 = vmatprep.subr.mxu0 0.0
    %3605 = vmatpush1.msra.mxu0 %v3463
    %3606 = vmatprep.subr.mxu0 0.0
    %3607 = vmatpush2.msra.mxu0 0.0
    %3608 = vmatprep.subr.mxu0 0.0
    %3609 = vmatpush2.msra.mxu0 0.0
    %3610 = vmatprep.subr.mxu0 0.0
    %3611 = vmatpush2.msra.mxu0 0.0
    %3612 = vmatprep.subr.mxu0 0.0
    %3613 = vmatpush2.msra.mxu0 0.0
    %3614 = vmatprep.subr.mxu0 0.0
    %3615 = vmatpush2.msra.mxu0 0.0
    %3616 = vmatprep.subr.mxu0 0.0
    %3617 = vmatpush2.msra.mxu0 0.0
    %3618 = vmatprep.subr.mxu0 0.0
    %3619 = vmatpush2.msra.mxu0 0.0
    %3620 = vmatprep.subr.mxu0 0.0
    %3621 = vmatpush2.msra.mxu0 0.0
    %3622 = vmatprep.subr.mxu0 0.0
    %3623 = vmatpush2.msra.mxu0 0.0
    %3624 = vmatprep.subr.mxu0 0.0
    %3625 = vmatpush2.msra.mxu0 0.0
    %3626 = vmatprep.subr.mxu0 0.0
    %3627 = vmatpush2.msra.mxu0 0.0
    %3628 = vmatprep.subr.mxu0 0.0
    %3629 = vmatpush2.msra.mxu0 0.0
    %3630 = vmatprep.subr.mxu0 0.0
    %3631 = vmatpush2.msra.mxu0 0.0
    %3632 = vmatprep.subr.mxu0 0.0
    %3633 = vmatpush2.msra.mxu0 0.0
    %3634 = vmatprep.subr.mxu0 0.0
    %3635 = vmatpush2.msra.mxu0 0.0
    %3636 = vmatprep.subr.mxu0 0.0
    %3637 = vmatpush2.msra.mxu0 0.0
    %3638 = vmatprep.mubr.f32.mxu0 0.0
    %3639 = vmatmul.mubr.f32.gmra.mxu0 %v3551
    %v3640 = vpop.f32.mrf.mxu0
    %v3641 = vadd.f32 0.0, %v3640
    %v3642 = vpop.f32.mrf.mxu0
    %3643 = vmatprep.mubr.f32.mxu0 0.0
    %3644 = vmatmul.mubr.f32.gmra.mxu0 %v3554
    %v3645 = vpop.f32.mrf.mxu0
    %v3646 = vadd.f32 0.0, %v3645
    %v3647 = vpop.f32.mrf.mxu0
    %3648 = vmatprep.mubr.f32.mxu0 0.0
    %3649 = vmatmul.mubr.f32.gmra.mxu0 %v3557
    %v3650 = vpop.f32.mrf.mxu0
    %v3651 = vadd.f32 0.0, %v3650
    %v3652 = vpop.f32.mrf.mxu0
    %3653 = vmatprep.mubr.f32.mxu0 0.0
    %3654 = vmatmul.mubr.f32.gmra.mxu0 %v3560
    %v3655 = vpop.f32.mrf.mxu0
    %v3656 = vadd.f32 0.0, %v3655
    %v3657 = vpop.f32.mrf.mxu0
    %3658 = vmatprep.mubr.f32.mxu0 0.0
    %3659 = vmatmul.mubr.f32.gmra.mxu0 %v3563
    %v3660 = vpop.f32.mrf.mxu0
    %v3661 = vadd.f32 0.0, %v3660
    %v3662 = vpop.f32.mrf.mxu0
    %3663 = vmatprep.mubr.f32.mxu0 0.0
    %3664 = vmatmul.mubr.f32.gmra.mxu0 %v3566
    %v3665 = vpop.f32.mrf.mxu0
    %v3666 = vadd.f32 0.0, %v3665
    %v3667 = vpop.f32.mrf.mxu0
    %3668 = vmatprep.mubr.f32.mxu0 0.0
    %3669 = vmatmul.mubr.f32.gmra.mxu0 %v3569
    %v3670 = vpop.f32.mrf.mxu0
    %v3671 = vadd.f32 0.0, %v3670
    %v3672 = vpop.f32.mrf.mxu0
    %3673 = vmatprep.mubr.f32.mxu0 0.0
    %3674 = vmatmul.mubr.f32.gmra.mxu0 %v3572
    %v3675 = vpop.f32.mrf.mxu0
    %v3676 = vadd.f32 0.0, %v3675
    %v3677 = vpop.f32.mrf.mxu0
    %3678 = vdwg.mxu0
    %v3680 = vsel %vm3549, %v3532, 0
    %v3683 = vsel %vm3549, %v3533, 0
    %v3686 = vsel %vm3549, %v3534, 0
    %v3689 = vsel %vm3549, %v3535, 0
    %v3692 = vsel %vm3549, %v3536, 0
    %v3695 = vsel %vm3549, %v3537, 0
    %v3698 = vsel %vm3549, %v3538, 0
    %v3701 = vsel %vm3549, %v3539, 0
    %3703 = vmatprep.subr.mxu0 0.0
    %3704 = vmatpush1.msra.mxu0 0.0
    %3705 = vmatprep.subr.mxu0 0.0
    %3706 = vmatpush1.msra.mxu0 0.0
    %3707 = vmatprep.subr.mxu0 0.0
    %3708 = vmatpush1.msra.mxu0 0.0
    %3709 = vmatprep.subr.mxu0 0.0
    %3710 = vmatpush1.msra.mxu0 0.0
    %3711 = vmatprep.subr.mxu0 0.0
    %3712 = vmatpush1.msra.mxu0 0.0
    %3713 = vmatprep.subr.mxu0 0.0
    %3714 = vmatpush1.msra.mxu0 0.0
    %3715 = vmatprep.subr.mxu0 0.0
    %3716 = vmatpush1.msra.mxu0 0.0
    %3717 = vmatprep.subr.mxu0 0.0
    %3718 = vmatpush1.msra.mxu0 0.0
    %3719 = vmatprep.subr.mxu0 0.0
    %3720 = vmatpush1.msra.mxu0 0.0
    %3721 = vmatprep.subr.mxu0 0.0
    %3722 = vmatpush1.msra.mxu0 0.0
    %3723 = vmatprep.subr.mxu0 0.0
    %3724 = vmatpush1.msra.mxu0 0.0
    %3725 = vmatprep.subr.mxu0 0.0
    %3726 = vmatpush1.msra.mxu0 0.0
    %3727 = vmatprep.subr.mxu0 0.0
    %3728 = vmatpush1.msra.mxu0 %v3475
    %3729 = vmatprep.subr.mxu0 0.0
    %3730 = vmatpush1.msra.mxu0 %v3471
    %3731 = vmatprep.subr.mxu0 0.0
    %3732 = vmatpush1.msra.mxu0 %v3465
    %3733 = vmatprep.subr.mxu0 0.0
    %3734 = vmatpush1.msra.mxu0 %v3461
    %3735 = vmatprep.subr.mxu0 0.0
    %3736 = vmatpush2.msra.mxu0 0.0
    %3737 = vmatprep.subr.mxu0 0.0
    %3738 = vmatpush2.msra.mxu0 0.0
    %3739 = vmatprep.subr.mxu0 0.0
    %3740 = vmatpush2.msra.mxu0 0.0
    %3741 = vmatprep.subr.mxu0 0.0
    %3742 = vmatpush2.msra.mxu0 0.0
    %3743 = vmatprep.subr.mxu0 0.0
    %3744 = vmatpush2.msra.mxu0 0.0
    %3745 = vmatprep.subr.mxu0 0.0
    %3746 = vmatpush2.msra.mxu0 0.0
    %3747 = vmatprep.subr.mxu0 0.0
    %3748 = vmatpush2.msra.mxu0 0.0
    %3749 = vmatprep.subr.mxu0 0.0
    %3750 = vmatpush2.msra.mxu0 0.0
    %3751 = vmatprep.subr.mxu0 0.0
    %3752 = vmatpush2.msra.mxu0 0.0
    %3753 = vmatprep.subr.mxu0 0.0
    %3754 = vmatpush2.msra.mxu0 0.0
    %3755 = vmatprep.subr.mxu0 0.0
    %3756 = vmatpush2.msra.mxu0 0.0
    %3757 = vmatprep.subr.mxu0 0.0
    %3758 = vmatpush2.msra.mxu0 0.0
    %3759 = vmatprep.subr.mxu0 0.0
    %3760 = vmatpush2.msra.mxu0 0.0
    %3761 = vmatprep.subr.mxu0 0.0
    %3762 = vmatpush2.msra.mxu0 0.0
    %3763 = vmatprep.subr.mxu0 0.0
    %3764 = vmatpush2.msra.mxu0 0.0
    %3765 = vmatprep.subr.mxu0 0.0
    %3766 = vmatpush2.msra.mxu0 0.0
    %3767 = vmatprep.mubr.f32.mxu0 0.0
    %3768 = vmatmul.mubr.f32.gmra.mxu0 %v3680
    %v3769 = vpop.f32.mrf.mxu0
    %v3770 = vadd.f32 %v3641, %v3769
    %v3771 = vpop.f32.mrf.mxu0
    %3772 = vmatprep.mubr.f32.mxu0 0.0
    %3773 = vmatmul.mubr.f32.gmra.mxu0 %v3683
    %v3774 = vpop.f32.mrf.mxu0
    %v3775 = vadd.f32 %v3646, %v3774
    %v3776 = vpop.f32.mrf.mxu0
    %3777 = vmatprep.mubr.f32.mxu0 0.0
    %3778 = vmatmul.mubr.f32.gmra.mxu0 %v3686
    %v3779 = vpop.f32.mrf.mxu0
    %v3780 = vadd.f32 %v3651, %v3779
    %v3781 = vpop.f32.mrf.mxu0
    %3782 = vmatprep.mubr.f32.mxu0 0.0
    %3783 = vmatmul.mubr.f32.gmra.mxu0 %v3689
    %v3784 = vpop.f32.mrf.mxu0
    %v3785 = vadd.f32 %v3656, %v3784
    %v3786 = vpop.f32.mrf.mxu0
    %3787 = vmatprep.mubr.f32.mxu0 0.0
    %3788 = vmatmul.mubr.f32.gmra.mxu0 %v3692
    %v3789 = vpop.f32.mrf.mxu0
    %v3790 = vadd.f32 %v3661, %v3789
    %v3791 = vpop.f32.mrf.mxu0
    %3792 = vmatprep.mubr.f32.mxu0 0.0
    %3793 = vmatmul.mubr.f32.gmra.mxu0 %v3695
    %v3794 = vpop.f32.mrf.mxu0
    %v3795 = vadd.f32 %v3666, %v3794
    %v3796 = vpop.f32.mrf.mxu0
    %3797 = vmatprep.mubr.f32.mxu0 0.0
    %3798 = vmatmul.mubr.f32.gmra.mxu0 %v3698
    %v3799 = vpop.f32.mrf.mxu0
    %v3800 = vadd.f32 %v3671, %v3799
    %v3801 = vpop.f32.mrf.mxu0
    %3802 = vmatprep.mubr.f32.mxu0 0.0
    %3803 = vmatmul.mubr.f32.gmra.mxu0 %v3701
    %v3804 = vpop.f32.mrf.mxu0
    %v3805 = vadd.f32 %v3676, %v3804
    %v3806 = vpop.f32.mrf.mxu0
    %3807 = vdwg.mxu0
    %s3808 = scalar_lea.vmem [#allocation20], 128
    %v3809 = vld [vmem:[%s3808] sm:$0xff]
    %v3810 = vld [vmem:[%s3808 + $0x8] sm:$0xff]
    %v3811 = vld [vmem:[%s3808 + $0x10] sm:$0xff]
    %v3812 = vld [vmem:[%s3808 + $0x18] sm:$0xff]
    %v3813 = vld [vmem:[%s3808 + $0x20] sm:$0xff]
    %v3814 = vld [vmem:[%s3808 + $0x28] sm:$0xff]
    %v3815 = vld [vmem:[%s3808 + $0x30] sm:$0xff]
    %v3816 = vld [vmem:[%s3808 + $0x38] sm:$0xff]
    %v3818 = vsel %vm3549, %v3809, 0
    %v3821 = vsel %vm3549, %v3810, 0
    %v3824 = vsel %vm3549, %v3811, 0
    %v3827 = vsel %vm3549, %v3812, 0
    %v3830 = vsel %vm3549, %v3813, 0
    %v3833 = vsel %vm3549, %v3814, 0
    %v3836 = vsel %vm3549, %v3815, 0
    %v3839 = vsel %vm3549, %v3816, 0
    %3841 = vmatprep.subr.mxu0 0.0
    %3842 = vmatpush1.msra.mxu0 0.0
    %3843 = vmatprep.subr.mxu0 0.0
    %3844 = vmatpush1.msra.mxu0 0.0
    %3845 = vmatprep.subr.mxu0 0.0
    %3846 = vmatpush1.msra.mxu0 0.0
    %3847 = vmatprep.subr.mxu0 0.0
    %3848 = vmatpush1.msra.mxu0 0.0
    %3849 = vmatprep.subr.mxu0 0.0
    %3850 = vmatpush1.msra.mxu0 0.0
    %3851 = vmatprep.subr.mxu0 0.0
    %3852 = vmatpush1.msra.mxu0 0.0
    %3853 = vmatprep.subr.mxu0 0.0
    %3854 = vmatpush1.msra.mxu0 0.0
    %3855 = vmatprep.subr.mxu0 0.0
    %3856 = vmatpush1.msra.mxu0 0.0
    %3857 = vmatprep.subr.mxu0 0.0
    %3858 = vmatpush1.msra.mxu0 0.0
    %3859 = vmatprep.subr.mxu0 0.0
    %3860 = vmatpush1.msra.mxu0 0.0
    %3861 = vmatprep.subr.mxu0 0.0
    %3862 = vmatpush1.msra.mxu0 0.0
    %3863 = vmatprep.subr.mxu0 0.0
    %3864 = vmatpush1.msra.mxu0 0.0
    %3865 = vmatprep.subr.mxu0 0.0
    %3866 = vmatpush1.msra.mxu0 %v3528
    %3867 = vmatprep.subr.mxu0 0.0
    %3868 = vmatpush1.msra.mxu0 %v3524
    %3869 = vmatprep.subr.mxu0 0.0
    %3870 = vmatpush1.msra.mxu0 %v3518
    %3871 = vmatprep.subr.mxu0 0.0
    %3872 = vmatpush1.msra.mxu0 %v3514
    %3873 = vmatprep.subr.mxu0 0.0
    %3874 = vmatpush2.msra.mxu0 0.0
    %3875 = vmatprep.subr.mxu0 0.0
    %3876 = vmatpush2.msra.mxu0 0.0
    %3877 = vmatprep.subr.mxu0 0.0
    %3878 = vmatpush2.msra.mxu0 0.0
    %3879 = vmatprep.subr.mxu0 0.0
    %3880 = vmatpush2.msra.mxu0 0.0
    %3881 = vmatprep.subr.mxu0 0.0
    %3882 = vmatpush2.msra.mxu0 0.0
    %3883 = vmatprep.subr.mxu0 0.0
    %3884 = vmatpush2.msra.mxu0 0.0
    %3885 = vmatprep.subr.mxu0 0.0
    %3886 = vmatpush2.msra.mxu0 0.0
    %3887 = vmatprep.subr.mxu0 0.0
    %3888 = vmatpush2.msra.mxu0 0.0
    %3889 = vmatprep.subr.mxu0 0.0
    %3890 = vmatpush2.msra.mxu0 0.0
    %3891 = vmatprep.subr.mxu0 0.0
    %3892 = vmatpush2.msra.mxu0 0.0
    %3893 = vmatprep.subr.mxu0 0.0
    %3894 = vmatpush2.msra.mxu0 0.0
    %3895 = vmatprep.subr.mxu0 0.0
    %3896 = vmatpush2.msra.mxu0 0.0
    %3897 = vmatprep.subr.mxu0 0.0
    %3898 = vmatpush2.msra.mxu0 0.0
    %3899 = vmatprep.subr.mxu0 0.0
    %3900 = vmatpush2.msra.mxu0 0.0
    %3901 = vmatprep.subr.mxu0 0.0
    %3902 = vmatpush2.msra.mxu0 0.0
    %3903 = vmatprep.subr.mxu0 0.0
    %3904 = vmatpush2.msra.mxu0 0.0
    %3905 = vmatprep.mubr.f32.mxu0 0.0
    %3906 = vmatmul.mubr.f32.gmra.mxu0 %v3818
    %v3907 = vpop.f32.mrf.mxu0
    %v3908 = vadd.f32 0.0, %v3907
    %v3909 = vpop.f32.mrf.mxu0
    %3910 = vmatprep.mubr.f32.mxu0 0.0
    %3911 = vmatmul.mubr.f32.gmra.mxu0 %v3821
    %v3912 = vpop.f32.mrf.mxu0
    %v3913 = vadd.f32 0.0, %v3912
    %v3914 = vpop.f32.mrf.mxu0
    %3915 = vmatprep.mubr.f32.mxu0 0.0
    %3916 = vmatmul.mubr.f32.gmra.mxu0 %v3824
    %v3917 = vpop.f32.mrf.mxu0
    %v3918 = vadd.f32 0.0, %v3917
    %v3919 = vpop.f32.mrf.mxu0
    %3920 = vmatprep.mubr.f32.mxu0 0.0
    %3921 = vmatmul.mubr.f32.gmra.mxu0 %v3827
    %v3922 = vpop.f32.mrf.mxu0
    %v3923 = vadd.f32 0.0, %v3922
    %v3924 = vpop.f32.mrf.mxu0
    %3925 = vmatprep.mubr.f32.mxu0 0.0
    %3926 = vmatmul.mubr.f32.gmra.mxu0 %v3830
    %v3927 = vpop.f32.mrf.mxu0
    %v3928 = vadd.f32 0.0, %v3927
    %v3929 = vpop.f32.mrf.mxu0
    %3930 = vmatprep.mubr.f32.mxu0 0.0
    %3931 = vmatmul.mubr.f32.gmra.mxu0 %v3833
    %v3932 = vpop.f32.mrf.mxu0
    %v3933 = vadd.f32 0.0, %v3932
    %v3934 = vpop.f32.mrf.mxu0
    %3935 = vmatprep.mubr.f32.mxu0 0.0
    %3936 = vmatmul.mubr.f32.gmra.mxu0 %v3836
    %v3937 = vpop.f32.mrf.mxu0
    %v3938 = vadd.f32 0.0, %v3937
    %v3939 = vpop.f32.mrf.mxu0
    %3940 = vmatprep.mubr.f32.mxu0 0.0
    %3941 = vmatmul.mubr.f32.gmra.mxu0 %v3839
    %v3942 = vpop.f32.mrf.mxu0
    %v3943 = vadd.f32 0.0, %v3942
    %v3944 = vpop.f32.mrf.mxu0
    %3945 = vdwg.mxu0
    %v3946 = vadd.f32 %v3770, %v3908
    %v3947 = vadd.f32 %v3775, %v3913
    %v3948 = vadd.f32 %v3780, %v3918
    %v3949 = vadd.f32 %v3785, %v3923
    %v3950 = vadd.f32 %v3790, %v3928
    %v3951 = vadd.f32 %v3795, %v3933
    %v3952 = vadd.f32 %v3800, %v3938
    %v3953 = vadd.f32 %v3805, %v3943
    %s3954 = scalar_lea.vmem [#allocation20], 192
    %v3955 = vld [vmem:[%s3954] sm:$0xff]
    %v3956 = vld [vmem:[%s3954 + $0x8] sm:$0xff]
    %v3957 = vld [vmem:[%s3954 + $0x10] sm:$0xff]
    %v3958 = vld [vmem:[%s3954 + $0x18] sm:$0xff]
    %v3959 = vld [vmem:[%s3954 + $0x20] sm:$0xff]
    %v3960 = vld [vmem:[%s3954 + $0x28] sm:$0xff]
    %v3961 = vld [vmem:[%s3954 + $0x30] sm:$0xff]
    %v3962 = vld [vmem:[%s3954 + $0x38] sm:$0xff]
    %v3964 = vsel %vm3549, %v3955, 0
    %v3967 = vsel %vm3549, %v3956, 0
    %v3970 = vsel %vm3549, %v3957, 0
    %v3973 = vsel %vm3549, %v3958, 0
    %v3976 = vsel %vm3549, %v3959, 0
    %v3979 = vsel %vm3549, %v3960, 0
    %v3982 = vsel %vm3549, %v3961, 0
    %v3985 = vsel %vm3549, %v3962, 0
    %3987 = vmatprep.subr.mxu0 0.0
    %3988 = vmatpush1.msra.mxu0 0.0
    %3989 = vmatprep.subr.mxu0 0.0
    %3990 = vmatpush1.msra.mxu0 0.0
    %3991 = vmatprep.subr.mxu0 0.0
    %3992 = vmatpush1.msra.mxu0 0.0
    %3993 = vmatprep.subr.mxu0 0.0
    %3994 = vmatpush1.msra.mxu0 0.0
    %3995 = vmatprep.subr.mxu0 0.0
    %3996 = vmatpush1.msra.mxu0 0.0
    %3997 = vmatprep.subr.mxu0 0.0
    %3998 = vmatpush1.msra.mxu0 0.0
    %3999 = vmatprep.subr.mxu0 0.0
    %4000 = vmatpush1.msra.mxu0 0.0
    %4001 = vmatprep.subr.mxu0 0.0
    %4002 = vmatpush1.msra.mxu0 0.0
    %4003 = vmatprep.subr.mxu0 0.0
    %4004 = vmatpush1.msra.mxu0 0.0
    %4005 = vmatprep.subr.mxu0 0.0
    %4006 = vmatpush1.msra.mxu0 0.0
    %4007 = vmatprep.subr.mxu0 0.0
    %4008 = vmatpush1.msra.mxu0 0.0
    %4009 = vmatprep.subr.mxu0 0.0
    %4010 = vmatpush1.msra.mxu0 0.0
    %4011 = vmatprep.subr.mxu0 0.0
    %4012 = vmatpush1.msra.mxu0 %v3530
    %4013 = vmatprep.subr.mxu0 0.0
    %4014 = vmatpush1.msra.mxu0 %v3526
    %4015 = vmatprep.subr.mxu0 0.0
    %4016 = vmatpush1.msra.mxu0 %v3520
    %4017 = vmatprep.subr.mxu0 0.0
    %4018 = vmatpush1.msra.mxu0 %v3516
    %4019 = vmatprep.subr.mxu0 0.0
    %4020 = vmatpush2.msra.mxu0 0.0
    %4021 = vmatprep.subr.mxu0 0.0
    %4022 = vmatpush2.msra.mxu0 0.0
    %4023 = vmatprep.subr.mxu0 0.0
    %4024 = vmatpush2.msra.mxu0 0.0
    %4025 = vmatprep.subr.mxu0 0.0
    %4026 = vmatpush2.msra.mxu0 0.0
    %4027 = vmatprep.subr.mxu0 0.0
    %4028 = vmatpush2.msra.mxu0 0.0
    %4029 = vmatprep.subr.mxu0 0.0
    %4030 = vmatpush2.msra.mxu0 0.0
    %4031 = vmatprep.subr.mxu0 0.0
    %4032 = vmatpush2.msra.mxu0 0.0
    %4033 = vmatprep.subr.mxu0 0.0
    %4034 = vmatpush2.msra.mxu0 0.0
    %4035 = vmatprep.subr.mxu0 0.0
    %4036 = vmatpush2.msra.mxu0 0.0
    %4037 = vmatprep.subr.mxu0 0.0
    %4038 = vmatpush2.msra.mxu0 0.0
    %4039 = vmatprep.subr.mxu0 0.0
    %4040 = vmatpush2.msra.mxu0 0.0
    %4041 = vmatprep.subr.mxu0 0.0
    %4042 = vmatpush2.msra.mxu0 0.0
    %4043 = vmatprep.subr.mxu0 0.0
    %4044 = vmatpush2.msra.mxu0 0.0
    %4045 = vmatprep.subr.mxu0 0.0
    %4046 = vmatpush2.msra.mxu0 0.0
    %4047 = vmatprep.subr.mxu0 0.0
    %4048 = vmatpush2.msra.mxu0 0.0
    %4049 = vmatprep.subr.mxu0 0.0
    %4050 = vmatpush2.msra.mxu0 0.0
    %4051 = vmatprep.mubr.f32.mxu0 0.0
    %4052 = vmatmul.mubr.f32.gmra.mxu0 %v3964
    %v4053 = vpop.f32.mrf.mxu0
    %v4054 = vadd.f32 0.0, %v4053
    %v4055 = vpop.f32.mrf.mxu0
    %4056 = vmatprep.mubr.f32.mxu0 0.0
    %4057 = vmatmul.mubr.f32.gmra.mxu0 %v3967
    %v4058 = vpop.f32.mrf.mxu0
    %v4059 = vadd.f32 0.0, %v4058
    %v4060 = vpop.f32.mrf.mxu0
    %4061 = vmatprep.mubr.f32.mxu0 0.0
    %4062 = vmatmul.mubr.f32.gmra.mxu0 %v3970
    %v4063 = vpop.f32.mrf.mxu0
    %v4064 = vadd.f32 0.0, %v4063
    %v4065 = vpop.f32.mrf.mxu0
    %4066 = vmatprep.mubr.f32.mxu0 0.0
    %4067 = vmatmul.mubr.f32.gmra.mxu0 %v3973
    %v4068 = vpop.f32.mrf.mxu0
    %v4069 = vadd.f32 0.0, %v4068
    %v4070 = vpop.f32.mrf.mxu0
    %4071 = vmatprep.mubr.f32.mxu0 0.0
    %4072 = vmatmul.mubr.f32.gmra.mxu0 %v3976
    %v4073 = vpop.f32.mrf.mxu0
    %v4074 = vadd.f32 0.0, %v4073
    %v4075 = vpop.f32.mrf.mxu0
    %4076 = vmatprep.mubr.f32.mxu0 0.0
    %4077 = vmatmul.mubr.f32.gmra.mxu0 %v3979
    %v4078 = vpop.f32.mrf.mxu0
    %v4079 = vadd.f32 0.0, %v4078
    %v4080 = vpop.f32.mrf.mxu0
    %4081 = vmatprep.mubr.f32.mxu0 0.0
    %4082 = vmatmul.mubr.f32.gmra.mxu0 %v3982
    %v4083 = vpop.f32.mrf.mxu0
    %v4084 = vadd.f32 0.0, %v4083
    %v4085 = vpop.f32.mrf.mxu0
    %4086 = vmatprep.mubr.f32.mxu0 0.0
    %4087 = vmatmul.mubr.f32.gmra.mxu0 %v3985
    %v4088 = vpop.f32.mrf.mxu0
    %v4089 = vadd.f32 0.0, %v4088
    %v4090 = vpop.f32.mrf.mxu0
    %4091 = vdwg.mxu0
    %v4092 = vadd.f32 %v3946, %v4054
    %v4093 = vadd.f32 %v3947, %v4059
    %v4094 = vadd.f32 %v3948, %v4064
    %v4095 = vadd.f32 %v3949, %v4069
    %v4096 = vadd.f32 %v3950, %v4074
    %v4097 = vadd.f32 %v3951, %v4079
    %v4098 = vadd.f32 %v3952, %v4084
    %v4099 = vadd.f32 %v3953, %v4089
    %v4100 = vsub.f32 0.0, %v4092
    %v4101 = vsub.f32 0.0, %v4093
    %v4102 = vsub.f32 0.0, %v4094
    %v4103 = vsub.f32 0.0, %v4095
    %v4104 = vsub.f32 0.0, %v4096
    %v4105 = vsub.f32 0.0, %v4097
    %v4106 = vsub.f32 0.0, %v4098
    %v4107 = vsub.f32 0.0, %v4099
    %v4108 = vmul.f32 %v4100, 1.442695
    %v4109 = vpow.pop %v4108
    %v4110 = vmul.f32 %v4101, 1.442695
    %v4111 = vpow.pop %v4110
    %v4112 = vmul.f32 %v4102, 1.442695
    %v4113 = vpow.pop %v4112
    %v4114 = vmul.f32 %v4103, 1.442695
    %v4115 = vpow.pop %v4114
    %v4116 = vmul.f32 %v4104, 1.442695
    %v4117 = vpow.pop %v4116
    %v4118 = vmul.f32 %v4105, 1.442695
    %v4119 = vpow.pop %v4118
    %v4120 = vmul.f32 %v4106, 1.442695
    %v4121 = vpow.pop %v4120
    %v4122 = vmul.f32 %v4107, 1.442695
    %v4123 = vpow.pop %v4122
    %v4124 = vadd.f32 %v4109, 1.0
    %v4125 = vadd.f32 %v4111, 1.0
    %v4126 = vadd.f32 %v4113, 1.0
    %v4127 = vadd.f32 %v4115, 1.0
    %v4128 = vadd.f32 %v4117, 1.0
    %v4129 = vadd.f32 %v4119, 1.0
    %v4130 = vadd.f32 %v4121, 1.0
    %v4131 = vadd.f32 %v4123, 1.0
    %v4132 = vrcp.pop %v4124
    %v4133 = vmul.f32 1.0, %v4132
    %v4134 = vrcp.pop %v4125
    %v4135 = vmul.f32 1.0, %v4134
    %v4136 = vrcp.pop %v4126
    %v4137 = vmul.f32 1.0, %v4136
    %v4138 = vrcp.pop %v4127
    %v4139 = vmul.f32 1.0, %v4138
    %v4140 = vrcp.pop %v4128
    %v4141 = vmul.f32 1.0, %v4140
    %v4142 = vrcp.pop %v4129
    %v4143 = vmul.f32 1.0, %v4142
    %v4144 = vrcp.pop %v4130
    %v4145 = vmul.f32 1.0, %v4144
    %v4146 = vrcp.pop %v4131
    %v4147 = vmul.f32 1.0, %v4146
    %4148 = vst [vmem:[#allocation23] sm:$0xff] %v4133
    %4149 = vst [vmem:[#allocation23 + $0x8] sm:$0xff] %v4135
    %4150 = vst [vmem:[#allocation23 + $0x10] sm:$0xff] %v4137
    %4151 = vst [vmem:[#allocation23 + $0x18] sm:$0xff] %v4139
    %4152 = vst [vmem:[#allocation23 + $0x20] sm:$0xff] %v4141
    %4153 = vst [vmem:[#allocation23 + $0x28] sm:$0xff] %v4143
    %4154 = vst [vmem:[#allocation23 + $0x30] sm:$0xff] %v4145
    %4155 = vst [vmem:[#allocation23 + $0x38] sm:$0xff] %v4147
    // Predicated region
    $region146: #{forward.1} parent=1 // pred_check
      _
    $region147: #{forward.1} parent=1 // pred_check_branch
      %4157 = sbr.rel (0) target = $region149
    $region148: #{forward.1} parent=1 // pred_region
      %s4159 = ssub.s32 1024, 1024
      %4160 = vsyncadd [#allocation4], %s4159
      %s4161 = sshll.u32 [#allocation23], 4
      %s4162 = int_to_ptr.vmem [resolvable:$true] %s4161
      %4167 = dma.vmem_to_hbm [thread:$0]  %s4162, 1024, %s23, [#allocation4], 128, 128, 8
    $region149: #{forward.1} parent=1 // pred_fallthru
      _
    // Predicated region
    $region150: #{forward.1} parent=1 // pred_check
      _
    $region151: #{forward.1} parent=1 // pred_check_branch
      %4169 = sbr.rel (0) target = $region153
    $region152: #{forward.1} parent=1 // pred_region
      %4170 = dma.done [#allocation4], 1024
    $region153: #{forward.1} parent=1 // pred_fallthru
      _
    %4171 = vsyncpa [#allocation3], 1
    %4172 = vsyncpa [#allocation6], 1
    %4173 = vsyncpa [#allocation9], 1
    %4174 = vsyncpa [#allocation12], 1
    %4175 = vsyncpa [#allocation15], 1
    %4176 = vsyncpa [#allocation18], 1
    %4177 = vsyncpa [#allocation21], 1
    %4178 = vsyncpa [#allocation4], 1

</llo_original>
